<compile_context>
chip_gen: v5e
topology: v5e:2x2
jax: 0.10.0
libtpu: 0.0.40
codegen_flags: <defaults>
</compile_context>

<pallas_src>
import functools

import jax
import jax.numpy as jnp
import numpy as np
from jax import lax
from jax.experimental import pallas as pl
from jax.experimental.pallas import tpu as pltpu


def _round_up(x, m):
    return (x + m - 1) // m * m


def _shift(v, axis, d):
    """out[..., i, ...] = v[..., i + d, ...] along `axis`; out-of-range -> -inf."""
    if d == 0:
        return v
    n = v.shape[axis]
    fill_shape = list(v.shape)
    fill_shape[axis] = abs(d)
    fill = jnp.full(fill_shape, -jnp.inf, v.dtype)
    if d > 0:
        body = lax.slice_in_dim(v, d, n, axis=axis)
        return jnp.concatenate([body, fill], axis=axis)
    body = lax.slice_in_dim(v, 0, n + d, axis=axis)
    return jnp.concatenate([fill, body], axis=axis)


def _maxpool5_same(v):
    """nn.MaxPool2d(kernel_size=5, stride=1, padding=2) on (H, W, C), separable."""
    # pass along W (axis=1), radius 2
    m = v
    for d in (1, 2):
        m = jnp.maximum(m, jnp.maximum(_shift(v, 1, d), _shift(v, 1, -d)))
    # pass along H (axis=0), radius 2 (-inf fill == -inf border padding)
    out = m
    for d in (1, 2):
        out = jnp.maximum(out, jnp.maximum(_shift(m, 0, d), _shift(m, 0, -d)))
    return out


def _spp_kernel(x_ref, w1_ref, w2_ref, s1_ref, b1_ref, s2_ref, b2_ref, o_ref,
                *, H, W, slope):
    HW = H * W
    x = x_ref[0]                                              # (HW, C1p)

    # ---- cv1: 1x1 conv == one lane-dense matmul (K = C1p >= 128), BN + LeakyReLU
    h = jnp.dot(x, w1_ref[...], preferred_element_type=jnp.float32)
    h = h * s1_ref[...] + b1_ref[...]
    h = jnp.where(h > 0.0, h, slope * h)                      # (HW, Cmp) f32

    cmp_ = h.shape[-1]
    h3 = h.reshape(H, W, cmp_)

    # ---- max-pool pyramid: cascaded 5x5 pools == pools with k = 5, 9, 13
    p1 = _maxpool5_same(h3)          # MaxPool2d(5, 1, 2)
    p2 = _maxpool5_same(p1)          # == MaxPool2d(9, 1, 4)
    p3 = _maxpool5_same(p2)          # == MaxPool2d(13, 1, 6)

    # ---- cv2: concat along (padded, 128-aligned) channels, single matmul
    cat = jnp.concatenate([h3, p1, p2, p3], axis=-1).reshape(HW, 4 * cmp_)
    y = jnp.dot(cat.astype(w2_ref.dtype), w2_ref[...],
                preferred_element_type=jnp.float32)
    y = y * s2_ref[...] + b2_ref[...]
    y = jnp.where(y > 0.0, y, slope * y)

    o_ref[0] = y.astype(o_ref.dtype)


def spp_forward(x_nchw, w1, w2, bn1, bn2, *, slope=0.1, eps=1e-5,
                compute_dtype=jnp.bfloat16):
    """SPP forward.  x_nchw: (N, C1, H, W).
    w1: (C_, C1) OI weight of cv1 (1x1).  w2: (C2, 4*C_) OI weight of cv2 (1x1).
    bn1/bn2: (gamma, beta, running_mean, running_var)."""
    N, C1, H, W = x_nchw.shape
    c_ = w1.shape[0]
    C2 = w2.shape[0]
    assert w1.shape == (c_, C1) and w2.shape == (C2, 4 * c_)
    HW = H * W
    assert HW % 8 == 0

    LANE = 128
    C1p = _round_up(C1, LANE)
    Cmp = _round_up(c_, LANE)
    C2p = _round_up(C2, LANE)

    # NCHW -> (N, H*W, C1p): channels on the lane axis, zero-padded to 128.
    x = jnp.transpose(x_nchw, (0, 2, 3, 1)).reshape(N, HW, C1)
    x = jnp.pad(x, ((0, 0), (0, 0), (0, C1p - C1))).astype(compute_dtype)

    # Fold BN into scale/shift; zero-pad so padded channels stay exactly 0.
    def fold(bn, c, cpad):
        g, b, m, v = bn
        s = (g / jnp.sqrt(v + eps)).astype(jnp.float32)
        sh = (b - m * s).astype(jnp.float32)
        return (jnp.pad(s, (0, cpad - c)).reshape(1, cpad),
                jnp.pad(sh, (0, cpad - c)).reshape(1, cpad))

    s1, b1 = fold(bn1, c_, Cmp)
    s2, b2 = fold(bn2, C2, C2p)

    # cv1 weight: (C_, C1) OI -> zero-padded (C1p, Cmp) IO.
    w1p = jnp.zeros((C1p, Cmp), jnp.float32)
    w1p = w1p.at[:C1, :c_].set(jnp.transpose(w1).astype(jnp.float32))
    w1p = w1p.astype(compute_dtype)

    # cv2 weight: (C2, 4*C_) OI -> zero-padded (4*Cmp, C2p) IO, one Cmp-wide slab
    # per concatenated branch [h, pool5, pool9, pool13].
    w2p = jnp.zeros((4 * Cmp, C2p), jnp.float32)
    for g in range(4):
        w2p = w2p.at[g * Cmp:g * Cmp + c_, :C2].set(
            jnp.transpose(w2[:, g * c_:(g + 1) * c_]).astype(jnp.float32))
    w2p = w2p.astype(compute_dtype)

    kernel = functools.partial(_spp_kernel, H=H, W=W, slope=float(slope))

    out = pl.pallas_call(
        kernel,
        out_shape=jax.ShapeDtypeStruct((N, HW, C2p), jnp.float32),
        grid_spec=pltpu.PrefetchScalarGridSpec(
            num_scalar_prefetch=0,
            grid=(N,),
            in_specs=[
                pl.BlockSpec((1, HW, C1p), lambda n: (n, 0, 0)),
                pl.BlockSpec((C1p, Cmp), lambda n: (0, 0)),
                pl.BlockSpec((4 * Cmp, C2p), lambda n: (0, 0)),
                pl.BlockSpec((1, Cmp), lambda n: (0, 0)),
                pl.BlockSpec((1, Cmp), lambda n: (0, 0)),
                pl.BlockSpec((1, C2p), lambda n: (0, 0)),
                pl.BlockSpec((1, C2p), lambda n: (0, 0)),
            ],
            out_specs=pl.BlockSpec((1, HW, C2p), lambda n: (n, 0, 0)),
        ),
        compiler_params=pltpu.CompilerParams(
            dimension_semantics=("parallel",)),   # batch axis shards across TCs
    )(x, w1p, w2p, s1, b1, s2, b2)

    out = out.reshape(N, H, W, C2p)[..., :C2]
    return jnp.transpose(out, (0, 3, 1, 2))       # back to NCHW


def _reference(x_nchw, w1, w2, bn1, bn2, *, slope=0.1, eps=1e-5,
               pool_sizes=(5, 9, 13)):
    """Pure-JAX f32 reference of SPP for verification."""
    x = jnp.transpose(x_nchw, (0, 2, 3, 1))       # NHWC

    def conv1x1_bn_act(v, w, bn):
        y = jnp.einsum("nhwc,oc->nhwo", v, w,
                       precision=lax.Precision.HIGHEST)
        g, b, m, var = bn
        s = g / jnp.sqrt(var + eps)
        y = y * s + (b - m * s)
        return jnp.where(y > 0, y, slope * y)

    h = conv1x1_bn_act(x, w1, bn1)
    pools = [lax.reduce_window(h, -jnp.inf, lax.max, (1, k, k, 1),
                               (1, 1, 1, 1), "SAME") for k in pool_sizes]
    cat = jnp.concatenate([h] + pools, axis=-1)
    y = conv1x1_bn_act(cat, w2, bn2)
    return jnp.transpose(y, (0, 3, 1, 2))


if __name__ == "__main__":
    key = jax.random.PRNGKey(0)
    N, C1, H, W = 2, 4, 16, 16
    C2 = 8
    c_ = C1 // 2                                   # SPP hidden channels

    ks = jax.random.split(key, 12)
    x = jax.random.normal(ks[0], (N, C1, H, W), jnp.float32)
    w1 = 0.5 * jax.random.normal(ks[1], (c_, C1), jnp.float32)        # cv1, OI
    w2 = 0.3 * jax.random.normal(ks[2], (C2, 4 * c_), jnp.float32)    # cv2, OI

    bn1 = (1.0 + 0.1 * jax.random.normal(ks[3], (c_,), jnp.float32),
           0.1 * jax.random.normal(ks[4], (c_,), jnp.float32),
           0.05 * jax.random.normal(ks[5], (c_,), jnp.float32),
           1.0 + 0.2 * jax.random.uniform(ks[6], (c_,), jnp.float32))
    bn2 = (1.0 + 0.1 * jax.random.normal(ks[7], (C2,), jnp.float32),
           0.1 * jax.random.normal(ks[8], (C2,), jnp.float32),
           0.05 * jax.random.normal(ks[9], (C2,), jnp.float32),
           1.0 + 0.2 * jax.random.uniform(ks[10], (C2,), jnp.float32))

    ref = jax.block_until_ready(_reference(x, w1, w2, bn1, bn2))

    # f32 operands: tight semantic check.
    out_f32 = jax.block_until_ready(
        spp_forward(x, w1, w2, bn1, bn2, compute_dtype=jnp.float32))
    assert out_f32.shape == (N, C2, H, W)
    np.testing.assert_allclose(np.asarray(out_f32), np.asarray(ref),
                               rtol=1e-3, atol=1e-3)

    # bf16 MXU operands (f32 accumulation / elementwise): bandwidth-optimized path.
    out_bf16 = jax.block_until_ready(
        spp_forward(x, w1, w2, bn1, bn2, compute_dtype=jnp.bfloat16))
    np.testing.assert_allclose(np.asarray(out_bf16), np.asarray(ref),
                               rtol=5e-2, atol=5e-2)

    print("KERNEL_OK")
</pallas_src>

<mosaic_0001>
module attributes {stable_mosaic.version = 11 : i64} {
  func.func @_spp_kernel(%arg0: i32, %arg1: memref<1x256x128xf32, #tpu.memory_space<vmem>>, %arg2: memref<128x128xf32, #tpu.memory_space<vmem>>, %arg3: memref<512x128xf32, #tpu.memory_space<vmem>>, %arg4: memref<1x128xf32, #tpu.memory_space<vmem>>, %arg5: memref<1x128xf32, #tpu.memory_space<vmem>>, %arg6: memref<1x128xf32, #tpu.memory_space<vmem>>, %arg7: memref<1x128xf32, #tpu.memory_space<vmem>>, %arg8: memref<1x256x128xf32, #tpu.memory_space<vmem>>) attributes {dimension_semantics = [#tpu.dimension_semantics<parallel>], iteration_bounds = array<i64: 2>, scalar_prefetch = 0 : i64, scratch_operands = 0 : i64, tpu.core_type = #tpu.core_type<tc>, window_params = [{transform_indices = @transform_0, window_bounds = array<i64: 1, 256, 128>}, {pipeline_mode = #tpu.pipeline_mode<synchronous>, transform_indices = @transform_1, window_bounds = array<i64: 128, 128>}, {pipeline_mode = #tpu.pipeline_mode<synchronous>, transform_indices = @transform_2, window_bounds = array<i64: 512, 128>}, {pipeline_mode = #tpu.pipeline_mode<synchronous>, transform_indices = @transform_3, window_bounds = array<i64: 1, 128>}, {pipeline_mode = #tpu.pipeline_mode<synchronous>, transform_indices = @transform_4, window_bounds = array<i64: 1, 128>}, {pipeline_mode = #tpu.pipeline_mode<synchronous>, transform_indices = @transform_5, window_bounds = array<i64: 1, 128>}, {pipeline_mode = #tpu.pipeline_mode<synchronous>, transform_indices = @transform_6, window_bounds = array<i64: 1, 128>}, {transform_indices = @transform_7, window_bounds = array<i64: 1, 256, 128>}]} {
    %c0 = arith.constant 0 : index
    %c0_0 = arith.constant 0 : index
    %c0_1 = arith.constant 0 : index
    %0 = vector.load %arg1[%c0, %c0_0, %c0_1] : memref<1x256x128xf32, #tpu.memory_space<vmem>>, vector<1x256x128xf32>
    %1 = vector.shape_cast %0 : vector<1x256x128xf32> to vector<256x128xf32>
    %c0_2 = arith.constant 0 : index
    %c0_3 = arith.constant 0 : index
    %2 = vector.load %arg2[%c0_2, %c0_3] : memref<128x128xf32, #tpu.memory_space<vmem>>, vector<128x128xf32>
    %cst = arith.constant dense<0.000000e+00> : vector<256x128xf32>
    %3 = tpu.matmul %1, %2, %cst {dimension_numbers = #tpu.dot_dimension_numbers<[1], [0], [0], [1], [0, 0, 1, 1], [], []>} : vector<256x128xf32>, vector<128x128xf32>, vector<256x128xf32> -> vector<256x128xf32>
    %c0_4 = arith.constant 0 : index
    %c0_5 = arith.constant 0 : index
    %4 = vector.load %arg4[%c0_4, %c0_5] : memref<1x128xf32, #tpu.memory_space<vmem>>, vector<1x128xf32>
    %5 = vector.broadcast %4 : vector<1x128xf32> to vector<256x128xf32>
    %6 = arith.mulf %3, %5 : vector<256x128xf32>
    %c0_6 = arith.constant 0 : index
    %c0_7 = arith.constant 0 : index
    %7 = vector.load %arg5[%c0_6, %c0_7] : memref<1x128xf32, #tpu.memory_space<vmem>>, vector<1x128xf32>
    %8 = vector.broadcast %7 : vector<1x128xf32> to vector<256x128xf32>
    %9 = arith.addf %6, %8 : vector<256x128xf32>
    %cst_8 = arith.constant 0.000000e+00 : f32
    %10 = vector.broadcast %cst_8 : f32 to vector<256x128xf32>
    %11 = arith.cmpf ogt, %9, %10 : vector<256x128xf32>
    %cst_9 = arith.constant 1.000000e-01 : f32
    %12 = vector.broadcast %cst_9 : f32 to vector<256x128xf32>
    %13 = arith.mulf %12, %9 : vector<256x128xf32>
    %14 = arith.select %11, %9, %13 : vector<256x128xi1>, vector<256x128xf32>
    %15 = vector.shape_cast %14 : vector<256x128xf32> to vector<16x16x128xf32>
    %cst_10 = arith.constant 0xFF800000 : f32
    %16 = vector.broadcast %cst_10 : f32 to vector<16x1x128xf32>
    %17 = vector.extract_strided_slice %15 {offsets = [0, 1, 0], sizes = [16, 15, 128], strides = [1, 1, 1]} : vector<16x16x128xf32> to vector<16x15x128xf32>
    %18 = tpu.concatenate %17, %16 in 1 : vector<16x15x128xf32>, vector<16x1x128xf32> -> vector<16x16x128xf32>
    %cst_11 = arith.constant 0xFF800000 : f32
    %19 = vector.broadcast %cst_11 : f32 to vector<16x1x128xf32>
    %20 = vector.extract_strided_slice %15 {offsets = [0, 0, 0], sizes = [16, 15, 128], strides = [1, 1, 1]} : vector<16x16x128xf32> to vector<16x15x128xf32>
    %21 = tpu.concatenate %19, %20 in 1 : vector<16x1x128xf32>, vector<16x15x128xf32> -> vector<16x16x128xf32>
    %22 = arith.maximumf %18, %21 : vector<16x16x128xf32>
    %23 = arith.maximumf %15, %22 : vector<16x16x128xf32>
    %cst_12 = arith.constant 0xFF800000 : f32
    %24 = vector.broadcast %cst_12 : f32 to vector<16x2x128xf32>
    %25 = vector.extract_strided_slice %15 {offsets = [0, 2, 0], sizes = [16, 14, 128], strides = [1, 1, 1]} : vector<16x16x128xf32> to vector<16x14x128xf32>
    %26 = tpu.concatenate %25, %24 in 1 : vector<16x14x128xf32>, vector<16x2x128xf32> -> vector<16x16x128xf32>
    %cst_13 = arith.constant 0xFF800000 : f32
    %27 = vector.broadcast %cst_13 : f32 to vector<16x2x128xf32>
    %28 = vector.extract_strided_slice %15 {offsets = [0, 0, 0], sizes = [16, 14, 128], strides = [1, 1, 1]} : vector<16x16x128xf32> to vector<16x14x128xf32>
    %29 = tpu.concatenate %27, %28 in 1 : vector<16x2x128xf32>, vector<16x14x128xf32> -> vector<16x16x128xf32>
    %30 = arith.maximumf %26, %29 : vector<16x16x128xf32>
    %31 = arith.maximumf %23, %30 : vector<16x16x128xf32>
    %cst_14 = arith.constant 0xFF800000 : f32
    %32 = vector.broadcast %cst_14 : f32 to vector<1x16x128xf32>
    %33 = vector.extract_strided_slice %31 {offsets = [1, 0, 0], sizes = [15, 16, 128], strides = [1, 1, 1]} : vector<16x16x128xf32> to vector<15x16x128xf32>
    %34 = tpu.concatenate %33, %32 in 0 : vector<15x16x128xf32>, vector<1x16x128xf32> -> vector<16x16x128xf32>
    %cst_15 = arith.constant 0xFF800000 : f32
    %35 = vector.broadcast %cst_15 : f32 to vector<1x16x128xf32>
    %36 = vector.extract_strided_slice %31 {offsets = [0, 0, 0], sizes = [15, 16, 128], strides = [1, 1, 1]} : vector<16x16x128xf32> to vector<15x16x128xf32>
    %37 = tpu.concatenate %35, %36 in 0 : vector<1x16x128xf32>, vector<15x16x128xf32> -> vector<16x16x128xf32>
    %38 = arith.maximumf %34, %37 : vector<16x16x128xf32>
    %39 = arith.maximumf %31, %38 : vector<16x16x128xf32>
    %cst_16 = arith.constant 0xFF800000 : f32
    %40 = vector.broadcast %cst_16 : f32 to vector<2x16x128xf32>
    %41 = vector.extract_strided_slice %31 {offsets = [2, 0, 0], sizes = [14, 16, 128], strides = [1, 1, 1]} : vector<16x16x128xf32> to vector<14x16x128xf32>
    %42 = tpu.concatenate %41, %40 in 0 : vector<14x16x128xf32>, vector<2x16x128xf32> -> vector<16x16x128xf32>
    %cst_17 = arith.constant 0xFF800000 : f32
    %43 = vector.broadcast %cst_17 : f32 to vector<2x16x128xf32>
    %44 = vector.extract_strided_slice %31 {offsets = [0, 0, 0], sizes = [14, 16, 128], strides = [1, 1, 1]} : vector<16x16x128xf32> to vector<14x16x128xf32>
    %45 = tpu.concatenate %43, %44 in 0 : vector<2x16x128xf32>, vector<14x16x128xf32> -> vector<16x16x128xf32>
    %46 = arith.maximumf %42, %45 : vector<16x16x128xf32>
    %47 = arith.maximumf %39, %46 : vector<16x16x128xf32>
    %cst_18 = arith.constant 0xFF800000 : f32
    %48 = vector.broadcast %cst_18 : f32 to vector<16x1x128xf32>
    %49 = vector.extract_strided_slice %47 {offsets = [0, 1, 0], sizes = [16, 15, 128], strides = [1, 1, 1]} : vector<16x16x128xf32> to vector<16x15x128xf32>
    %50 = tpu.concatenate %49, %48 in 1 : vector<16x15x128xf32>, vector<16x1x128xf32> -> vector<16x16x128xf32>
    %cst_19 = arith.constant 0xFF800000 : f32
    %51 = vector.broadcast %cst_19 : f32 to vector<16x1x128xf32>
    %52 = vector.extract_strided_slice %47 {offsets = [0, 0, 0], sizes = [16, 15, 128], strides = [1, 1, 1]} : vector<16x16x128xf32> to vector<16x15x128xf32>
    %53 = tpu.concatenate %51, %52 in 1 : vector<16x1x128xf32>, vector<16x15x128xf32> -> vector<16x16x128xf32>
    %54 = arith.maximumf %50, %53 : vector<16x16x128xf32>
    %55 = arith.maximumf %47, %54 : vector<16x16x128xf32>
    %cst_20 = arith.constant 0xFF800000 : f32
    %56 = vector.broadcast %cst_20 : f32 to vector<16x2x128xf32>
    %57 = vector.extract_strided_slice %47 {offsets = [0, 2, 0], sizes = [16, 14, 128], strides = [1, 1, 1]} : vector<16x16x128xf32> to vector<16x14x128xf32>
    %58 = tpu.concatenate %57, %56 in 1 : vector<16x14x128xf32>, vector<16x2x128xf32> -> vector<16x16x128xf32>
    %cst_21 = arith.constant 0xFF800000 : f32
    %59 = vector.broadcast %cst_21 : f32 to vector<16x2x128xf32>
    %60 = vector.extract_strided_slice %47 {offsets = [0, 0, 0], sizes = [16, 14, 128], strides = [1, 1, 1]} : vector<16x16x128xf32> to vector<16x14x128xf32>
    %61 = tpu.concatenate %59, %60 in 1 : vector<16x2x128xf32>, vector<16x14x128xf32> -> vector<16x16x128xf32>
    %62 = arith.maximumf %58, %61 : vector<16x16x128xf32>
    %63 = arith.maximumf %55, %62 : vector<16x16x128xf32>
    %cst_22 = arith.constant 0xFF800000 : f32
    %64 = vector.broadcast %cst_22 : f32 to vector<1x16x128xf32>
    %65 = vector.extract_strided_slice %63 {offsets = [1, 0, 0], sizes = [15, 16, 128], strides = [1, 1, 1]} : vector<16x16x128xf32> to vector<15x16x128xf32>
    %66 = tpu.concatenate %65, %64 in 0 : vector<15x16x128xf32>, vector<1x16x128xf32> -> vector<16x16x128xf32>
    %cst_23 = arith.constant 0xFF800000 : f32
    %67 = vector.broadcast %cst_23 : f32 to vector<1x16x128xf32>
    %68 = vector.extract_strided_slice %63 {offsets = [0, 0, 0], sizes = [15, 16, 128], strides = [1, 1, 1]} : vector<16x16x128xf32> to vector<15x16x128xf32>
    %69 = tpu.concatenate %67, %68 in 0 : vector<1x16x128xf32>, vector<15x16x128xf32> -> vector<16x16x128xf32>
    %70 = arith.maximumf %66, %69 : vector<16x16x128xf32>
    %71 = arith.maximumf %63, %70 : vector<16x16x128xf32>
    %cst_24 = arith.constant 0xFF800000 : f32
    %72 = vector.broadcast %cst_24 : f32 to vector<2x16x128xf32>
    %73 = vector.extract_strided_slice %63 {offsets = [2, 0, 0], sizes = [14, 16, 128], strides = [1, 1, 1]} : vector<16x16x128xf32> to vector<14x16x128xf32>
    %74 = tpu.concatenate %73, %72 in 0 : vector<14x16x128xf32>, vector<2x16x128xf32> -> vector<16x16x128xf32>
    %cst_25 = arith.constant 0xFF800000 : f32
    %75 = vector.broadcast %cst_25 : f32 to vector<2x16x128xf32>
    %76 = vector.extract_strided_slice %63 {offsets = [0, 0, 0], sizes = [14, 16, 128], strides = [1, 1, 1]} : vector<16x16x128xf32> to vector<14x16x128xf32>
    %77 = tpu.concatenate %75, %76 in 0 : vector<2x16x128xf32>, vector<14x16x128xf32> -> vector<16x16x128xf32>
    %78 = arith.maximumf %74, %77 : vector<16x16x128xf32>
    %79 = arith.maximumf %71, %78 : vector<16x16x128xf32>
    %cst_26 = arith.constant 0xFF800000 : f32
    %80 = vector.broadcast %cst_26 : f32 to vector<16x1x128xf32>
    %81 = vector.extract_strided_slice %79 {offsets = [0, 1, 0], sizes = [16, 15, 128], strides = [1, 1, 1]} : vector<16x16x128xf32> to vector<16x15x128xf32>
    %82 = tpu.concatenate %81, %80 in 1 : vector<16x15x128xf32>, vector<16x1x128xf32> -> vector<16x16x128xf32>
    %cst_27 = arith.constant 0xFF800000 : f32
    %83 = vector.broadcast %cst_27 : f32 to vector<16x1x128xf32>
    %84 = vector.extract_strided_slice %79 {offsets = [0, 0, 0], sizes = [16, 15, 128], strides = [1, 1, 1]} : vector<16x16x128xf32> to vector<16x15x128xf32>
    %85 = tpu.concatenate %83, %84 in 1 : vector<16x1x128xf32>, vector<16x15x128xf32> -> vector<16x16x128xf32>
    %86 = arith.maximumf %82, %85 : vector<16x16x128xf32>
    %87 = arith.maximumf %79, %86 : vector<16x16x128xf32>
    %cst_28 = arith.constant 0xFF800000 : f32
    %88 = vector.broadcast %cst_28 : f32 to vector<16x2x128xf32>
    %89 = vector.extract_strided_slice %79 {offsets = [0, 2, 0], sizes = [16, 14, 128], strides = [1, 1, 1]} : vector<16x16x128xf32> to vector<16x14x128xf32>
    %90 = tpu.concatenate %89, %88 in 1 : vector<16x14x128xf32>, vector<16x2x128xf32> -> vector<16x16x128xf32>
    %cst_29 = arith.constant 0xFF800000 : f32
    %91 = vector.broadcast %cst_29 : f32 to vector<16x2x128xf32>
    %92 = vector.extract_strided_slice %79 {offsets = [0, 0, 0], sizes = [16, 14, 128], strides = [1, 1, 1]} : vector<16x16x128xf32> to vector<16x14x128xf32>
    %93 = tpu.concatenate %91, %92 in 1 : vector<16x2x128xf32>, vector<16x14x128xf32> -> vector<16x16x128xf32>
    %94 = arith.maximumf %90, %93 : vector<16x16x128xf32>
    %95 = arith.maximumf %87, %94 : vector<16x16x128xf32>
    %cst_30 = arith.constant 0xFF800000 : f32
    %96 = vector.broadcast %cst_30 : f32 to vector<1x16x128xf32>
    %97 = vector.extract_strided_slice %95 {offsets = [1, 0, 0], sizes = [15, 16, 128], strides = [1, 1, 1]} : vector<16x16x128xf32> to vector<15x16x128xf32>
    %98 = tpu.concatenate %97, %96 in 0 : vector<15x16x128xf32>, vector<1x16x128xf32> -> vector<16x16x128xf32>
    %cst_31 = arith.constant 0xFF800000 : f32
    %99 = vector.broadcast %cst_31 : f32 to vector<1x16x128xf32>
    %100 = vector.extract_strided_slice %95 {offsets = [0, 0, 0], sizes = [15, 16, 128], strides = [1, 1, 1]} : vector<16x16x128xf32> to vector<15x16x128xf32>
    %101 = tpu.concatenate %99, %100 in 0 : vector<1x16x128xf32>, vector<15x16x128xf32> -> vector<16x16x128xf32>
    %102 = arith.maximumf %98, %101 : vector<16x16x128xf32>
    %103 = arith.maximumf %95, %102 : vector<16x16x128xf32>
    %cst_32 = arith.constant 0xFF800000 : f32
    %104 = vector.broadcast %cst_32 : f32 to vector<2x16x128xf32>
    %105 = vector.extract_strided_slice %95 {offsets = [2, 0, 0], sizes = [14, 16, 128], strides = [1, 1, 1]} : vector<16x16x128xf32> to vector<14x16x128xf32>
    %106 = tpu.concatenate %105, %104 in 0 : vector<14x16x128xf32>, vector<2x16x128xf32> -> vector<16x16x128xf32>
    %cst_33 = arith.constant 0xFF800000 : f32
    %107 = vector.broadcast %cst_33 : f32 to vector<2x16x128xf32>
    %108 = vector.extract_strided_slice %95 {offsets = [0, 0, 0], sizes = [14, 16, 128], strides = [1, 1, 1]} : vector<16x16x128xf32> to vector<14x16x128xf32>
    %109 = tpu.concatenate %107, %108 in 0 : vector<2x16x128xf32>, vector<14x16x128xf32> -> vector<16x16x128xf32>
    %110 = arith.maximumf %106, %109 : vector<16x16x128xf32>
    %111 = arith.maximumf %103, %110 : vector<16x16x128xf32>
    %112 = tpu.concatenate %15, %47, %79, %111 in 2 : vector<16x16x128xf32>, vector<16x16x128xf32>, vector<16x16x128xf32>, vector<16x16x128xf32> -> vector<16x16x512xf32>
    %113 = vector.shape_cast %112 : vector<16x16x512xf32> to vector<256x512xf32>
    %c0_34 = arith.constant 0 : index
    %c0_35 = arith.constant 0 : index
    %114 = vector.load %arg3[%c0_34, %c0_35] : memref<512x128xf32, #tpu.memory_space<vmem>>, vector<512x128xf32>
    %cst_36 = arith.constant dense<0.000000e+00> : vector<256x128xf32>
    %115 = tpu.matmul %113, %114, %cst_36 {dimension_numbers = #tpu.dot_dimension_numbers<[1], [0], [0], [1], [0, 0, 1, 1], [], []>} : vector<256x512xf32>, vector<512x128xf32>, vector<256x128xf32> -> vector<256x128xf32>
    %c0_37 = arith.constant 0 : index
    %c0_38 = arith.constant 0 : index
    %116 = vector.load %arg6[%c0_37, %c0_38] : memref<1x128xf32, #tpu.memory_space<vmem>>, vector<1x128xf32>
    %117 = vector.broadcast %116 : vector<1x128xf32> to vector<256x128xf32>
    %118 = arith.mulf %115, %117 : vector<256x128xf32>
    %c0_39 = arith.constant 0 : index
    %c0_40 = arith.constant 0 : index
    %119 = vector.load %arg7[%c0_39, %c0_40] : memref<1x128xf32, #tpu.memory_space<vmem>>, vector<1x128xf32>
    %120 = vector.broadcast %119 : vector<1x128xf32> to vector<256x128xf32>
    %121 = arith.addf %118, %120 : vector<256x128xf32>
    %cst_41 = arith.constant 0.000000e+00 : f32
    %122 = vector.broadcast %cst_41 : f32 to vector<256x128xf32>
    %123 = arith.cmpf ogt, %121, %122 : vector<256x128xf32>
    %cst_42 = arith.constant 1.000000e-01 : f32
    %124 = vector.broadcast %cst_42 : f32 to vector<256x128xf32>
    %125 = arith.mulf %124, %121 : vector<256x128xf32>
    %126 = arith.select %123, %121, %125 : vector<256x128xi1>, vector<256x128xf32>
    %c0_43 = arith.constant 0 : index
    %c0_44 = arith.constant 0 : index
    %c0_45 = arith.constant 0 : index
    %127 = vector.load %arg8[%c0_43, %c0_44, %c0_45] : memref<1x256x128xf32, #tpu.memory_space<vmem>>, vector<1x256x128xf32>
    %128 = vector.shape_cast %127 : vector<1x256x128xf32> to vector<256x128xf32>
    %129 = vector.shape_cast %126 : vector<256x128xf32> to vector<1x256x128xf32>
    tpu.vector_store %arg8[%c0_43, %c0_44, %c0_45], %129 {strides = array<i32>} : memref<1x256x128xf32, #tpu.memory_space<vmem>>, vector<1x256x128xf32>,
    return
  }
  func.func @transform_0(%arg0: i32) -> (i32, i32, i32) {
    %c0_i32 = arith.constant 0 : i32
    %c0_i32_0 = arith.constant 0 : i32
    %c0_i32_1 = arith.constant 0 : i32
    return %arg0, %c0_i32, %c0_i32_0 : i32, i32, i32
  }
  func.func @transform_1(%arg0: i32) -> (i32, i32) {
    %c0_i32 = arith.constant 0 : i32
    %c0_i32_0 = arith.constant 0 : i32
    %c0_i32_1 = arith.constant 0 : i32
    return %c0_i32, %c0_i32_0 : i32, i32
  }
  func.func @transform_2(%arg0: i32) -> (i32, i32) {
    %c0_i32 = arith.constant 0 : i32
    %c0_i32_0 = arith.constant 0 : i32
    %c0_i32_1 = arith.constant 0 : i32
    return %c0_i32, %c0_i32_0 : i32, i32
  }
  func.func @transform_3(%arg0: i32) -> (i32, i32) {
    %c0_i32 = arith.constant 0 : i32
    %c0_i32_0 = arith.constant 0 : i32
    %c0_i32_1 = arith.constant 0 : i32
    return %c0_i32, %c0_i32_0 : i32, i32
  }
  func.func @transform_4(%arg0: i32) -> (i32, i32) {
    %c0_i32 = arith.constant 0 : i32
    %c0_i32_0 = arith.constant 0 : i32
    %c0_i32_1 = arith.constant 0 : i32
    return %c0_i32, %c0_i32_0 : i32, i32
  }
  func.func @transform_5(%arg0: i32) -> (i32, i32) {
    %c0_i32 = arith.constant 0 : i32
    %c0_i32_0 = arith.constant 0 : i32
    %c0_i32_1 = arith.constant 0 : i32
    return %c0_i32, %c0_i32_0 : i32, i32
  }
  func.func @transform_6(%arg0: i32) -> (i32, i32) {
    %c0_i32 = arith.constant 0 : i32
    %c0_i32_0 = arith.constant 0 : i32
    %c0_i32_1 = arith.constant 0 : i32
    return %c0_i32, %c0_i32_0 : i32, i32
  }
  func.func @transform_7(%arg0: i32) -> (i32, i32, i32) {
    %c0_i32 = arith.constant 0 : i32
    %c0_i32_0 = arith.constant 0 : i32
    %c0_i32_1 = arith.constant 0 : i32
    return %arg0, %c0_i32, %c0_i32_0 : i32, i32, i32
  }
}

</mosaic_0001>

<llo_original>
// kernel: tpu_custom_call.1
$region0: #{tpu_custom_call.1}
  #allocation0 [shape = 'u32[]', space=smem, size = 0x4, offset = 0x4, fixed_abs, tag = 'smem constant byte address 0x4 - core index']
  #allocation1 [shape = 'u32[72,128]{1,0:T(1,128)}', space=vmem, size = 0x9000, scoped, tag = 'internal scratch']
  %s0 = inlined_call_operand.hbm [shape: f32[2,256,128], index: 0, kind: input, shape index: {}]
  %s1 = inlined_call_operand.hbm [shape: f32[128,128], index: 1, kind: input, shape index: {}]
  %s2 = inlined_call_operand.hbm [shape: f32[512,128], index: 2, kind: input, shape index: {}]
  %s3 = inlined_call_operand.vmem [shape: f32[1,128], index: 3, kind: input, shape index: {}]
  %s4 = inlined_call_operand.vmem [shape: f32[1,128], index: 4, kind: input, shape index: {}]
  %s5 = inlined_call_operand.vmem [shape: f32[1,128], index: 5, kind: input, shape index: {}]
  %s6 = inlined_call_operand.vmem [shape: f32[1,128], index: 6, kind: input, shape index: {}]
  %s7 = inlined_call_operand.hbm [shape: f32[2,256,128], index: 7, kind: output, shape index: {}]
  %s8 = sld [smem:[#allocation0]]
  $region73: #{tpu_custom_call.1} parent=0
    _
  %s10 = ssub.s32 1, %s8
  %s11 = scalar_select 0, %s10, %s8
  $region1: #{tpu_custom_call.1} parent=0
    #allocation2 [shape = 'u8[262144]{0}', space=vmem, size = 0x40000, scoped, tag = 'input window, operand 0']
    #allocation3 [shape = 's32[2]{0}', space=sflag, size = 0x8, scoped, tag = 'scoped memory for tpu_custom_call.1']
    #allocation4 [shape = 's32[2]{0}', space=sflag, size = 0x8, scoped, tag = 'scoped memory for tpu_custom_call.1']
    #allocation5 [shape = 'u8[65536]{0}', space=vmem, size = 0x10000, scoped, tag = 'input window, operand 1, single buffered']
    #allocation6 [shape = 's32[1]{0}', space=sflag, size = 0x4, scoped, tag = 'scoped memory for tpu_custom_call.1']
    #allocation7 [shape = 'u8[262144]{0}', space=vmem, size = 0x40000, scoped, tag = 'input window, operand 2, single buffered']
    #allocation8 [shape = 'u8[262144]{0}', space=vmem, size = 0x40000, scoped, tag = 'output window, operand 0']
    %12 = vsyncpa [#allocation3], 0
    %s13 = scalar_lea.sflag [#allocation3], 1
    %14 = vsyncpa %s13, 0
    %15 = vsyncpa [#allocation6], 0
    %16 = vsyncpa [#allocation4], 0
    %s17 = scalar_lea.sflag [#allocation4], 1
    %18 = vsyncpa %s17, 0
    loop: start=0, step=1, limit=4
    $region2: #{tpu_custom_call.1} parent=1 // loop_pre_header
      _
    $region3: #{tpu_custom_call.1} parent=1 // loop_header
      %s20 = sphi 0, %s24
      %p21 = scmp.ge.s32.totalorder %s20, 4
      %s30 = sphi 0, %s32
      %s33 = sphi 0, %s30
      %s34 = sphi 0, %s33
      %s50 = sphi 0, %s34
      %s54 = sphi 0, %s54
      %s56 = sphi 0, %s54
      %s57 = sphi 0, %s56
      %s71 = sphi 0, %s57
      %s75 = sphi 0, %s75
      %s77 = sphi 0, %s75
      %s78 = sphi 0, %s77
      %s92 = sphi 0, %s78
      %s96 = sphi 0, %s96
      %s98 = sphi 0, %s96
      %s99 = sphi 0, %s98
      %s113 = sphi 0, %s99
      %s117 = sphi 0, %s117
      %s119 = sphi 0, %s117
      %s120 = sphi 0, %s119
      %s134 = sphi 0, %s120
      %s138 = sphi 0, %s138
      %s140 = sphi 0, %s138
      %s141 = sphi 0, %s140
      %s155 = sphi 0, %s141
      %s159 = sphi 0, %s159
      %s161 = sphi 0, %s159
      %s162 = sphi 0, %s161
      %s176 = sphi 0, %s162
      %s182 = sphi 0, %s184
      %s185 = sphi 0, %s182
      %s186 = sphi 0, %s185
      %s202 = sphi 0, %s186
    $region4: #{tpu_custom_call.1} parent=1 // loop_header_branch
      %23 = sbr.rel (%p21) target = $region8
    $region5: #{tpu_custom_call.1} parent=1 // loop_body
      %s25 = ssub.s32 %s20, 1
      %s26 = ssub.s32 %s20, 2
      %s27 = sadd.s32 %s20, 1
      %s28 = ssub.s32 %s20, %s27
      %p29 = scmp.eq.s32.totalorder %s28, 0
      %s31 = sadd.s32 %s30, 1
      %s32 = scalar_select %p29, %s30, %s31
      %p35 = pneg %p29
      %p36 = scmp.eq.s32.totalorder %s20, 1
      %p37 = por %p35, %p36
      %p38 = scmp.ne.s32.totalorder %s30, %s33
      %p39 = scmp.eq.s32.totalorder %s20, 0
      %p40 = por %p38, %p39
      %p41 = scmp.ne.s32.totalorder %s30, %s33
      %p42 = scmp.eq.s32.totalorder %s25, 1
      %p43 = por %p41, %p42
      %p44 = scmp.ne.s32.totalorder %s33, %s34
      %p45 = scmp.eq.s32.totalorder %s25, 0
      %p46 = por %p44, %p45
      %p47 = scmp.ne.s32.totalorder %s33, %s34
      %p48 = scmp.eq.s32.totalorder %s26, 1
      %p49 = por %p47, %p48
      %p51 = scmp.ne.s32.totalorder %s34, %s50
      %p52 = scmp.eq.s32.totalorder %s26, 0
      %p53 = por %p51, %p52
      %s55 = sadd.s32 %s54, 1
      %p58 = scmp.eq.s32.totalorder %s20, 1
      %p59 = scmp.ne.s32.totalorder %s54, %s56
      %p60 = scmp.eq.s32.totalorder %s20, 0
      %p61 = por %p59, %p60
      %p62 = scmp.ne.s32.totalorder %s54, %s56
      %p63 = scmp.eq.s32.totalorder %s25, 1
      %p64 = por %p62, %p63
      %p65 = scmp.ne.s32.totalorder %s56, %s57
      %p66 = scmp.eq.s32.totalorder %s25, 0
      %p67 = por %p65, %p66
      %p68 = scmp.ne.s32.totalorder %s56, %s57
      %p69 = scmp.eq.s32.totalorder %s26, 1
      %p70 = por %p68, %p69
      %p72 = scmp.ne.s32.totalorder %s57, %s71
      %p73 = scmp.eq.s32.totalorder %s26, 0
      %p74 = por %p72, %p73
      %s76 = sadd.s32 %s75, 1
      %p79 = scmp.eq.s32.totalorder %s20, 1
      %p80 = scmp.ne.s32.totalorder %s75, %s77
      %p81 = scmp.eq.s32.totalorder %s20, 0
      %p82 = por %p80, %p81
      %p83 = scmp.ne.s32.totalorder %s75, %s77
      %p84 = scmp.eq.s32.totalorder %s25, 1
      %p85 = por %p83, %p84
      %p86 = scmp.ne.s32.totalorder %s77, %s78
      %p87 = scmp.eq.s32.totalorder %s25, 0
      %p88 = por %p86, %p87
      %p89 = scmp.ne.s32.totalorder %s77, %s78
      %p90 = scmp.eq.s32.totalorder %s26, 1
      %p91 = por %p89, %p90
      %p93 = scmp.ne.s32.totalorder %s78, %s92
      %p94 = scmp.eq.s32.totalorder %s26, 0
      %p95 = por %p93, %p94
      %s97 = sadd.s32 %s96, 1
      %p100 = scmp.eq.s32.totalorder %s20, 1
      %p101 = scmp.ne.s32.totalorder %s96, %s98
      %p102 = scmp.eq.s32.totalorder %s20, 0
      %p103 = por %p101, %p102
      %p104 = scmp.ne.s32.totalorder %s96, %s98
      %p105 = scmp.eq.s32.totalorder %s25, 1
      %p106 = por %p104, %p105
      %p107 = scmp.ne.s32.totalorder %s98, %s99
      %p108 = scmp.eq.s32.totalorder %s25, 0
      %p109 = por %p107, %p108
      %p110 = scmp.ne.s32.totalorder %s98, %s99
      %p111 = scmp.eq.s32.totalorder %s26, 1
      %p112 = por %p110, %p111
      %p114 = scmp.ne.s32.totalorder %s99, %s113
      %p115 = scmp.eq.s32.totalorder %s26, 0
      %p116 = por %p114, %p115
      %s118 = sadd.s32 %s117, 1
      %p121 = scmp.eq.s32.totalorder %s20, 1
      %p122 = scmp.ne.s32.totalorder %s117, %s119
      %p123 = scmp.eq.s32.totalorder %s20, 0
      %p124 = por %p122, %p123
      %p125 = scmp.ne.s32.totalorder %s117, %s119
      %p126 = scmp.eq.s32.totalorder %s25, 1
      %p127 = por %p125, %p126
      %p128 = scmp.ne.s32.totalorder %s119, %s120
      %p129 = scmp.eq.s32.totalorder %s25, 0
      %p130 = por %p128, %p129
      %p131 = scmp.ne.s32.totalorder %s119, %s120
      %p132 = scmp.eq.s32.totalorder %s26, 1
      %p133 = por %p131, %p132
      %p135 = scmp.ne.s32.totalorder %s120, %s134
      %p136 = scmp.eq.s32.totalorder %s26, 0
      %p137 = por %p135, %p136
      %s139 = sadd.s32 %s138, 1
      %p142 = scmp.eq.s32.totalorder %s20, 1
      %p143 = scmp.ne.s32.totalorder %s138, %s140
      %p144 = scmp.eq.s32.totalorder %s20, 0
      %p145 = por %p143, %p144
      %p146 = scmp.ne.s32.totalorder %s138, %s140
      %p147 = scmp.eq.s32.totalorder %s25, 1
      %p148 = por %p146, %p147
      %p149 = scmp.ne.s32.totalorder %s140, %s141
      %p150 = scmp.eq.s32.totalorder %s25, 0
      %p151 = por %p149, %p150
      %p152 = scmp.ne.s32.totalorder %s140, %s141
      %p153 = scmp.eq.s32.totalorder %s26, 1
      %p154 = por %p152, %p153
      %p156 = scmp.ne.s32.totalorder %s141, %s155
      %p157 = scmp.eq.s32.totalorder %s26, 0
      %p158 = por %p156, %p157
      %s160 = sadd.s32 %s159, 1
      %p163 = scmp.eq.s32.totalorder %s20, 1
      %p164 = scmp.ne.s32.totalorder %s159, %s161
      %p165 = scmp.eq.s32.totalorder %s20, 0
      %p166 = por %p164, %p165
      %p167 = scmp.ne.s32.totalorder %s159, %s161
      %p168 = scmp.eq.s32.totalorder %s25, 1
      %p169 = por %p167, %p168
      %p170 = scmp.ne.s32.totalorder %s161, %s162
      %p171 = scmp.eq.s32.totalorder %s25, 0
      %p172 = por %p170, %p171
      %p173 = scmp.ne.s32.totalorder %s161, %s162
      %p174 = scmp.eq.s32.totalorder %s26, 1
      %p175 = por %p173, %p174
      %p177 = scmp.ne.s32.totalorder %s162, %s176
      %p178 = scmp.eq.s32.totalorder %s26, 0
      %p179 = por %p177, %p178
      %s180 = ssub.s32 %s20, %s27
      %p181 = scmp.eq.s32.totalorder %s180, 0
      %s183 = sadd.s32 %s182, 1
      %s184 = scalar_select %p181, %s182, %s183
      %p187 = pneg %p181
      %p188 = scmp.eq.s32.totalorder %s20, 1
      %p189 = por %p187, %p188
      %p190 = scmp.ne.s32.totalorder %s182, %s185
      %p191 = scmp.eq.s32.totalorder %s20, 0
      %p192 = por %p190, %p191
      %p193 = scmp.ne.s32.totalorder %s182, %s185
      %p194 = scmp.eq.s32.totalorder %s25, 1
      %p195 = por %p193, %p194
      %p196 = scmp.ne.s32.totalorder %s185, %s186
      %p197 = scmp.eq.s32.totalorder %s25, 0
      %p198 = por %p196, %p197
      %p199 = scmp.ne.s32.totalorder %s185, %s186
      %p200 = scmp.eq.s32.totalorder %s26, 1
      %p201 = por %p199, %p200
      %p203 = scmp.ne.s32.totalorder %s186, %s202
      %p204 = scmp.eq.s32.totalorder %s26, 0
      %p205 = por %p203, %p204
      %p206 = scmp.le.s32.totalorder 1, %s20
      %p207 = scmp.lt.s32.totalorder %s20, 3
      %p208 = pnand %p206, %p207
      %p209 = pneg %p208
      // Predicated region
      $region9: #{tpu_custom_call.1} parent=5 // pred_check
        _
      $region10: #{tpu_custom_call.1} parent=5 // pred_check_branch
        %211 = sbr.rel (%p208) target = $region12
      $region11: #{tpu_custom_call.1} parent=5 // pred_region
        %s212 = ssub.s32 %s20, 1
        // Predicated region
        $region13: #{tpu_custom_call.1} parent=11 // pred_check
          %p213 = pneg %p67
        $region14: #{tpu_custom_call.1} parent=11 // pred_check_branch
          %215 = sbr.rel (%p213) target = $region16
        $region15: #{tpu_custom_call.1} parent=11 // pred_region
          %217 = vsyncadd [#allocation6], 0
          %s218 = sshll.u32 %s1, 4
          %s219 = int_to_ptr.hbm [resolvable:$true] %s218
          %s220 = sshll.u32 [#allocation5], 4
          %s221 = int_to_ptr.vmem [resolvable:$true] %s220
          %226 = dma.hbm_to_vmem [thread:$0]  %s219, 2048, %s221, [#allocation6], 128, 128, 8
        $region16: #{tpu_custom_call.1} parent=11 // pred_fallthru
          _
        // Predicated region
        $region17: #{tpu_custom_call.1} parent=11 // pred_check
          %p227 = pneg %p88
        $region18: #{tpu_custom_call.1} parent=11 // pred_check_branch
          %229 = sbr.rel (%p227) target = $region20
        $region19: #{tpu_custom_call.1} parent=11 // pred_region
          %231 = vsyncadd [#allocation6], 0
          %s232 = sshll.u32 %s2, 4
          %s233 = int_to_ptr.hbm [resolvable:$true] %s232
          %s234 = sshll.u32 [#allocation7], 4
          %s235 = int_to_ptr.vmem [resolvable:$true] %s234
          %240 = dma.hbm_to_vmem [thread:$0]  %s233, 8192, %s235, [#allocation6], 128, 128, 8
        $region20: #{tpu_custom_call.1} parent=11 // pred_fallthru
          _
        // Predicated region
        $region21: #{tpu_custom_call.1} parent=11 // pred_check
          %p241 = pneg %p109
        $region22: #{tpu_custom_call.1} parent=11 // pred_check_branch
          %243 = sbr.rel (%p241) target = $region24
        $region23: #{tpu_custom_call.1} parent=11 // pred_region
          _
        $region24: #{tpu_custom_call.1} parent=11 // pred_fallthru
          _
        // Predicated region
        $region25: #{tpu_custom_call.1} parent=11 // pred_check
          %p244 = pneg %p130
        $region26: #{tpu_custom_call.1} parent=11 // pred_check_branch
          %246 = sbr.rel (%p244) target = $region28
        $region27: #{tpu_custom_call.1} parent=11 // pred_region
          _
        $region28: #{tpu_custom_call.1} parent=11 // pred_fallthru
          _
        // Predicated region
        $region29: #{tpu_custom_call.1} parent=11 // pred_check
          %p247 = pneg %p151
        $region30: #{tpu_custom_call.1} parent=11 // pred_check_branch
          %249 = sbr.rel (%p247) target = $region32
        $region31: #{tpu_custom_call.1} parent=11 // pred_region
          _
        $region32: #{tpu_custom_call.1} parent=11 // pred_fallthru
          _
        // Predicated region
        $region33: #{tpu_custom_call.1} parent=11 // pred_check
          %p250 = pneg %p172
        $region34: #{tpu_custom_call.1} parent=11 // pred_check_branch
          %252 = sbr.rel (%p250) target = $region36
        $region35: #{tpu_custom_call.1} parent=11 // pred_region
          _
        $region36: #{tpu_custom_call.1} parent=11 // pred_fallthru
          _
      $region12: #{tpu_custom_call.1} parent=5 // pred_fallthru
        _
      %p253 = scmp.lt.s32.totalorder %s20, 2
      // Predicated region
      $region37: #{tpu_custom_call.1} parent=5 // pred_check
        %p254 = pneg %p253
      $region38: #{tpu_custom_call.1} parent=5 // pred_check_branch
        %256 = sbr.rel (%p254) target = $region40
      $region39: #{tpu_custom_call.1} parent=5 // pred_region
        // Predicated region
        $region41: #{tpu_custom_call.1} parent=39 // pred_check
          %p257 = pneg %p40
        $region42: #{tpu_custom_call.1} parent=39 // pred_check_branch
          %259 = sbr.rel (%p257) target = $region44
        $region43: #{tpu_custom_call.1} parent=39 // pred_region
          %s260 = sand.u32 %s30, 1
          %s261 = scalar_lea.sflag [#allocation3], %s260
          %s262 = sand.u32 %s30, 1
          %s263 = smul.addr %s262, 256
          %s264 = scalar_lea.vmem [#allocation2], %s263
          %266 = vsyncadd %s261, 0
          %s267 = smul.addr %s20, 32
          %s268 = smul.addr %s267, 8
          %s269 = scalar_lea.hbm %s0, %s268
          %s270 = sshll.u32 %s269, 4
          %s271 = int_to_ptr.hbm [resolvable:$true] %s270
          %s272 = sshll.u32 %s264, 4
          %s273 = int_to_ptr.vmem [resolvable:$true] %s272
          %278 = dma.hbm_to_vmem [thread:$0]  %s271, 4096, %s273, %s261, 128, 128, 8
        $region44: #{tpu_custom_call.1} parent=39 // pred_fallthru
          _
      $region40: #{tpu_custom_call.1} parent=5 // pred_fallthru
        _
      %p279 = scmp.le.s32.totalorder 1, %s20
      %p280 = scmp.lt.s32.totalorder %s20, 3
      %p281 = pnand %p279, %p280
      %p282 = pneg %p281
      // Predicated region
      $region45: #{tpu_custom_call.1} parent=5 // pred_check
        _
      $region46: #{tpu_custom_call.1} parent=5 // pred_check_branch
        %284 = sbr.rel (%p281) target = $region48
      $region47: #{tpu_custom_call.1} parent=5 // pred_region
        %s285 = ssub.s32 %s20, 1
        %s286 = sand.u32 %s33, 1
        %s287 = scalar_lea.sflag [#allocation3], %s286
        %s288 = sand.u32 %s33, 1
        %s289 = smul.addr %s288, 256
        %s290 = scalar_lea.vmem [#allocation2], %s289
        // Predicated region
        $region49: #{tpu_custom_call.1} parent=47 // pred_check
          %p291 = pneg %p46
        $region50: #{tpu_custom_call.1} parent=47 // pred_check_branch
          %293 = sbr.rel (%p291) target = $region52
        $region51: #{tpu_custom_call.1} parent=47 // pred_region
          %295 = dma.done %s287, 4096
        $region52: #{tpu_custom_call.1} parent=47 // pred_fallthru
          _
        // Predicated region
        $region53: #{tpu_custom_call.1} parent=47 // pred_check
          %p296 = pneg %p67
        $region54: #{tpu_custom_call.1} parent=47 // pred_check_branch
          %298 = sbr.rel (%p296) target = $region56
        $region55: #{tpu_custom_call.1} parent=47 // pred_region
          %300 = dma.done [#allocation6], 2048
        $region56: #{tpu_custom_call.1} parent=47 // pred_fallthru
          _
        // Predicated region
        $region57: #{tpu_custom_call.1} parent=47 // pred_check
          %p301 = pneg %p88
        $region58: #{tpu_custom_call.1} parent=47 // pred_check_branch
          %303 = sbr.rel (%p301) target = $region60
        $region59: #{tpu_custom_call.1} parent=47 // pred_region
          %305 = dma.done [#allocation6], 8192
        $region60: #{tpu_custom_call.1} parent=47 // pred_fallthru
          _
        %s306 = sand.u32 %s33, 1
        %s307 = scalar_lea.sflag [#allocation3], %s306
        %s308 = sand.u32 %s33, 1
        %s309 = smul.addr %s308, 256
        %s310 = scalar_lea.vmem [#allocation2], %s309
        %p311 = pneg %p46
        %p312 = pneg %p43
        %p313 = pneg %p67
        %p314 = pneg %p64
        %p315 = pneg %p88
        %p316 = pneg %p85
        %p317 = pneg %p109
        %p318 = pneg %p106
        %p319 = pneg %p130
        %p320 = pneg %p127
        %p321 = pneg %p151
        %p322 = pneg %p148
        %p323 = pneg %p172
        %p324 = pneg %p169
        %p325 = pneg %p198
        %p326 = pneg %p195
        %s327 = sand.u32 %s185, 1
        %s328 = scalar_lea.sflag [#allocation4], %s327
        %s329 = sand.u32 %s185, 1
        %s330 = smul.addr %s329, 256
        %s331 = scalar_lea.vmem [#allocation8], %s330
        %v332 = vld [vmem:[%s290] sm:$0xff]
        %v333 = vld [vmem:[%s290 + $0x8] sm:$0xff]
        %v334 = vld [vmem:[%s290 + $0x10] sm:$0xff]
        %v335 = vld [vmem:[%s290 + $0x18] sm:$0xff]
        %v336 = vld [vmem:[%s290 + $0x20] sm:$0xff]
        %v337 = vld [vmem:[%s290 + $0x28] sm:$0xff]
        %v338 = vld [vmem:[%s290 + $0x30] sm:$0xff]
        %v339 = vld [vmem:[%s290 + $0x38] sm:$0xff]
        %v340 = vld [vmem:[%s290 + $0x40] sm:$0xff]
        %v341 = vld [vmem:[%s290 + $0x48] sm:$0xff]
        %v342 = vld [vmem:[%s290 + $0x50] sm:$0xff]
        %v343 = vld [vmem:[%s290 + $0x58] sm:$0xff]
        %v344 = vld [vmem:[%s290 + $0x60] sm:$0xff]
        %v345 = vld [vmem:[%s290 + $0x68] sm:$0xff]
        %v346 = vld [vmem:[%s290 + $0x70] sm:$0xff]
        %v347 = vld [vmem:[%s290 + $0x78] sm:$0xff]
        %v348 = vld [vmem:[%s290 + $0x80] sm:$0xff]
        %v349 = vld [vmem:[%s290 + $0x88] sm:$0xff]
        %v350 = vld [vmem:[%s290 + $0x90] sm:$0xff]
        %v351 = vld [vmem:[%s290 + $0x98] sm:$0xff]
        %v352 = vld [vmem:[%s290 + $0xa0] sm:$0xff]
        %v353 = vld [vmem:[%s290 + $0xa8] sm:$0xff]
        %v354 = vld [vmem:[%s290 + $0xb0] sm:$0xff]
        %v355 = vld [vmem:[%s290 + $0xb8] sm:$0xff]
        %v356 = vld [vmem:[%s290 + $0xc0] sm:$0xff]
        %v357 = vld [vmem:[%s290 + $0xc8] sm:$0xff]
        %v358 = vld [vmem:[%s290 + $0xd0] sm:$0xff]
        %v359 = vld [vmem:[%s290 + $0xd8] sm:$0xff]
        %v360 = vld [vmem:[%s290 + $0xe0] sm:$0xff]
        %v361 = vld [vmem:[%s290 + $0xe8] sm:$0xff]
        %v362 = vld [vmem:[%s290 + $0xf0] sm:$0xff]
        %v363 = vld [vmem:[%s290 + $0xf8] sm:$0xff]
        %v364 = vld [vmem:[#allocation5] sm:$0xff]
        %v365 = vld [vmem:[#allocation5 + $0x8] sm:$0xff]
        %v366 = vld [vmem:[#allocation5 + $0x10] sm:$0xff]
        %v367 = vld [vmem:[#allocation5 + $0x18] sm:$0xff]
        %v368 = vld [vmem:[#allocation5 + $0x20] sm:$0xff]
        %v369 = vld [vmem:[#allocation5 + $0x28] sm:$0xff]
        %v370 = vld [vmem:[#allocation5 + $0x30] sm:$0xff]
        %v371 = vld [vmem:[#allocation5 + $0x38] sm:$0xff]
        %v372 = vld [vmem:[#allocation5 + $0x40] sm:$0xff]
        %v373 = vld [vmem:[#allocation5 + $0x48] sm:$0xff]
        %v374 = vld [vmem:[#allocation5 + $0x50] sm:$0xff]
        %v375 = vld [vmem:[#allocation5 + $0x58] sm:$0xff]
        %v376 = vld [vmem:[#allocation5 + $0x60] sm:$0xff]
        %v377 = vld [vmem:[#allocation5 + $0x68] sm:$0xff]
        %v378 = vld [vmem:[#allocation5 + $0x70] sm:$0xff]
        %v379 = vld [vmem:[#allocation5 + $0x78] sm:$0xff]
        %380 = vmatpush.msra.mxu0 %v379
        %381 = vmatpush.msra.mxu0 %v378
        %382 = vmatpush.msra.mxu0 %v377
        %383 = vmatpush.msra.mxu0 %v376
        %384 = vmatpush.msra.mxu0 %v375
        %385 = vmatpush.msra.mxu0 %v374
        %386 = vmatpush.msra.mxu0 %v373
        %387 = vmatpush.msra.mxu0 %v372
        %388 = vmatpush.msra.mxu0 %v371
        %389 = vmatpush.msra.mxu0 %v370
        %390 = vmatpush.msra.mxu0 %v369
        %391 = vmatpush.msra.mxu0 %v368
        %392 = vmatpush.msra.mxu0 %v367
        %393 = vmatpush.msra.mxu0 %v366
        %394 = vmatpush.msra.mxu0 %v365
        %395 = vmatpush.msra.mxu0 %v364
        %396 = vmatmul.f32.gmra.mxu0 %v332
        %v397 = vpop.f32.mrf.mxu0
        %v398 = vadd.f32 0.0, %v397
        %399 = vmatmul.f32.gmra.mxu0 %v333
        %v400 = vpop.f32.mrf.mxu0
        %v401 = vadd.f32 0.0, %v400
        %402 = vmatmul.f32.gmra.mxu0 %v334
        %v403 = vpop.f32.mrf.mxu0
        %v404 = vadd.f32 0.0, %v403
        %405 = vmatmul.f32.gmra.mxu0 %v335
        %v406 = vpop.f32.mrf.mxu0
        %v407 = vadd.f32 0.0, %v406
        %408 = vmatmul.f32.gmra.mxu0 %v336
        %v409 = vpop.f32.mrf.mxu0
        %v410 = vadd.f32 0.0, %v409
        %411 = vmatmul.f32.gmra.mxu0 %v337
        %v412 = vpop.f32.mrf.mxu0
        %v413 = vadd.f32 0.0, %v412
        %414 = vmatmul.f32.gmra.mxu0 %v338
        %v415 = vpop.f32.mrf.mxu0
        %v416 = vadd.f32 0.0, %v415
        %417 = vmatmul.f32.gmra.mxu0 %v339
        %v418 = vpop.f32.mrf.mxu0
        %v419 = vadd.f32 0.0, %v418
        %420 = vmatmul.f32.gmra.mxu0 %v340
        %v421 = vpop.f32.mrf.mxu0
        %v422 = vadd.f32 0.0, %v421
        %423 = vmatmul.f32.gmra.mxu0 %v341
        %v424 = vpop.f32.mrf.mxu0
        %v425 = vadd.f32 0.0, %v424
        %426 = vmatmul.f32.gmra.mxu0 %v342
        %v427 = vpop.f32.mrf.mxu0
        %v428 = vadd.f32 0.0, %v427
        %429 = vmatmul.f32.gmra.mxu0 %v343
        %v430 = vpop.f32.mrf.mxu0
        %v431 = vadd.f32 0.0, %v430
        %432 = vmatmul.f32.gmra.mxu0 %v344
        %v433 = vpop.f32.mrf.mxu0
        %v434 = vadd.f32 0.0, %v433
        %435 = vmatmul.f32.gmra.mxu0 %v345
        %v436 = vpop.f32.mrf.mxu0
        %v437 = vadd.f32 0.0, %v436
        %438 = vmatmul.f32.gmra.mxu0 %v346
        %v439 = vpop.f32.mrf.mxu0
        %v440 = vadd.f32 0.0, %v439
        %441 = vmatmul.f32.gmra.mxu0 %v347
        %v442 = vpop.f32.mrf.mxu0
        %v443 = vadd.f32 0.0, %v442
        %444 = vmatmul.f32.gmra.mxu0 %v348
        %v445 = vpop.f32.mrf.mxu0
        %v446 = vadd.f32 0.0, %v445
        %447 = vmatmul.f32.gmra.mxu0 %v349
        %v448 = vpop.f32.mrf.mxu0
        %v449 = vadd.f32 0.0, %v448
        %450 = vmatmul.f32.gmra.mxu0 %v350
        %v451 = vpop.f32.mrf.mxu0
        %v452 = vadd.f32 0.0, %v451
        %453 = vmatmul.f32.gmra.mxu0 %v351
        %v454 = vpop.f32.mrf.mxu0
        %v455 = vadd.f32 0.0, %v454
        %456 = vmatmul.f32.gmra.mxu0 %v352
        %v457 = vpop.f32.mrf.mxu0
        %v458 = vadd.f32 0.0, %v457
        %459 = vmatmul.f32.gmra.mxu0 %v353
        %v460 = vpop.f32.mrf.mxu0
        %v461 = vadd.f32 0.0, %v460
        %462 = vmatmul.f32.gmra.mxu0 %v354
        %v463 = vpop.f32.mrf.mxu0
        %v464 = vadd.f32 0.0, %v463
        %465 = vmatmul.f32.gmra.mxu0 %v355
        %v466 = vpop.f32.mrf.mxu0
        %v467 = vadd.f32 0.0, %v466
        %468 = vmatmul.f32.gmra.mxu0 %v356
        %v469 = vpop.f32.mrf.mxu0
        %v470 = vadd.f32 0.0, %v469
        %471 = vmatmul.f32.gmra.mxu0 %v357
        %v472 = vpop.f32.mrf.mxu0
        %v473 = vadd.f32 0.0, %v472
        %474 = vmatmul.f32.gmra.mxu0 %v358
        %v475 = vpop.f32.mrf.mxu0
        %v476 = vadd.f32 0.0, %v475
        %477 = vmatmul.f32.gmra.mxu0 %v359
        %v478 = vpop.f32.mrf.mxu0
        %v479 = vadd.f32 0.0, %v478
        %480 = vmatmul.f32.gmra.mxu0 %v360
        %v481 = vpop.f32.mrf.mxu0
        %v482 = vadd.f32 0.0, %v481
        %483 = vmatmul.f32.gmra.mxu0 %v361
        %v484 = vpop.f32.mrf.mxu0
        %v485 = vadd.f32 0.0, %v484
        %486 = vmatmul.f32.gmra.mxu0 %v362
        %v487 = vpop.f32.mrf.mxu0
        %v488 = vadd.f32 0.0, %v487
        %489 = vmatmul.f32.gmra.mxu0 %v363
        %v490 = vpop.f32.mrf.mxu0
        %v491 = vadd.f32 0.0, %v490
        %492 = vdwg.mxu0
        %v493 = vld [vmem:[%s3] sm:$0x1]
        %v495 = vperm.slane %v493, 0
        %v497 = vmul.f32 %v398, %v495
        %v498 = vmul.f32 %v401, %v495
        %v499 = vmul.f32 %v404, %v495
        %v500 = vmul.f32 %v407, %v495
        %v501 = vmul.f32 %v410, %v495
        %v502 = vmul.f32 %v413, %v495
        %v503 = vmul.f32 %v416, %v495
        %v504 = vmul.f32 %v419, %v495
        %v505 = vmul.f32 %v422, %v495
        %v506 = vmul.f32 %v425, %v495
        %v507 = vmul.f32 %v428, %v495
        %v508 = vmul.f32 %v431, %v495
        %v509 = vmul.f32 %v434, %v495
        %v510 = vmul.f32 %v437, %v495
        %v511 = vmul.f32 %v440, %v495
        %v512 = vmul.f32 %v443, %v495
        %v513 = vmul.f32 %v446, %v495
        %v514 = vmul.f32 %v449, %v495
        %v515 = vmul.f32 %v452, %v495
        %v516 = vmul.f32 %v455, %v495
        %v517 = vmul.f32 %v458, %v495
        %v518 = vmul.f32 %v461, %v495
        %v519 = vmul.f32 %v464, %v495
        %v520 = vmul.f32 %v467, %v495
        %v521 = vmul.f32 %v470, %v495
        %v522 = vmul.f32 %v473, %v495
        %v523 = vmul.f32 %v476, %v495
        %v524 = vmul.f32 %v479, %v495
        %v525 = vmul.f32 %v482, %v495
        %v526 = vmul.f32 %v485, %v495
        %v527 = vmul.f32 %v488, %v495
        %v528 = vmul.f32 %v491, %v495
        %v529 = vld [vmem:[%s4] sm:$0x1]
        %v531 = vperm.slane %v529, 0
        %v533 = vadd.f32 %v497, %v531
        %v534 = vadd.f32 %v498, %v531
        %v535 = vadd.f32 %v499, %v531
        %v536 = vadd.f32 %v500, %v531
        %v537 = vadd.f32 %v501, %v531
        %v538 = vadd.f32 %v502, %v531
        %v539 = vadd.f32 %v503, %v531
        %v540 = vadd.f32 %v504, %v531
        %v541 = vadd.f32 %v505, %v531
        %v542 = vadd.f32 %v506, %v531
        %v543 = vadd.f32 %v507, %v531
        %v544 = vadd.f32 %v508, %v531
        %v545 = vadd.f32 %v509, %v531
        %v546 = vadd.f32 %v510, %v531
        %v547 = vadd.f32 %v511, %v531
        %v548 = vadd.f32 %v512, %v531
        %v549 = vadd.f32 %v513, %v531
        %v550 = vadd.f32 %v514, %v531
        %v551 = vadd.f32 %v515, %v531
        %v552 = vadd.f32 %v516, %v531
        %v553 = vadd.f32 %v517, %v531
        %v554 = vadd.f32 %v518, %v531
        %v555 = vadd.f32 %v519, %v531
        %v556 = vadd.f32 %v520, %v531
        %v557 = vadd.f32 %v521, %v531
        %v558 = vadd.f32 %v522, %v531
        %v559 = vadd.f32 %v523, %v531
        %v560 = vadd.f32 %v524, %v531
        %v561 = vadd.f32 %v525, %v531
        %v562 = vadd.f32 %v526, %v531
        %v563 = vadd.f32 %v527, %v531
        %v564 = vadd.f32 %v528, %v531
        %vm565 = vcmp.gt.f32.partialorder %v533, 0.0
        %vm566 = vcmp.gt.f32.partialorder %v534, 0.0
        %vm567 = vcmp.gt.f32.partialorder %v535, 0.0
        %vm568 = vcmp.gt.f32.partialorder %v536, 0.0
        %vm569 = vcmp.gt.f32.partialorder %v537, 0.0
        %vm570 = vcmp.gt.f32.partialorder %v538, 0.0
        %vm571 = vcmp.gt.f32.partialorder %v539, 0.0
        %vm572 = vcmp.gt.f32.partialorder %v540, 0.0
        %vm573 = vcmp.gt.f32.partialorder %v541, 0.0
        %vm574 = vcmp.gt.f32.partialorder %v542, 0.0
        %vm575 = vcmp.gt.f32.partialorder %v543, 0.0
        %vm576 = vcmp.gt.f32.partialorder %v544, 0.0
        %vm577 = vcmp.gt.f32.partialorder %v545, 0.0
        %vm578 = vcmp.gt.f32.partialorder %v546, 0.0
        %vm579 = vcmp.gt.f32.partialorder %v547, 0.0
        %vm580 = vcmp.gt.f32.partialorder %v548, 0.0
        %vm581 = vcmp.gt.f32.partialorder %v549, 0.0
        %vm582 = vcmp.gt.f32.partialorder %v550, 0.0
        %vm583 = vcmp.gt.f32.partialorder %v551, 0.0
        %vm584 = vcmp.gt.f32.partialorder %v552, 0.0
        %vm585 = vcmp.gt.f32.partialorder %v553, 0.0
        %vm586 = vcmp.gt.f32.partialorder %v554, 0.0
        %vm587 = vcmp.gt.f32.partialorder %v555, 0.0
        %vm588 = vcmp.gt.f32.partialorder %v556, 0.0
        %vm589 = vcmp.gt.f32.partialorder %v557, 0.0
        %vm590 = vcmp.gt.f32.partialorder %v558, 0.0
        %vm591 = vcmp.gt.f32.partialorder %v559, 0.0
        %vm592 = vcmp.gt.f32.partialorder %v560, 0.0
        %vm593 = vcmp.gt.f32.partialorder %v561, 0.0
        %vm594 = vcmp.gt.f32.partialorder %v562, 0.0
        %vm595 = vcmp.gt.f32.partialorder %v563, 0.0
        %vm596 = vcmp.gt.f32.partialorder %v564, 0.0
        %v597 = vmul.f32 %v533, 0.1
        %v598 = vmul.f32 %v534, 0.1
        %v599 = vmul.f32 %v535, 0.1
        %v600 = vmul.f32 %v536, 0.1
        %v601 = vmul.f32 %v537, 0.1
        %v602 = vmul.f32 %v538, 0.1
        %v603 = vmul.f32 %v539, 0.1
        %v604 = vmul.f32 %v540, 0.1
        %v605 = vmul.f32 %v541, 0.1
        %v606 = vmul.f32 %v542, 0.1
        %v607 = vmul.f32 %v543, 0.1
        %v608 = vmul.f32 %v544, 0.1
        %v609 = vmul.f32 %v545, 0.1
        %v610 = vmul.f32 %v546, 0.1
        %v611 = vmul.f32 %v547, 0.1
        %v612 = vmul.f32 %v548, 0.1
        %v613 = vmul.f32 %v549, 0.1
        %v614 = vmul.f32 %v550, 0.1
        %v615 = vmul.f32 %v551, 0.1
        %v616 = vmul.f32 %v552, 0.1
        %v617 = vmul.f32 %v553, 0.1
        %v618 = vmul.f32 %v554, 0.1
        %v619 = vmul.f32 %v555, 0.1
        %v620 = vmul.f32 %v556, 0.1
        %v621 = vmul.f32 %v557, 0.1
        %v622 = vmul.f32 %v558, 0.1
        %v623 = vmul.f32 %v559, 0.1
        %v624 = vmul.f32 %v560, 0.1
        %v625 = vmul.f32 %v561, 0.1
        %v626 = vmul.f32 %v562, 0.1
        %v627 = vmul.f32 %v563, 0.1
        %v628 = vmul.f32 %v564, 0.1
        %v629 = vsel %vm565, %v533, %v597
        %v630 = vsel %vm566, %v534, %v598
        %v631 = vsel %vm567, %v535, %v599
        %v632 = vsel %vm568, %v536, %v600
        %v633 = vsel %vm569, %v537, %v601
        %v634 = vsel %vm570, %v538, %v602
        %v635 = vsel %vm571, %v539, %v603
        %v636 = vsel %vm572, %v540, %v604
        %v637 = vsel %vm573, %v541, %v605
        %v638 = vsel %vm574, %v542, %v606
        %v639 = vsel %vm575, %v543, %v607
        %v640 = vsel %vm576, %v544, %v608
        %v641 = vsel %vm577, %v545, %v609
        %v642 = vsel %vm578, %v546, %v610
        %v643 = vsel %vm579, %v547, %v611
        %v644 = vsel %vm580, %v548, %v612
        %v645 = vsel %vm581, %v549, %v613
        %v646 = vsel %vm582, %v550, %v614
        %v647 = vsel %vm583, %v551, %v615
        %v648 = vsel %vm584, %v552, %v616
        %v649 = vsel %vm585, %v553, %v617
        %v650 = vsel %vm586, %v554, %v618
        %v651 = vsel %vm587, %v555, %v619
        %v652 = vsel %vm588, %v556, %v620
        %v653 = vsel %vm589, %v557, %v621
        %v654 = vsel %vm590, %v558, %v622
        %v655 = vsel %vm591, %v559, %v623
        %v656 = vsel %vm592, %v560, %v624
        %v657 = vsel %vm593, %v561, %v625
        %v658 = vsel %vm594, %v562, %v626
        %v659 = vsel %vm595, %v563, %v627
        %v660 = vsel %vm596, %v564, %v628
        %vm693 = vcmask 1046528
        %v694 = vrot.slane %v629, 1
        %v695 = vrot.slane %v630, 1
        %v696 = vsel %vm693, %v694, %v695
        %v697 = vrot.slane %v631, 1
        %v698 = vrot.slane %v632, 1
        %v699 = vsel %vm693, %v697, %v698
        %v700 = vrot.slane %v633, 1
        %v701 = vrot.slane %v634, 1
        %v702 = vsel %vm693, %v700, %v701
        %v703 = vrot.slane %v635, 1
        %v704 = vrot.slane %v636, 1
        %v705 = vsel %vm693, %v703, %v704
        %v706 = vrot.slane %v637, 1
        %v707 = vrot.slane %v638, 1
        %v708 = vsel %vm693, %v706, %v707
        %v709 = vrot.slane %v639, 1
        %v710 = vrot.slane %v640, 1
        %v711 = vsel %vm693, %v709, %v710
        %v712 = vrot.slane %v641, 1
        %v713 = vrot.slane %v642, 1
        %v714 = vsel %vm693, %v712, %v713
        %v715 = vrot.slane %v643, 1
        %v716 = vrot.slane %v644, 1
        %v717 = vsel %vm693, %v715, %v716
        %v718 = vrot.slane %v645, 1
        %v719 = vrot.slane %v646, 1
        %v720 = vsel %vm693, %v718, %v719
        %v721 = vrot.slane %v647, 1
        %v722 = vrot.slane %v648, 1
        %v723 = vsel %vm693, %v721, %v722
        %v724 = vrot.slane %v649, 1
        %v725 = vrot.slane %v650, 1
        %v726 = vsel %vm693, %v724, %v725
        %v727 = vrot.slane %v651, 1
        %v728 = vrot.slane %v652, 1
        %v729 = vsel %vm693, %v727, %v728
        %v730 = vrot.slane %v653, 1
        %v731 = vrot.slane %v654, 1
        %v732 = vsel %vm693, %v730, %v731
        %v733 = vrot.slane %v655, 1
        %v734 = vrot.slane %v656, 1
        %v735 = vsel %vm693, %v733, %v734
        %v736 = vrot.slane %v657, 1
        %v737 = vrot.slane %v658, 1
        %v738 = vsel %vm693, %v736, %v737
        %v739 = vrot.slane %v659, 1
        %v740 = vrot.slane %v660, 1
        %v741 = vsel %vm693, %v739, %v740
        %v774 = vsel %vm693, %v695, -inf
        %v775 = vsel %vm693, %v698, -inf
        %v776 = vsel %vm693, %v701, -inf
        %v777 = vsel %vm693, %v704, -inf
        %v778 = vsel %vm693, %v707, -inf
        %v779 = vsel %vm693, %v710, -inf
        %v780 = vsel %vm693, %v713, -inf
        %v781 = vsel %vm693, %v716, -inf
        %v782 = vsel %vm693, %v719, -inf
        %v783 = vsel %vm693, %v722, -inf
        %v784 = vsel %vm693, %v725, -inf
        %v785 = vsel %vm693, %v728, -inf
        %v786 = vsel %vm693, %v731, -inf
        %v787 = vsel %vm693, %v734, -inf
        %v788 = vsel %vm693, %v737, -inf
        %v789 = vsel %vm693, %v740, -inf
        %vm790 = vcmask 1040384
        %v791 = vrot.slane %v629, 7
        %v792 = vrot.slane %v630, 7
        %v793 = vsel %vm790, %v791, %v792
        %v794 = vrot.slane %v631, 7
        %v795 = vrot.slane %v632, 7
        %v796 = vsel %vm790, %v794, %v795
        %v797 = vrot.slane %v633, 7
        %v798 = vrot.slane %v634, 7
        %v799 = vsel %vm790, %v797, %v798
        %v800 = vrot.slane %v635, 7
        %v801 = vrot.slane %v636, 7
        %v802 = vsel %vm790, %v800, %v801
        %v803 = vrot.slane %v637, 7
        %v804 = vrot.slane %v638, 7
        %v805 = vsel %vm790, %v803, %v804
        %v806 = vrot.slane %v639, 7
        %v807 = vrot.slane %v640, 7
        %v808 = vsel %vm790, %v806, %v807
        %v809 = vrot.slane %v641, 7
        %v810 = vrot.slane %v642, 7
        %v811 = vsel %vm790, %v809, %v810
        %v812 = vrot.slane %v643, 7
        %v813 = vrot.slane %v644, 7
        %v814 = vsel %vm790, %v812, %v813
        %v815 = vrot.slane %v645, 7
        %v816 = vrot.slane %v646, 7
        %v817 = vsel %vm790, %v815, %v816
        %v818 = vrot.slane %v647, 7
        %v819 = vrot.slane %v648, 7
        %v820 = vsel %vm790, %v818, %v819
        %v821 = vrot.slane %v649, 7
        %v822 = vrot.slane %v650, 7
        %v823 = vsel %vm790, %v821, %v822
        %v824 = vrot.slane %v651, 7
        %v825 = vrot.slane %v652, 7
        %v826 = vsel %vm790, %v824, %v825
        %v827 = vrot.slane %v653, 7
        %v828 = vrot.slane %v654, 7
        %v829 = vsel %vm790, %v827, %v828
        %v830 = vrot.slane %v655, 7
        %v831 = vrot.slane %v656, 7
        %v832 = vsel %vm790, %v830, %v831
        %v833 = vrot.slane %v657, 7
        %v834 = vrot.slane %v658, 7
        %v835 = vsel %vm790, %v833, %v834
        %v836 = vrot.slane %v659, 7
        %v837 = vrot.slane %v660, 7
        %v838 = vsel %vm790, %v836, %v837
        %v871 = vsel %vm790, -inf, %v791
        %v872 = vsel %vm790, -inf, %v794
        %v873 = vsel %vm790, -inf, %v797
        %v874 = vsel %vm790, -inf, %v800
        %v875 = vsel %vm790, -inf, %v803
        %v876 = vsel %vm790, -inf, %v806
        %v877 = vsel %vm790, -inf, %v809
        %v878 = vsel %vm790, -inf, %v812
        %v879 = vsel %vm790, -inf, %v815
        %v880 = vsel %vm790, -inf, %v818
        %v881 = vsel %vm790, -inf, %v821
        %v882 = vsel %vm790, -inf, %v824
        %v883 = vsel %vm790, -inf, %v827
        %v884 = vsel %vm790, -inf, %v830
        %v885 = vsel %vm790, -inf, %v833
        %v886 = vsel %vm790, -inf, %v836
        %v887 = vmax.f32 %v696, %v871
        %v888 = vmax.f32 %v774, %v793
        %v889 = vmax.f32 %v699, %v872
        %v890 = vmax.f32 %v775, %v796
        %v891 = vmax.f32 %v702, %v873
        %v892 = vmax.f32 %v776, %v799
        %v893 = vmax.f32 %v705, %v874
        %v894 = vmax.f32 %v777, %v802
        %v895 = vmax.f32 %v708, %v875
        %v896 = vmax.f32 %v778, %v805
        %v897 = vmax.f32 %v711, %v876
        %v898 = vmax.f32 %v779, %v808
        %v899 = vmax.f32 %v714, %v877
        %v900 = vmax.f32 %v780, %v811
        %v901 = vmax.f32 %v717, %v878
        %v902 = vmax.f32 %v781, %v814
        %v903 = vmax.f32 %v720, %v879
        %v904 = vmax.f32 %v782, %v817
        %v905 = vmax.f32 %v723, %v880
        %v906 = vmax.f32 %v783, %v820
        %v907 = vmax.f32 %v726, %v881
        %v908 = vmax.f32 %v784, %v823
        %v909 = vmax.f32 %v729, %v882
        %v910 = vmax.f32 %v785, %v826
        %v911 = vmax.f32 %v732, %v883
        %v912 = vmax.f32 %v786, %v829
        %v913 = vmax.f32 %v735, %v884
        %v914 = vmax.f32 %v787, %v832
        %v915 = vmax.f32 %v738, %v885
        %v916 = vmax.f32 %v788, %v835
        %v917 = vmax.f32 %v741, %v886
        %v918 = vmax.f32 %v789, %v838
        %v919 = vmax.f32 %v629, %v887
        %v920 = vmax.f32 %v630, %v888
        %v921 = vmax.f32 %v631, %v889
        %v922 = vmax.f32 %v632, %v890
        %v923 = vmax.f32 %v633, %v891
        %v924 = vmax.f32 %v634, %v892
        %v925 = vmax.f32 %v635, %v893
        %v926 = vmax.f32 %v636, %v894
        %v927 = vmax.f32 %v637, %v895
        %v928 = vmax.f32 %v638, %v896
        %v929 = vmax.f32 %v639, %v897
        %v930 = vmax.f32 %v640, %v898
        %v931 = vmax.f32 %v641, %v899
        %v932 = vmax.f32 %v642, %v900
        %v933 = vmax.f32 %v643, %v901
        %v934 = vmax.f32 %v644, %v902
        %v935 = vmax.f32 %v645, %v903
        %v936 = vmax.f32 %v646, %v904
        %v937 = vmax.f32 %v647, %v905
        %v938 = vmax.f32 %v648, %v906
        %v939 = vmax.f32 %v649, %v907
        %v940 = vmax.f32 %v650, %v908
        %v941 = vmax.f32 %v651, %v909
        %v942 = vmax.f32 %v652, %v910
        %v943 = vmax.f32 %v653, %v911
        %v944 = vmax.f32 %v654, %v912
        %v945 = vmax.f32 %v655, %v913
        %v946 = vmax.f32 %v656, %v914
        %v947 = vmax.f32 %v657, %v915
        %v948 = vmax.f32 %v658, %v916
        %v949 = vmax.f32 %v659, %v917
        %v950 = vmax.f32 %v660, %v918
        %vm951 = vcmask 1045504
        %v952 = vrot.slane %v629, 2
        %v953 = vrot.slane %v630, 2
        %v954 = vsel %vm951, %v952, %v953
        %v955 = vrot.slane %v631, 2
        %v956 = vrot.slane %v632, 2
        %v957 = vsel %vm951, %v955, %v956
        %v958 = vrot.slane %v633, 2
        %v959 = vrot.slane %v634, 2
        %v960 = vsel %vm951, %v958, %v959
        %v961 = vrot.slane %v635, 2
        %v962 = vrot.slane %v636, 2
        %v963 = vsel %vm951, %v961, %v962
        %v964 = vrot.slane %v637, 2
        %v965 = vrot.slane %v638, 2
        %v966 = vsel %vm951, %v964, %v965
        %v967 = vrot.slane %v639, 2
        %v968 = vrot.slane %v640, 2
        %v969 = vsel %vm951, %v967, %v968
        %v970 = vrot.slane %v641, 2
        %v971 = vrot.slane %v642, 2
        %v972 = vsel %vm951, %v970, %v971
        %v973 = vrot.slane %v643, 2
        %v974 = vrot.slane %v644, 2
        %v975 = vsel %vm951, %v973, %v974
        %v976 = vrot.slane %v645, 2
        %v977 = vrot.slane %v646, 2
        %v978 = vsel %vm951, %v976, %v977
        %v979 = vrot.slane %v647, 2
        %v980 = vrot.slane %v648, 2
        %v981 = vsel %vm951, %v979, %v980
        %v982 = vrot.slane %v649, 2
        %v983 = vrot.slane %v650, 2
        %v984 = vsel %vm951, %v982, %v983
        %v985 = vrot.slane %v651, 2
        %v986 = vrot.slane %v652, 2
        %v987 = vsel %vm951, %v985, %v986
        %v988 = vrot.slane %v653, 2
        %v989 = vrot.slane %v654, 2
        %v990 = vsel %vm951, %v988, %v989
        %v991 = vrot.slane %v655, 2
        %v992 = vrot.slane %v656, 2
        %v993 = vsel %vm951, %v991, %v992
        %v994 = vrot.slane %v657, 2
        %v995 = vrot.slane %v658, 2
        %v996 = vsel %vm951, %v994, %v995
        %v997 = vrot.slane %v659, 2
        %v998 = vrot.slane %v660, 2
        %v999 = vsel %vm951, %v997, %v998
        %v1032 = vsel %vm951, %v953, -inf
        %v1033 = vsel %vm951, %v956, -inf
        %v1034 = vsel %vm951, %v959, -inf
        %v1035 = vsel %vm951, %v962, -inf
        %v1036 = vsel %vm951, %v965, -inf
        %v1037 = vsel %vm951, %v968, -inf
        %v1038 = vsel %vm951, %v971, -inf
        %v1039 = vsel %vm951, %v974, -inf
        %v1040 = vsel %vm951, %v977, -inf
        %v1041 = vsel %vm951, %v980, -inf
        %v1042 = vsel %vm951, %v983, -inf
        %v1043 = vsel %vm951, %v986, -inf
        %v1044 = vsel %vm951, %v989, -inf
        %v1045 = vsel %vm951, %v992, -inf
        %v1046 = vsel %vm951, %v995, -inf
        %v1047 = vsel %vm951, %v998, -inf
        %vm1048 = vcmask 1041408
        %v1049 = vrot.slane %v629, 6
        %v1050 = vrot.slane %v630, 6
        %v1051 = vsel %vm1048, %v1049, %v1050
        %v1052 = vrot.slane %v631, 6
        %v1053 = vrot.slane %v632, 6
        %v1054 = vsel %vm1048, %v1052, %v1053
        %v1055 = vrot.slane %v633, 6
        %v1056 = vrot.slane %v634, 6
        %v1057 = vsel %vm1048, %v1055, %v1056
        %v1058 = vrot.slane %v635, 6
        %v1059 = vrot.slane %v636, 6
        %v1060 = vsel %vm1048, %v1058, %v1059
        %v1061 = vrot.slane %v637, 6
        %v1062 = vrot.slane %v638, 6
        %v1063 = vsel %vm1048, %v1061, %v1062
        %v1064 = vrot.slane %v639, 6
        %v1065 = vrot.slane %v640, 6
        %v1066 = vsel %vm1048, %v1064, %v1065
        %v1067 = vrot.slane %v641, 6
        %v1068 = vrot.slane %v642, 6
        %v1069 = vsel %vm1048, %v1067, %v1068
        %v1070 = vrot.slane %v643, 6
        %v1071 = vrot.slane %v644, 6
        %v1072 = vsel %vm1048, %v1070, %v1071
        %v1073 = vrot.slane %v645, 6
        %v1074 = vrot.slane %v646, 6
        %v1075 = vsel %vm1048, %v1073, %v1074
        %v1076 = vrot.slane %v647, 6
        %v1077 = vrot.slane %v648, 6
        %v1078 = vsel %vm1048, %v1076, %v1077
        %v1079 = vrot.slane %v649, 6
        %v1080 = vrot.slane %v650, 6
        %v1081 = vsel %vm1048, %v1079, %v1080
        %v1082 = vrot.slane %v651, 6
        %v1083 = vrot.slane %v652, 6
        %v1084 = vsel %vm1048, %v1082, %v1083
        %v1085 = vrot.slane %v653, 6
        %v1086 = vrot.slane %v654, 6
        %v1087 = vsel %vm1048, %v1085, %v1086
        %v1088 = vrot.slane %v655, 6
        %v1089 = vrot.slane %v656, 6
        %v1090 = vsel %vm1048, %v1088, %v1089
        %v1091 = vrot.slane %v657, 6
        %v1092 = vrot.slane %v658, 6
        %v1093 = vsel %vm1048, %v1091, %v1092
        %v1094 = vrot.slane %v659, 6
        %v1095 = vrot.slane %v660, 6
        %v1096 = vsel %vm1048, %v1094, %v1095
        %v1129 = vsel %vm1048, -inf, %v1049
        %v1130 = vsel %vm1048, -inf, %v1052
        %v1131 = vsel %vm1048, -inf, %v1055
        %v1132 = vsel %vm1048, -inf, %v1058
        %v1133 = vsel %vm1048, -inf, %v1061
        %v1134 = vsel %vm1048, -inf, %v1064
        %v1135 = vsel %vm1048, -inf, %v1067
        %v1136 = vsel %vm1048, -inf, %v1070
        %v1137 = vsel %vm1048, -inf, %v1073
        %v1138 = vsel %vm1048, -inf, %v1076
        %v1139 = vsel %vm1048, -inf, %v1079
        %v1140 = vsel %vm1048, -inf, %v1082
        %v1141 = vsel %vm1048, -inf, %v1085
        %v1142 = vsel %vm1048, -inf, %v1088
        %v1143 = vsel %vm1048, -inf, %v1091
        %v1144 = vsel %vm1048, -inf, %v1094
        %v1145 = vmax.f32 %v954, %v1129
        %v1146 = vmax.f32 %v1032, %v1051
        %v1147 = vmax.f32 %v957, %v1130
        %v1148 = vmax.f32 %v1033, %v1054
        %v1149 = vmax.f32 %v960, %v1131
        %v1150 = vmax.f32 %v1034, %v1057
        %v1151 = vmax.f32 %v963, %v1132
        %v1152 = vmax.f32 %v1035, %v1060
        %v1153 = vmax.f32 %v966, %v1133
        %v1154 = vmax.f32 %v1036, %v1063
        %v1155 = vmax.f32 %v969, %v1134
        %v1156 = vmax.f32 %v1037, %v1066
        %v1157 = vmax.f32 %v972, %v1135
        %v1158 = vmax.f32 %v1038, %v1069
        %v1159 = vmax.f32 %v975, %v1136
        %v1160 = vmax.f32 %v1039, %v1072
        %v1161 = vmax.f32 %v978, %v1137
        %v1162 = vmax.f32 %v1040, %v1075
        %v1163 = vmax.f32 %v981, %v1138
        %v1164 = vmax.f32 %v1041, %v1078
        %v1165 = vmax.f32 %v984, %v1139
        %v1166 = vmax.f32 %v1042, %v1081
        %v1167 = vmax.f32 %v987, %v1140
        %v1168 = vmax.f32 %v1043, %v1084
        %v1169 = vmax.f32 %v990, %v1141
        %v1170 = vmax.f32 %v1044, %v1087
        %v1171 = vmax.f32 %v993, %v1142
        %v1172 = vmax.f32 %v1045, %v1090
        %v1173 = vmax.f32 %v996, %v1143
        %v1174 = vmax.f32 %v1046, %v1093
        %v1175 = vmax.f32 %v999, %v1144
        %v1176 = vmax.f32 %v1047, %v1096
        %v1177 = vmax.f32 %v919, %v1145
        %v1178 = vmax.f32 %v920, %v1146
        %v1179 = vmax.f32 %v921, %v1147
        %v1180 = vmax.f32 %v922, %v1148
        %v1181 = vmax.f32 %v923, %v1149
        %v1182 = vmax.f32 %v924, %v1150
        %v1183 = vmax.f32 %v925, %v1151
        %v1184 = vmax.f32 %v926, %v1152
        %v1185 = vmax.f32 %v927, %v1153
        %v1186 = vmax.f32 %v928, %v1154
        %v1187 = vmax.f32 %v929, %v1155
        %v1188 = vmax.f32 %v930, %v1156
        %v1189 = vmax.f32 %v931, %v1157
        %v1190 = vmax.f32 %v932, %v1158
        %v1191 = vmax.f32 %v933, %v1159
        %v1192 = vmax.f32 %v934, %v1160
        %v1193 = vmax.f32 %v935, %v1161
        %v1194 = vmax.f32 %v936, %v1162
        %v1195 = vmax.f32 %v937, %v1163
        %v1196 = vmax.f32 %v938, %v1164
        %v1197 = vmax.f32 %v939, %v1165
        %v1198 = vmax.f32 %v940, %v1166
        %v1199 = vmax.f32 %v941, %v1167
        %v1200 = vmax.f32 %v942, %v1168
        %v1201 = vmax.f32 %v943, %v1169
        %v1202 = vmax.f32 %v944, %v1170
        %v1203 = vmax.f32 %v945, %v1171
        %v1204 = vmax.f32 %v946, %v1172
        %v1205 = vmax.f32 %v947, %v1173
        %v1206 = vmax.f32 %v948, %v1174
        %v1207 = vmax.f32 %v949, %v1175
        %v1208 = vmax.f32 %v950, %v1176
        %v1209 = vmax.f32 %v1181, %v1177
        %v1210 = vmax.f32 %v1182, %v1178
        %v1211 = vmax.f32 %v1183, %v1179
        %v1212 = vmax.f32 %v1184, %v1180
        %v1213 = vmax.f32 %v1185, %v1181
        %v1214 = vmax.f32 %v1186, %v1182
        %v1215 = vmax.f32 %v1187, %v1183
        %v1216 = vmax.f32 %v1188, %v1184
        %v1217 = vmax.f32 %v1189, %v1185
        %v1218 = vmax.f32 %v1190, %v1186
        %v1219 = vmax.f32 %v1191, %v1187
        %v1220 = vmax.f32 %v1192, %v1188
        %v1221 = vmax.f32 %v1193, %v1189
        %v1222 = vmax.f32 %v1194, %v1190
        %v1223 = vmax.f32 %v1195, %v1191
        %v1224 = vmax.f32 %v1196, %v1192
        %v1225 = vmax.f32 %v1197, %v1193
        %v1226 = vmax.f32 %v1198, %v1194
        %v1227 = vmax.f32 %v1199, %v1195
        %v1228 = vmax.f32 %v1200, %v1196
        %v1229 = vmax.f32 %v1201, %v1197
        %v1230 = vmax.f32 %v1202, %v1198
        %v1231 = vmax.f32 %v1203, %v1199
        %v1232 = vmax.f32 %v1204, %v1200
        %v1233 = vmax.f32 %v1205, %v1201
        %v1234 = vmax.f32 %v1206, %v1202
        %v1235 = vmax.f32 %v1207, %v1203
        %v1236 = vmax.f32 %v1208, %v1204
        %v1237 = vmax.f32 %v1177, %v1179
        %v1238 = vmax.f32 %v1178, %v1180
        %v1239 = vmax.f32 %v1179, %v1209
        %v1240 = vmax.f32 %v1180, %v1210
        %v1241 = vmax.f32 %v1181, %v1211
        %v1242 = vmax.f32 %v1182, %v1212
        %v1243 = vmax.f32 %v1183, %v1213
        %v1244 = vmax.f32 %v1184, %v1214
        %v1245 = vmax.f32 %v1185, %v1215
        %v1246 = vmax.f32 %v1186, %v1216
        %v1247 = vmax.f32 %v1187, %v1217
        %v1248 = vmax.f32 %v1188, %v1218
        %v1249 = vmax.f32 %v1189, %v1219
        %v1250 = vmax.f32 %v1190, %v1220
        %v1251 = vmax.f32 %v1191, %v1221
        %v1252 = vmax.f32 %v1192, %v1222
        %v1253 = vmax.f32 %v1193, %v1223
        %v1254 = vmax.f32 %v1194, %v1224
        %v1255 = vmax.f32 %v1195, %v1225
        %v1256 = vmax.f32 %v1196, %v1226
        %v1257 = vmax.f32 %v1197, %v1227
        %v1258 = vmax.f32 %v1198, %v1228
        %v1259 = vmax.f32 %v1199, %v1229
        %v1260 = vmax.f32 %v1200, %v1230
        %v1261 = vmax.f32 %v1201, %v1231
        %v1262 = vmax.f32 %v1202, %v1232
        %v1263 = vmax.f32 %v1203, %v1233
        %v1264 = vmax.f32 %v1204, %v1234
        %v1265 = vmax.f32 %v1205, %v1235
        %v1266 = vmax.f32 %v1206, %v1236
        %v1267 = vmax.f32 %v1207, %v1205
        %v1268 = vmax.f32 %v1208, %v1206
        %v1269 = vmax.f32 %v1185, %v1177
        %v1270 = vmax.f32 %v1186, %v1178
        %v1271 = vmax.f32 %v1187, %v1179
        %v1272 = vmax.f32 %v1188, %v1180
        %v1273 = vmax.f32 %v1189, %v1181
        %v1274 = vmax.f32 %v1190, %v1182
        %v1275 = vmax.f32 %v1191, %v1183
        %v1276 = vmax.f32 %v1192, %v1184
        %v1277 = vmax.f32 %v1193, %v1185
        %v1278 = vmax.f32 %v1194, %v1186
        %v1279 = vmax.f32 %v1195, %v1187
        %v1280 = vmax.f32 %v1196, %v1188
        %v1281 = vmax.f32 %v1197, %v1189
        %v1282 = vmax.f32 %v1198, %v1190
        %v1283 = vmax.f32 %v1199, %v1191
        %v1284 = vmax.f32 %v1200, %v1192
        %v1285 = vmax.f32 %v1201, %v1193
        %v1286 = vmax.f32 %v1202, %v1194
        %v1287 = vmax.f32 %v1203, %v1195
        %v1288 = vmax.f32 %v1204, %v1196
        %v1289 = vmax.f32 %v1205, %v1197
        %v1290 = vmax.f32 %v1206, %v1198
        %v1291 = vmax.f32 %v1207, %v1199
        %v1292 = vmax.f32 %v1208, %v1200
        %v1293 = vmax.f32 %v1237, %v1181
        %v1294 = vmax.f32 %v1238, %v1182
        %v1295 = vmax.f32 %v1239, %v1183
        %v1296 = vmax.f32 %v1240, %v1184
        %v1297 = vmax.f32 %v1241, %v1269
        %v1298 = vmax.f32 %v1242, %v1270
        %v1299 = vmax.f32 %v1243, %v1271
        %v1300 = vmax.f32 %v1244, %v1272
        %v1301 = vmax.f32 %v1245, %v1273
        %v1302 = vmax.f32 %v1246, %v1274
        %v1303 = vmax.f32 %v1247, %v1275
        %v1304 = vmax.f32 %v1248, %v1276
        %v1305 = vmax.f32 %v1249, %v1277
        %v1306 = vmax.f32 %v1250, %v1278
        %v1307 = vmax.f32 %v1251, %v1279
        %v1308 = vmax.f32 %v1252, %v1280
        %v1309 = vmax.f32 %v1253, %v1281
        %v1310 = vmax.f32 %v1254, %v1282
        %v1311 = vmax.f32 %v1255, %v1283
        %v1312 = vmax.f32 %v1256, %v1284
        %v1313 = vmax.f32 %v1257, %v1285
        %v1314 = vmax.f32 %v1258, %v1286
        %v1315 = vmax.f32 %v1259, %v1287
        %v1316 = vmax.f32 %v1260, %v1288
        %v1317 = vmax.f32 %v1261, %v1289
        %v1318 = vmax.f32 %v1262, %v1290
        %v1319 = vmax.f32 %v1263, %v1291
        %v1320 = vmax.f32 %v1264, %v1292
        %v1321 = vmax.f32 %v1265, %v1201
        %v1322 = vmax.f32 %v1266, %v1202
        %v1323 = vmax.f32 %v1267, %v1203
        %v1324 = vmax.f32 %v1268, %v1204
        %v1357 = vrot.slane %v1293, 1
        %v1358 = vrot.slane %v1294, 1
        %v1359 = vsel %vm693, %v1357, %v1358
        %v1360 = vrot.slane %v1295, 1
        %v1361 = vrot.slane %v1296, 1
        %v1362 = vsel %vm693, %v1360, %v1361
        %v1363 = vrot.slane %v1297, 1
        %v1364 = vrot.slane %v1298, 1
        %v1365 = vsel %vm693, %v1363, %v1364
        %v1366 = vrot.slane %v1299, 1
        %v1367 = vrot.slane %v1300, 1
        %v1368 = vsel %vm693, %v1366, %v1367
        %v1369 = vrot.slane %v1301, 1
        %v1370 = vrot.slane %v1302, 1
        %v1371 = vsel %vm693, %v1369, %v1370
        %v1372 = vrot.slane %v1303, 1
        %v1373 = vrot.slane %v1304, 1
        %v1374 = vsel %vm693, %v1372, %v1373
        %v1375 = vrot.slane %v1305, 1
        %v1376 = vrot.slane %v1306, 1
        %v1377 = vsel %vm693, %v1375, %v1376
        %v1378 = vrot.slane %v1307, 1
        %v1379 = vrot.slane %v1308, 1
        %v1380 = vsel %vm693, %v1378, %v1379
        %v1381 = vrot.slane %v1309, 1
        %v1382 = vrot.slane %v1310, 1
        %v1383 = vsel %vm693, %v1381, %v1382
        %v1384 = vrot.slane %v1311, 1
        %v1385 = vrot.slane %v1312, 1
        %v1386 = vsel %vm693, %v1384, %v1385
        %v1387 = vrot.slane %v1313, 1
        %v1388 = vrot.slane %v1314, 1
        %v1389 = vsel %vm693, %v1387, %v1388
        %v1390 = vrot.slane %v1315, 1
        %v1391 = vrot.slane %v1316, 1
        %v1392 = vsel %vm693, %v1390, %v1391
        %v1393 = vrot.slane %v1317, 1
        %v1394 = vrot.slane %v1318, 1
        %v1395 = vsel %vm693, %v1393, %v1394
        %v1396 = vrot.slane %v1319, 1
        %v1397 = vrot.slane %v1320, 1
        %v1398 = vsel %vm693, %v1396, %v1397
        %v1399 = vrot.slane %v1321, 1
        %v1400 = vrot.slane %v1322, 1
        %v1401 = vsel %vm693, %v1399, %v1400
        %v1402 = vrot.slane %v1323, 1
        %v1403 = vrot.slane %v1324, 1
        %v1404 = vsel %vm693, %v1402, %v1403
        %v1437 = vsel %vm693, %v1358, -inf
        %v1438 = vsel %vm693, %v1361, -inf
        %v1439 = vsel %vm693, %v1364, -inf
        %v1440 = vsel %vm693, %v1367, -inf
        %v1441 = vsel %vm693, %v1370, -inf
        %v1442 = vsel %vm693, %v1373, -inf
        %v1443 = vsel %vm693, %v1376, -inf
        %v1444 = vsel %vm693, %v1379, -inf
        %v1445 = vsel %vm693, %v1382, -inf
        %v1446 = vsel %vm693, %v1385, -inf
        %v1447 = vsel %vm693, %v1388, -inf
        %v1448 = vsel %vm693, %v1391, -inf
        %v1449 = vsel %vm693, %v1394, -inf
        %v1450 = vsel %vm693, %v1397, -inf
        %v1451 = vsel %vm693, %v1400, -inf
        %v1452 = vsel %vm693, %v1403, -inf
        %v1453 = vrot.slane %v1293, 7
        %v1454 = vrot.slane %v1294, 7
        %v1455 = vsel %vm790, %v1453, %v1454
        %v1456 = vrot.slane %v1295, 7
        %v1457 = vrot.slane %v1296, 7
        %v1458 = vsel %vm790, %v1456, %v1457
        %v1459 = vrot.slane %v1297, 7
        %v1460 = vrot.slane %v1298, 7
        %v1461 = vsel %vm790, %v1459, %v1460
        %v1462 = vrot.slane %v1299, 7
        %v1463 = vrot.slane %v1300, 7
        %v1464 = vsel %vm790, %v1462, %v1463
        %v1465 = vrot.slane %v1301, 7
        %v1466 = vrot.slane %v1302, 7
        %v1467 = vsel %vm790, %v1465, %v1466
        %v1468 = vrot.slane %v1303, 7
        %v1469 = vrot.slane %v1304, 7
        %v1470 = vsel %vm790, %v1468, %v1469
        %v1471 = vrot.slane %v1305, 7
        %v1472 = vrot.slane %v1306, 7
        %v1473 = vsel %vm790, %v1471, %v1472
        %v1474 = vrot.slane %v1307, 7
        %v1475 = vrot.slane %v1308, 7
        %v1476 = vsel %vm790, %v1474, %v1475
        %v1477 = vrot.slane %v1309, 7
        %v1478 = vrot.slane %v1310, 7
        %v1479 = vsel %vm790, %v1477, %v1478
        %v1480 = vrot.slane %v1311, 7
        %v1481 = vrot.slane %v1312, 7
        %v1482 = vsel %vm790, %v1480, %v1481
        %v1483 = vrot.slane %v1313, 7
        %v1484 = vrot.slane %v1314, 7
        %v1485 = vsel %vm790, %v1483, %v1484
        %v1486 = vrot.slane %v1315, 7
        %v1487 = vrot.slane %v1316, 7
        %v1488 = vsel %vm790, %v1486, %v1487
        %v1489 = vrot.slane %v1317, 7
        %v1490 = vrot.slane %v1318, 7
        %v1491 = vsel %vm790, %v1489, %v1490
        %v1492 = vrot.slane %v1319, 7
        %v1493 = vrot.slane %v1320, 7
        %v1494 = vsel %vm790, %v1492, %v1493
        %v1495 = vrot.slane %v1321, 7
        %v1496 = vrot.slane %v1322, 7
        %v1497 = vsel %vm790, %v1495, %v1496
        %v1498 = vrot.slane %v1323, 7
        %v1499 = vrot.slane %v1324, 7
        %v1500 = vsel %vm790, %v1498, %v1499
        %v1533 = vsel %vm790, -inf, %v1453
        %v1534 = vsel %vm790, -inf, %v1456
        %v1535 = vsel %vm790, -inf, %v1459
        %v1536 = vsel %vm790, -inf, %v1462
        %v1537 = vsel %vm790, -inf, %v1465
        %v1538 = vsel %vm790, -inf, %v1468
        %v1539 = vsel %vm790, -inf, %v1471
        %v1540 = vsel %vm790, -inf, %v1474
        %v1541 = vsel %vm790, -inf, %v1477
        %v1542 = vsel %vm790, -inf, %v1480
        %v1543 = vsel %vm790, -inf, %v1483
        %v1544 = vsel %vm790, -inf, %v1486
        %v1545 = vsel %vm790, -inf, %v1489
        %v1546 = vsel %vm790, -inf, %v1492
        %v1547 = vsel %vm790, -inf, %v1495
        %v1548 = vsel %vm790, -inf, %v1498
        %v1549 = vmax.f32 %v1359, %v1533
        %v1550 = vmax.f32 %v1437, %v1455
        %v1551 = vmax.f32 %v1362, %v1534
        %v1552 = vmax.f32 %v1438, %v1458
        %v1553 = vmax.f32 %v1365, %v1535
        %v1554 = vmax.f32 %v1439, %v1461
        %v1555 = vmax.f32 %v1368, %v1536
        %v1556 = vmax.f32 %v1440, %v1464
        %v1557 = vmax.f32 %v1371, %v1537
        %v1558 = vmax.f32 %v1441, %v1467
        %v1559 = vmax.f32 %v1374, %v1538
        %v1560 = vmax.f32 %v1442, %v1470
        %v1561 = vmax.f32 %v1377, %v1539
        %v1562 = vmax.f32 %v1443, %v1473
        %v1563 = vmax.f32 %v1380, %v1540
        %v1564 = vmax.f32 %v1444, %v1476
        %v1565 = vmax.f32 %v1383, %v1541
        %v1566 = vmax.f32 %v1445, %v1479
        %v1567 = vmax.f32 %v1386, %v1542
        %v1568 = vmax.f32 %v1446, %v1482
        %v1569 = vmax.f32 %v1389, %v1543
        %v1570 = vmax.f32 %v1447, %v1485
        %v1571 = vmax.f32 %v1392, %v1544
        %v1572 = vmax.f32 %v1448, %v1488
        %v1573 = vmax.f32 %v1395, %v1545
        %v1574 = vmax.f32 %v1449, %v1491
        %v1575 = vmax.f32 %v1398, %v1546
        %v1576 = vmax.f32 %v1450, %v1494
        %v1577 = vmax.f32 %v1401, %v1547
        %v1578 = vmax.f32 %v1451, %v1497
        %v1579 = vmax.f32 %v1404, %v1548
        %v1580 = vmax.f32 %v1452, %v1500
        %v1581 = vmax.f32 %v1293, %v1549
        %v1582 = vmax.f32 %v1294, %v1550
        %v1583 = vmax.f32 %v1295, %v1551
        %v1584 = vmax.f32 %v1296, %v1552
        %v1585 = vmax.f32 %v1297, %v1553
        %v1586 = vmax.f32 %v1298, %v1554
        %v1587 = vmax.f32 %v1299, %v1555
        %v1588 = vmax.f32 %v1300, %v1556
        %v1589 = vmax.f32 %v1301, %v1557
        %v1590 = vmax.f32 %v1302, %v1558
        %v1591 = vmax.f32 %v1303, %v1559
        %v1592 = vmax.f32 %v1304, %v1560
        %v1593 = vmax.f32 %v1305, %v1561
        %v1594 = vmax.f32 %v1306, %v1562
        %v1595 = vmax.f32 %v1307, %v1563
        %v1596 = vmax.f32 %v1308, %v1564
        %v1597 = vmax.f32 %v1309, %v1565
        %v1598 = vmax.f32 %v1310, %v1566
        %v1599 = vmax.f32 %v1311, %v1567
        %v1600 = vmax.f32 %v1312, %v1568
        %v1601 = vmax.f32 %v1313, %v1569
        %v1602 = vmax.f32 %v1314, %v1570
        %v1603 = vmax.f32 %v1315, %v1571
        %v1604 = vmax.f32 %v1316, %v1572
        %v1605 = vmax.f32 %v1317, %v1573
        %v1606 = vmax.f32 %v1318, %v1574
        %v1607 = vmax.f32 %v1319, %v1575
        %v1608 = vmax.f32 %v1320, %v1576
        %v1609 = vmax.f32 %v1321, %v1577
        %v1610 = vmax.f32 %v1322, %v1578
        %v1611 = vmax.f32 %v1323, %v1579
        %v1612 = vmax.f32 %v1324, %v1580
        %v1613 = vrot.slane %v1293, 2
        %v1614 = vrot.slane %v1294, 2
        %v1615 = vsel %vm951, %v1613, %v1614
        %v1616 = vrot.slane %v1295, 2
        %v1617 = vrot.slane %v1296, 2
        %v1618 = vsel %vm951, %v1616, %v1617
        %v1619 = vrot.slane %v1297, 2
        %v1620 = vrot.slane %v1298, 2
        %v1621 = vsel %vm951, %v1619, %v1620
        %v1622 = vrot.slane %v1299, 2
        %v1623 = vrot.slane %v1300, 2
        %v1624 = vsel %vm951, %v1622, %v1623
        %v1625 = vrot.slane %v1301, 2
        %v1626 = vrot.slane %v1302, 2
        %v1627 = vsel %vm951, %v1625, %v1626
        %v1628 = vrot.slane %v1303, 2
        %v1629 = vrot.slane %v1304, 2
        %v1630 = vsel %vm951, %v1628, %v1629
        %v1631 = vrot.slane %v1305, 2
        %v1632 = vrot.slane %v1306, 2
        %v1633 = vsel %vm951, %v1631, %v1632
        %v1634 = vrot.slane %v1307, 2
        %v1635 = vrot.slane %v1308, 2
        %v1636 = vsel %vm951, %v1634, %v1635
        %v1637 = vrot.slane %v1309, 2
        %v1638 = vrot.slane %v1310, 2
        %v1639 = vsel %vm951, %v1637, %v1638
        %v1640 = vrot.slane %v1311, 2
        %v1641 = vrot.slane %v1312, 2
        %v1642 = vsel %vm951, %v1640, %v1641
        %v1643 = vrot.slane %v1313, 2
        %v1644 = vrot.slane %v1314, 2
        %v1645 = vsel %vm951, %v1643, %v1644
        %v1646 = vrot.slane %v1315, 2
        %v1647 = vrot.slane %v1316, 2
        %v1648 = vsel %vm951, %v1646, %v1647
        %v1649 = vrot.slane %v1317, 2
        %v1650 = vrot.slane %v1318, 2
        %v1651 = vsel %vm951, %v1649, %v1650
        %v1652 = vrot.slane %v1319, 2
        %v1653 = vrot.slane %v1320, 2
        %v1654 = vsel %vm951, %v1652, %v1653
        %v1655 = vrot.slane %v1321, 2
        %v1656 = vrot.slane %v1322, 2
        %v1657 = vsel %vm951, %v1655, %v1656
        %v1658 = vrot.slane %v1323, 2
        %v1659 = vrot.slane %v1324, 2
        %v1660 = vsel %vm951, %v1658, %v1659
        %v1693 = vsel %vm951, %v1614, -inf
        %v1694 = vsel %vm951, %v1617, -inf
        %v1695 = vsel %vm951, %v1620, -inf
        %v1696 = vsel %vm951, %v1623, -inf
        %v1697 = vsel %vm951, %v1626, -inf
        %v1698 = vsel %vm951, %v1629, -inf
        %v1699 = vsel %vm951, %v1632, -inf
        %v1700 = vsel %vm951, %v1635, -inf
        %v1701 = vsel %vm951, %v1638, -inf
        %v1702 = vsel %vm951, %v1641, -inf
        %v1703 = vsel %vm951, %v1644, -inf
        %v1704 = vsel %vm951, %v1647, -inf
        %v1705 = vsel %vm951, %v1650, -inf
        %v1706 = vsel %vm951, %v1653, -inf
        %v1707 = vsel %vm951, %v1656, -inf
        %v1708 = vsel %vm951, %v1659, -inf
        %v1709 = vrot.slane %v1293, 6
        %v1710 = vrot.slane %v1294, 6
        %v1711 = vsel %vm1048, %v1709, %v1710
        %v1712 = vrot.slane %v1295, 6
        %v1713 = vrot.slane %v1296, 6
        %v1714 = vsel %vm1048, %v1712, %v1713
        %v1715 = vrot.slane %v1297, 6
        %v1716 = vrot.slane %v1298, 6
        %v1717 = vsel %vm1048, %v1715, %v1716
        %v1718 = vrot.slane %v1299, 6
        %v1719 = vrot.slane %v1300, 6
        %v1720 = vsel %vm1048, %v1718, %v1719
        %v1721 = vrot.slane %v1301, 6
        %v1722 = vrot.slane %v1302, 6
        %v1723 = vsel %vm1048, %v1721, %v1722
        %v1724 = vrot.slane %v1303, 6
        %v1725 = vrot.slane %v1304, 6
        %v1726 = vsel %vm1048, %v1724, %v1725
        %v1727 = vrot.slane %v1305, 6
        %v1728 = vrot.slane %v1306, 6
        %v1729 = vsel %vm1048, %v1727, %v1728
        %v1730 = vrot.slane %v1307, 6
        %v1731 = vrot.slane %v1308, 6
        %v1732 = vsel %vm1048, %v1730, %v1731
        %v1733 = vrot.slane %v1309, 6
        %v1734 = vrot.slane %v1310, 6
        %v1735 = vsel %vm1048, %v1733, %v1734
        %v1736 = vrot.slane %v1311, 6
        %v1737 = vrot.slane %v1312, 6
        %v1738 = vsel %vm1048, %v1736, %v1737
        %v1739 = vrot.slane %v1313, 6
        %v1740 = vrot.slane %v1314, 6
        %v1741 = vsel %vm1048, %v1739, %v1740
        %v1742 = vrot.slane %v1315, 6
        %v1743 = vrot.slane %v1316, 6
        %v1744 = vsel %vm1048, %v1742, %v1743
        %v1745 = vrot.slane %v1317, 6
        %v1746 = vrot.slane %v1318, 6
        %v1747 = vsel %vm1048, %v1745, %v1746
        %v1748 = vrot.slane %v1319, 6
        %v1749 = vrot.slane %v1320, 6
        %v1750 = vsel %vm1048, %v1748, %v1749
        %v1751 = vrot.slane %v1321, 6
        %v1752 = vrot.slane %v1322, 6
        %v1753 = vsel %vm1048, %v1751, %v1752
        %v1754 = vrot.slane %v1323, 6
        %v1755 = vrot.slane %v1324, 6
        %v1756 = vsel %vm1048, %v1754, %v1755
        %v1789 = vsel %vm1048, -inf, %v1709
        %v1790 = vsel %vm1048, -inf, %v1712
        %v1791 = vsel %vm1048, -inf, %v1715
        %v1792 = vsel %vm1048, -inf, %v1718
        %v1793 = vsel %vm1048, -inf, %v1721
        %v1794 = vsel %vm1048, -inf, %v1724
        %v1795 = vsel %vm1048, -inf, %v1727
        %v1796 = vsel %vm1048, -inf, %v1730
        %v1797 = vsel %vm1048, -inf, %v1733
        %v1798 = vsel %vm1048, -inf, %v1736
        %v1799 = vsel %vm1048, -inf, %v1739
        %v1800 = vsel %vm1048, -inf, %v1742
        %v1801 = vsel %vm1048, -inf, %v1745
        %v1802 = vsel %vm1048, -inf, %v1748
        %v1803 = vsel %vm1048, -inf, %v1751
        %v1804 = vsel %vm1048, -inf, %v1754
        %v1805 = vmax.f32 %v1615, %v1789
        %v1806 = vmax.f32 %v1693, %v1711
        %v1807 = vmax.f32 %v1618, %v1790
        %v1808 = vmax.f32 %v1694, %v1714
        %v1809 = vmax.f32 %v1621, %v1791
        %v1810 = vmax.f32 %v1695, %v1717
        %v1811 = vmax.f32 %v1624, %v1792
        %v1812 = vmax.f32 %v1696, %v1720
        %v1813 = vmax.f32 %v1627, %v1793
        %v1814 = vmax.f32 %v1697, %v1723
        %v1815 = vmax.f32 %v1630, %v1794
        %v1816 = vmax.f32 %v1698, %v1726
        %v1817 = vmax.f32 %v1633, %v1795
        %v1818 = vmax.f32 %v1699, %v1729
        %v1819 = vmax.f32 %v1636, %v1796
        %v1820 = vmax.f32 %v1700, %v1732
        %v1821 = vmax.f32 %v1639, %v1797
        %v1822 = vmax.f32 %v1701, %v1735
        %v1823 = vmax.f32 %v1642, %v1798
        %v1824 = vmax.f32 %v1702, %v1738
        %v1825 = vmax.f32 %v1645, %v1799
        %v1826 = vmax.f32 %v1703, %v1741
        %v1827 = vmax.f32 %v1648, %v1800
        %v1828 = vmax.f32 %v1704, %v1744
        %v1829 = vmax.f32 %v1651, %v1801
        %v1830 = vmax.f32 %v1705, %v1747
        %v1831 = vmax.f32 %v1654, %v1802
        %v1832 = vmax.f32 %v1706, %v1750
        %v1833 = vmax.f32 %v1657, %v1803
        %v1834 = vmax.f32 %v1707, %v1753
        %v1835 = vmax.f32 %v1660, %v1804
        %v1836 = vmax.f32 %v1708, %v1756
        %v1837 = vmax.f32 %v1581, %v1805
        %v1838 = vmax.f32 %v1582, %v1806
        %v1839 = vmax.f32 %v1583, %v1807
        %v1840 = vmax.f32 %v1584, %v1808
        %v1841 = vmax.f32 %v1585, %v1809
        %v1842 = vmax.f32 %v1586, %v1810
        %v1843 = vmax.f32 %v1587, %v1811
        %v1844 = vmax.f32 %v1588, %v1812
        %v1845 = vmax.f32 %v1589, %v1813
        %v1846 = vmax.f32 %v1590, %v1814
        %v1847 = vmax.f32 %v1591, %v1815
        %v1848 = vmax.f32 %v1592, %v1816
        %v1849 = vmax.f32 %v1593, %v1817
        %v1850 = vmax.f32 %v1594, %v1818
        %v1851 = vmax.f32 %v1595, %v1819
        %v1852 = vmax.f32 %v1596, %v1820
        %v1853 = vmax.f32 %v1597, %v1821
        %v1854 = vmax.f32 %v1598, %v1822
        %v1855 = vmax.f32 %v1599, %v1823
        %v1856 = vmax.f32 %v1600, %v1824
        %v1857 = vmax.f32 %v1601, %v1825
        %v1858 = vmax.f32 %v1602, %v1826
        %v1859 = vmax.f32 %v1603, %v1827
        %v1860 = vmax.f32 %v1604, %v1828
        %v1861 = vmax.f32 %v1605, %v1829
        %v1862 = vmax.f32 %v1606, %v1830
        %v1863 = vmax.f32 %v1607, %v1831
        %v1864 = vmax.f32 %v1608, %v1832
        %v1865 = vmax.f32 %v1609, %v1833
        %v1866 = vmax.f32 %v1610, %v1834
        %v1867 = vmax.f32 %v1611, %v1835
        %v1868 = vmax.f32 %v1612, %v1836
        %v1869 = vmax.f32 %v1841, %v1837
        %v1870 = vmax.f32 %v1842, %v1838
        %v1871 = vmax.f32 %v1843, %v1839
        %v1872 = vmax.f32 %v1844, %v1840
        %v1873 = vmax.f32 %v1845, %v1841
        %v1874 = vmax.f32 %v1846, %v1842
        %v1875 = vmax.f32 %v1847, %v1843
        %v1876 = vmax.f32 %v1848, %v1844
        %v1877 = vmax.f32 %v1849, %v1845
        %v1878 = vmax.f32 %v1850, %v1846
        %v1879 = vmax.f32 %v1851, %v1847
        %v1880 = vmax.f32 %v1852, %v1848
        %v1881 = vmax.f32 %v1853, %v1849
        %v1882 = vmax.f32 %v1854, %v1850
        %v1883 = vmax.f32 %v1855, %v1851
        %v1884 = vmax.f32 %v1856, %v1852
        %v1885 = vmax.f32 %v1857, %v1853
        %v1886 = vmax.f32 %v1858, %v1854
        %v1887 = vmax.f32 %v1859, %v1855
        %v1888 = vmax.f32 %v1860, %v1856
        %v1889 = vmax.f32 %v1861, %v1857
        %v1890 = vmax.f32 %v1862, %v1858
        %v1891 = vmax.f32 %v1863, %v1859
        %v1892 = vmax.f32 %v1864, %v1860
        %v1893 = vmax.f32 %v1865, %v1861
        %v1894 = vmax.f32 %v1866, %v1862
        %v1895 = vmax.f32 %v1867, %v1863
        %v1896 = vmax.f32 %v1868, %v1864
        %v1897 = vmax.f32 %v1837, %v1839
        %v1898 = vmax.f32 %v1838, %v1840
        %v1899 = vmax.f32 %v1839, %v1869
        %v1900 = vmax.f32 %v1840, %v1870
        %v1901 = vmax.f32 %v1841, %v1871
        %v1902 = vmax.f32 %v1842, %v1872
        %v1903 = vmax.f32 %v1843, %v1873
        %v1904 = vmax.f32 %v1844, %v1874
        %v1905 = vmax.f32 %v1845, %v1875
        %v1906 = vmax.f32 %v1846, %v1876
        %v1907 = vmax.f32 %v1847, %v1877
        %v1908 = vmax.f32 %v1848, %v1878
        %v1909 = vmax.f32 %v1849, %v1879
        %v1910 = vmax.f32 %v1850, %v1880
        %v1911 = vmax.f32 %v1851, %v1881
        %v1912 = vmax.f32 %v1852, %v1882
        %v1913 = vmax.f32 %v1853, %v1883
        %v1914 = vmax.f32 %v1854, %v1884
        %v1915 = vmax.f32 %v1855, %v1885
        %v1916 = vmax.f32 %v1856, %v1886
        %v1917 = vmax.f32 %v1857, %v1887
        %v1918 = vmax.f32 %v1858, %v1888
        %v1919 = vmax.f32 %v1859, %v1889
        %v1920 = vmax.f32 %v1860, %v1890
        %v1921 = vmax.f32 %v1861, %v1891
        %v1922 = vmax.f32 %v1862, %v1892
        %v1923 = vmax.f32 %v1863, %v1893
        %v1924 = vmax.f32 %v1864, %v1894
        %v1925 = vmax.f32 %v1865, %v1895
        %v1926 = vmax.f32 %v1866, %v1896
        %v1927 = vmax.f32 %v1867, %v1865
        %v1928 = vmax.f32 %v1868, %v1866
        %v1929 = vmax.f32 %v1845, %v1837
        %v1930 = vmax.f32 %v1846, %v1838
        %v1931 = vmax.f32 %v1847, %v1839
        %v1932 = vmax.f32 %v1848, %v1840
        %v1933 = vmax.f32 %v1849, %v1841
        %v1934 = vmax.f32 %v1850, %v1842
        %v1935 = vmax.f32 %v1851, %v1843
        %v1936 = vmax.f32 %v1852, %v1844
        %v1937 = vmax.f32 %v1853, %v1845
        %v1938 = vmax.f32 %v1854, %v1846
        %v1939 = vmax.f32 %v1855, %v1847
        %v1940 = vmax.f32 %v1856, %v1848
        %v1941 = vmax.f32 %v1857, %v1849
        %v1942 = vmax.f32 %v1858, %v1850
        %v1943 = vmax.f32 %v1859, %v1851
        %v1944 = vmax.f32 %v1860, %v1852
        %v1945 = vmax.f32 %v1861, %v1853
        %v1946 = vmax.f32 %v1862, %v1854
        %v1947 = vmax.f32 %v1863, %v1855
        %v1948 = vmax.f32 %v1864, %v1856
        %v1949 = vmax.f32 %v1865, %v1857
        %v1950 = vmax.f32 %v1866, %v1858
        %v1951 = vmax.f32 %v1867, %v1859
        %v1952 = vmax.f32 %v1868, %v1860
        %v1953 = vmax.f32 %v1897, %v1841
        %v1954 = vmax.f32 %v1898, %v1842
        %v1955 = vmax.f32 %v1899, %v1843
        %v1956 = vmax.f32 %v1900, %v1844
        %v1957 = vmax.f32 %v1901, %v1929
        %v1958 = vmax.f32 %v1902, %v1930
        %v1959 = vmax.f32 %v1903, %v1931
        %v1960 = vmax.f32 %v1904, %v1932
        %v1961 = vmax.f32 %v1905, %v1933
        %v1962 = vmax.f32 %v1906, %v1934
        %v1963 = vmax.f32 %v1907, %v1935
        %v1964 = vmax.f32 %v1908, %v1936
        %v1965 = vmax.f32 %v1909, %v1937
        %v1966 = vmax.f32 %v1910, %v1938
        %v1967 = vmax.f32 %v1911, %v1939
        %v1968 = vmax.f32 %v1912, %v1940
        %v1969 = vmax.f32 %v1913, %v1941
        %v1970 = vmax.f32 %v1914, %v1942
        %v1971 = vmax.f32 %v1915, %v1943
        %v1972 = vmax.f32 %v1916, %v1944
        %v1973 = vmax.f32 %v1917, %v1945
        %v1974 = vmax.f32 %v1918, %v1946
        %v1975 = vmax.f32 %v1919, %v1947
        %v1976 = vmax.f32 %v1920, %v1948
        %v1977 = vmax.f32 %v1921, %v1949
        %v1978 = vmax.f32 %v1922, %v1950
        %v1979 = vmax.f32 %v1923, %v1951
        %v1980 = vmax.f32 %v1924, %v1952
        %v1981 = vmax.f32 %v1925, %v1861
        %v1982 = vmax.f32 %v1926, %v1862
        %v1983 = vmax.f32 %v1927, %v1863
        %v1984 = vmax.f32 %v1928, %v1864
        %v2017 = vrot.slane %v1953, 1
        %v2018 = vrot.slane %v1954, 1
        %v2019 = vsel %vm693, %v2017, %v2018
        %v2020 = vrot.slane %v1955, 1
        %v2021 = vrot.slane %v1956, 1
        %v2022 = vsel %vm693, %v2020, %v2021
        %v2023 = vrot.slane %v1957, 1
        %v2024 = vrot.slane %v1958, 1
        %v2025 = vsel %vm693, %v2023, %v2024
        %v2026 = vrot.slane %v1959, 1
        %v2027 = vrot.slane %v1960, 1
        %v2028 = vsel %vm693, %v2026, %v2027
        %v2029 = vrot.slane %v1961, 1
        %v2030 = vrot.slane %v1962, 1
        %v2031 = vsel %vm693, %v2029, %v2030
        %v2032 = vrot.slane %v1963, 1
        %v2033 = vrot.slane %v1964, 1
        %v2034 = vsel %vm693, %v2032, %v2033
        %v2035 = vrot.slane %v1965, 1
        %v2036 = vrot.slane %v1966, 1
        %v2037 = vsel %vm693, %v2035, %v2036
        %v2038 = vrot.slane %v1967, 1
        %v2039 = vrot.slane %v1968, 1
        %v2040 = vsel %vm693, %v2038, %v2039
        %v2041 = vrot.slane %v1969, 1
        %v2042 = vrot.slane %v1970, 1
        %v2043 = vsel %vm693, %v2041, %v2042
        %v2044 = vrot.slane %v1971, 1
        %v2045 = vrot.slane %v1972, 1
        %v2046 = vsel %vm693, %v2044, %v2045
        %v2047 = vrot.slane %v1973, 1
        %v2048 = vrot.slane %v1974, 1
        %v2049 = vsel %vm693, %v2047, %v2048
        %v2050 = vrot.slane %v1975, 1
        %v2051 = vrot.slane %v1976, 1
        %v2052 = vsel %vm693, %v2050, %v2051
        %v2053 = vrot.slane %v1977, 1
        %v2054 = vrot.slane %v1978, 1
        %v2055 = vsel %vm693, %v2053, %v2054
        %v2056 = vrot.slane %v1979, 1
        %v2057 = vrot.slane %v1980, 1
        %v2058 = vsel %vm693, %v2056, %v2057
        %v2059 = vrot.slane %v1981, 1
        %v2060 = vrot.slane %v1982, 1
        %v2061 = vsel %vm693, %v2059, %v2060
        %v2062 = vrot.slane %v1983, 1
        %v2063 = vrot.slane %v1984, 1
        %v2064 = vsel %vm693, %v2062, %v2063
        %v2097 = vsel %vm693, %v2018, -inf
        %v2098 = vsel %vm693, %v2021, -inf
        %v2099 = vsel %vm693, %v2024, -inf
        %v2100 = vsel %vm693, %v2027, -inf
        %v2101 = vsel %vm693, %v2030, -inf
        %v2102 = vsel %vm693, %v2033, -inf
        %v2103 = vsel %vm693, %v2036, -inf
        %v2104 = vsel %vm693, %v2039, -inf
        %v2105 = vsel %vm693, %v2042, -inf
        %v2106 = vsel %vm693, %v2045, -inf
        %v2107 = vsel %vm693, %v2048, -inf
        %v2108 = vsel %vm693, %v2051, -inf
        %v2109 = vsel %vm693, %v2054, -inf
        %v2110 = vsel %vm693, %v2057, -inf
        %v2111 = vsel %vm693, %v2060, -inf
        %v2112 = vsel %vm693, %v2063, -inf
        %v2113 = vrot.slane %v1953, 7
        %v2114 = vrot.slane %v1954, 7
        %v2115 = vsel %vm790, %v2113, %v2114
        %v2116 = vrot.slane %v1955, 7
        %v2117 = vrot.slane %v1956, 7
        %v2118 = vsel %vm790, %v2116, %v2117
        %v2119 = vrot.slane %v1957, 7
        %v2120 = vrot.slane %v1958, 7
        %v2121 = vsel %vm790, %v2119, %v2120
        %v2122 = vrot.slane %v1959, 7
        %v2123 = vrot.slane %v1960, 7
        %v2124 = vsel %vm790, %v2122, %v2123
        %v2125 = vrot.slane %v1961, 7
        %v2126 = vrot.slane %v1962, 7
        %v2127 = vsel %vm790, %v2125, %v2126
        %v2128 = vrot.slane %v1963, 7
        %v2129 = vrot.slane %v1964, 7
        %v2130 = vsel %vm790, %v2128, %v2129
        %v2131 = vrot.slane %v1965, 7
        %v2132 = vrot.slane %v1966, 7
        %v2133 = vsel %vm790, %v2131, %v2132
        %v2134 = vrot.slane %v1967, 7
        %v2135 = vrot.slane %v1968, 7
        %v2136 = vsel %vm790, %v2134, %v2135
        %v2137 = vrot.slane %v1969, 7
        %v2138 = vrot.slane %v1970, 7
        %v2139 = vsel %vm790, %v2137, %v2138
        %v2140 = vrot.slane %v1971, 7
        %v2141 = vrot.slane %v1972, 7
        %v2142 = vsel %vm790, %v2140, %v2141
        %v2143 = vrot.slane %v1973, 7
        %v2144 = vrot.slane %v1974, 7
        %v2145 = vsel %vm790, %v2143, %v2144
        %v2146 = vrot.slane %v1975, 7
        %v2147 = vrot.slane %v1976, 7
        %v2148 = vsel %vm790, %v2146, %v2147
        %v2149 = vrot.slane %v1977, 7
        %v2150 = vrot.slane %v1978, 7
        %v2151 = vsel %vm790, %v2149, %v2150
        %v2152 = vrot.slane %v1979, 7
        %v2153 = vrot.slane %v1980, 7
        %v2154 = vsel %vm790, %v2152, %v2153
        %v2155 = vrot.slane %v1981, 7
        %v2156 = vrot.slane %v1982, 7
        %v2157 = vsel %vm790, %v2155, %v2156
        %v2158 = vrot.slane %v1983, 7
        %v2159 = vrot.slane %v1984, 7
        %v2160 = vsel %vm790, %v2158, %v2159
        %v2193 = vsel %vm790, -inf, %v2113
        %v2194 = vsel %vm790, -inf, %v2116
        %v2195 = vsel %vm790, -inf, %v2119
        %v2196 = vsel %vm790, -inf, %v2122
        %v2197 = vsel %vm790, -inf, %v2125
        %v2198 = vsel %vm790, -inf, %v2128
        %v2199 = vsel %vm790, -inf, %v2131
        %v2200 = vsel %vm790, -inf, %v2134
        %v2201 = vsel %vm790, -inf, %v2137
        %v2202 = vsel %vm790, -inf, %v2140
        %v2203 = vsel %vm790, -inf, %v2143
        %v2204 = vsel %vm790, -inf, %v2146
        %v2205 = vsel %vm790, -inf, %v2149
        %v2206 = vsel %vm790, -inf, %v2152
        %v2207 = vsel %vm790, -inf, %v2155
        %v2208 = vsel %vm790, -inf, %v2158
        %v2209 = vmax.f32 %v2019, %v2193
        %v2210 = vmax.f32 %v2097, %v2115
        %v2211 = vmax.f32 %v2022, %v2194
        %v2212 = vmax.f32 %v2098, %v2118
        %v2213 = vmax.f32 %v2025, %v2195
        %v2214 = vmax.f32 %v2099, %v2121
        %v2215 = vmax.f32 %v2028, %v2196
        %v2216 = vmax.f32 %v2100, %v2124
        %v2217 = vmax.f32 %v2031, %v2197
        %v2218 = vmax.f32 %v2101, %v2127
        %v2219 = vmax.f32 %v2034, %v2198
        %v2220 = vmax.f32 %v2102, %v2130
        %v2221 = vmax.f32 %v2037, %v2199
        %v2222 = vmax.f32 %v2103, %v2133
        %v2223 = vmax.f32 %v2040, %v2200
        %v2224 = vmax.f32 %v2104, %v2136
        %v2225 = vmax.f32 %v2043, %v2201
        %v2226 = vmax.f32 %v2105, %v2139
        %v2227 = vmax.f32 %v2046, %v2202
        %v2228 = vmax.f32 %v2106, %v2142
        %v2229 = vmax.f32 %v2049, %v2203
        %v2230 = vmax.f32 %v2107, %v2145
        %v2231 = vmax.f32 %v2052, %v2204
        %v2232 = vmax.f32 %v2108, %v2148
        %v2233 = vmax.f32 %v2055, %v2205
        %v2234 = vmax.f32 %v2109, %v2151
        %v2235 = vmax.f32 %v2058, %v2206
        %v2236 = vmax.f32 %v2110, %v2154
        %v2237 = vmax.f32 %v2061, %v2207
        %v2238 = vmax.f32 %v2111, %v2157
        %v2239 = vmax.f32 %v2064, %v2208
        %v2240 = vmax.f32 %v2112, %v2160
        %v2241 = vmax.f32 %v1953, %v2209
        %v2242 = vmax.f32 %v1954, %v2210
        %v2243 = vmax.f32 %v1955, %v2211
        %v2244 = vmax.f32 %v1956, %v2212
        %v2245 = vmax.f32 %v1957, %v2213
        %v2246 = vmax.f32 %v1958, %v2214
        %v2247 = vmax.f32 %v1959, %v2215
        %v2248 = vmax.f32 %v1960, %v2216
        %v2249 = vmax.f32 %v1961, %v2217
        %v2250 = vmax.f32 %v1962, %v2218
        %v2251 = vmax.f32 %v1963, %v2219
        %v2252 = vmax.f32 %v1964, %v2220
        %v2253 = vmax.f32 %v1965, %v2221
        %v2254 = vmax.f32 %v1966, %v2222
        %v2255 = vmax.f32 %v1967, %v2223
        %v2256 = vmax.f32 %v1968, %v2224
        %v2257 = vmax.f32 %v1969, %v2225
        %v2258 = vmax.f32 %v1970, %v2226
        %v2259 = vmax.f32 %v1971, %v2227
        %v2260 = vmax.f32 %v1972, %v2228
        %v2261 = vmax.f32 %v1973, %v2229
        %v2262 = vmax.f32 %v1974, %v2230
        %v2263 = vmax.f32 %v1975, %v2231
        %v2264 = vmax.f32 %v1976, %v2232
        %v2265 = vmax.f32 %v1977, %v2233
        %v2266 = vmax.f32 %v1978, %v2234
        %v2267 = vmax.f32 %v1979, %v2235
        %v2268 = vmax.f32 %v1980, %v2236
        %v2269 = vmax.f32 %v1981, %v2237
        %v2270 = vmax.f32 %v1982, %v2238
        %v2271 = vmax.f32 %v1983, %v2239
        %v2272 = vmax.f32 %v1984, %v2240
        %v2273 = vrot.slane %v1953, 2
        %v2274 = vrot.slane %v1954, 2
        %v2275 = vsel %vm951, %v2273, %v2274
        %v2276 = vrot.slane %v1955, 2
        %v2277 = vrot.slane %v1956, 2
        %v2278 = vsel %vm951, %v2276, %v2277
        %v2279 = vrot.slane %v1957, 2
        %v2280 = vrot.slane %v1958, 2
        %v2281 = vsel %vm951, %v2279, %v2280
        %v2282 = vrot.slane %v1959, 2
        %v2283 = vrot.slane %v1960, 2
        %v2284 = vsel %vm951, %v2282, %v2283
        %v2285 = vrot.slane %v1961, 2
        %v2286 = vrot.slane %v1962, 2
        %v2287 = vsel %vm951, %v2285, %v2286
        %v2288 = vrot.slane %v1963, 2
        %v2289 = vrot.slane %v1964, 2
        %v2290 = vsel %vm951, %v2288, %v2289
        %v2291 = vrot.slane %v1965, 2
        %v2292 = vrot.slane %v1966, 2
        %v2293 = vsel %vm951, %v2291, %v2292
        %v2294 = vrot.slane %v1967, 2
        %v2295 = vrot.slane %v1968, 2
        %v2296 = vsel %vm951, %v2294, %v2295
        %v2297 = vrot.slane %v1969, 2
        %v2298 = vrot.slane %v1970, 2
        %v2299 = vsel %vm951, %v2297, %v2298
        %v2300 = vrot.slane %v1971, 2
        %v2301 = vrot.slane %v1972, 2
        %v2302 = vsel %vm951, %v2300, %v2301
        %v2303 = vrot.slane %v1973, 2
        %v2304 = vrot.slane %v1974, 2
        %v2305 = vsel %vm951, %v2303, %v2304
        %v2306 = vrot.slane %v1975, 2
        %v2307 = vrot.slane %v1976, 2
        %v2308 = vsel %vm951, %v2306, %v2307
        %v2309 = vrot.slane %v1977, 2
        %v2310 = vrot.slane %v1978, 2
        %v2311 = vsel %vm951, %v2309, %v2310
        %v2312 = vrot.slane %v1979, 2
        %v2313 = vrot.slane %v1980, 2
        %v2314 = vsel %vm951, %v2312, %v2313
        %v2315 = vrot.slane %v1981, 2
        %v2316 = vrot.slane %v1982, 2
        %v2317 = vsel %vm951, %v2315, %v2316
        %v2318 = vrot.slane %v1983, 2
        %v2319 = vrot.slane %v1984, 2
        %v2320 = vsel %vm951, %v2318, %v2319
        %v2353 = vsel %vm951, %v2274, -inf
        %v2354 = vsel %vm951, %v2277, -inf
        %v2355 = vsel %vm951, %v2280, -inf
        %v2356 = vsel %vm951, %v2283, -inf
        %v2357 = vsel %vm951, %v2286, -inf
        %v2358 = vsel %vm951, %v2289, -inf
        %v2359 = vsel %vm951, %v2292, -inf
        %v2360 = vsel %vm951, %v2295, -inf
        %v2361 = vsel %vm951, %v2298, -inf
        %v2362 = vsel %vm951, %v2301, -inf
        %v2363 = vsel %vm951, %v2304, -inf
        %v2364 = vsel %vm951, %v2307, -inf
        %v2365 = vsel %vm951, %v2310, -inf
        %v2366 = vsel %vm951, %v2313, -inf
        %v2367 = vsel %vm951, %v2316, -inf
        %v2368 = vsel %vm951, %v2319, -inf
        %v2369 = vrot.slane %v1953, 6
        %v2370 = vrot.slane %v1954, 6
        %v2371 = vsel %vm1048, %v2369, %v2370
        %v2372 = vrot.slane %v1955, 6
        %v2373 = vrot.slane %v1956, 6
        %v2374 = vsel %vm1048, %v2372, %v2373
        %v2375 = vrot.slane %v1957, 6
        %v2376 = vrot.slane %v1958, 6
        %v2377 = vsel %vm1048, %v2375, %v2376
        %v2378 = vrot.slane %v1959, 6
        %v2379 = vrot.slane %v1960, 6
        %v2380 = vsel %vm1048, %v2378, %v2379
        %v2381 = vrot.slane %v1961, 6
        %v2382 = vrot.slane %v1962, 6
        %v2383 = vsel %vm1048, %v2381, %v2382
        %v2384 = vrot.slane %v1963, 6
        %v2385 = vrot.slane %v1964, 6
        %v2386 = vsel %vm1048, %v2384, %v2385
        %v2387 = vrot.slane %v1965, 6
        %v2388 = vrot.slane %v1966, 6
        %v2389 = vsel %vm1048, %v2387, %v2388
        %v2390 = vrot.slane %v1967, 6
        %v2391 = vrot.slane %v1968, 6
        %v2392 = vsel %vm1048, %v2390, %v2391
        %v2393 = vrot.slane %v1969, 6
        %v2394 = vrot.slane %v1970, 6
        %v2395 = vsel %vm1048, %v2393, %v2394
        %v2396 = vrot.slane %v1971, 6
        %v2397 = vrot.slane %v1972, 6
        %v2398 = vsel %vm1048, %v2396, %v2397
        %v2399 = vrot.slane %v1973, 6
        %v2400 = vrot.slane %v1974, 6
        %v2401 = vsel %vm1048, %v2399, %v2400
        %v2402 = vrot.slane %v1975, 6
        %v2403 = vrot.slane %v1976, 6
        %v2404 = vsel %vm1048, %v2402, %v2403
        %v2405 = vrot.slane %v1977, 6
        %v2406 = vrot.slane %v1978, 6
        %v2407 = vsel %vm1048, %v2405, %v2406
        %v2408 = vrot.slane %v1979, 6
        %v2409 = vrot.slane %v1980, 6
        %v2410 = vsel %vm1048, %v2408, %v2409
        %v2411 = vrot.slane %v1981, 6
        %v2412 = vrot.slane %v1982, 6
        %v2413 = vsel %vm1048, %v2411, %v2412
        %v2414 = vrot.slane %v1983, 6
        %v2415 = vrot.slane %v1984, 6
        %v2416 = vsel %vm1048, %v2414, %v2415
        %v2449 = vsel %vm1048, -inf, %v2369
        %v2450 = vsel %vm1048, -inf, %v2372
        %v2451 = vsel %vm1048, -inf, %v2375
        %v2452 = vsel %vm1048, -inf, %v2378
        %v2453 = vsel %vm1048, -inf, %v2381
        %v2454 = vsel %vm1048, -inf, %v2384
        %v2455 = vsel %vm1048, -inf, %v2387
        %v2456 = vsel %vm1048, -inf, %v2390
        %v2457 = vsel %vm1048, -inf, %v2393
        %v2458 = vsel %vm1048, -inf, %v2396
        %v2459 = vsel %vm1048, -inf, %v2399
        %v2460 = vsel %vm1048, -inf, %v2402
        %v2461 = vsel %vm1048, -inf, %v2405
        %v2462 = vsel %vm1048, -inf, %v2408
        %v2463 = vsel %vm1048, -inf, %v2411
        %v2464 = vsel %vm1048, -inf, %v2414
        %v2465 = vmax.f32 %v2275, %v2449
        %v2466 = vmax.f32 %v2353, %v2371
        %v2467 = vmax.f32 %v2278, %v2450
        %v2468 = vmax.f32 %v2354, %v2374
        %v2469 = vmax.f32 %v2281, %v2451
        %v2470 = vmax.f32 %v2355, %v2377
        %v2471 = vmax.f32 %v2284, %v2452
        %v2472 = vmax.f32 %v2356, %v2380
        %v2473 = vmax.f32 %v2287, %v2453
        %v2474 = vmax.f32 %v2357, %v2383
        %v2475 = vmax.f32 %v2290, %v2454
        %v2476 = vmax.f32 %v2358, %v2386
        %v2477 = vmax.f32 %v2293, %v2455
        %v2478 = vmax.f32 %v2359, %v2389
        %v2479 = vmax.f32 %v2296, %v2456
        %v2480 = vmax.f32 %v2360, %v2392
        %v2481 = vmax.f32 %v2299, %v2457
        %v2482 = vmax.f32 %v2361, %v2395
        %v2483 = vmax.f32 %v2302, %v2458
        %v2484 = vmax.f32 %v2362, %v2398
        %v2485 = vmax.f32 %v2305, %v2459
        %v2486 = vmax.f32 %v2363, %v2401
        %v2487 = vmax.f32 %v2308, %v2460
        %v2488 = vmax.f32 %v2364, %v2404
        %v2489 = vmax.f32 %v2311, %v2461
        %v2490 = vmax.f32 %v2365, %v2407
        %v2491 = vmax.f32 %v2314, %v2462
        %v2492 = vmax.f32 %v2366, %v2410
        %v2493 = vmax.f32 %v2317, %v2463
        %v2494 = vmax.f32 %v2367, %v2413
        %v2495 = vmax.f32 %v2320, %v2464
        %v2496 = vmax.f32 %v2368, %v2416
        %v2497 = vmax.f32 %v2241, %v2465
        %v2498 = vmax.f32 %v2242, %v2466
        %v2499 = vmax.f32 %v2243, %v2467
        %v2500 = vmax.f32 %v2244, %v2468
        %v2501 = vmax.f32 %v2245, %v2469
        %v2502 = vmax.f32 %v2246, %v2470
        %v2503 = vmax.f32 %v2247, %v2471
        %v2504 = vmax.f32 %v2248, %v2472
        %v2505 = vmax.f32 %v2249, %v2473
        %v2506 = vmax.f32 %v2250, %v2474
        %v2507 = vmax.f32 %v2251, %v2475
        %v2508 = vmax.f32 %v2252, %v2476
        %v2509 = vmax.f32 %v2253, %v2477
        %v2510 = vmax.f32 %v2254, %v2478
        %v2511 = vmax.f32 %v2255, %v2479
        %v2512 = vmax.f32 %v2256, %v2480
        %v2513 = vmax.f32 %v2257, %v2481
        %v2514 = vmax.f32 %v2258, %v2482
        %v2515 = vmax.f32 %v2259, %v2483
        %v2516 = vmax.f32 %v2260, %v2484
        %v2517 = vmax.f32 %v2261, %v2485
        %v2518 = vmax.f32 %v2262, %v2486
        %v2519 = vmax.f32 %v2263, %v2487
        %v2520 = vmax.f32 %v2264, %v2488
        %v2521 = vmax.f32 %v2265, %v2489
        %v2522 = vmax.f32 %v2266, %v2490
        %v2523 = vmax.f32 %v2267, %v2491
        %v2524 = vmax.f32 %v2268, %v2492
        %v2525 = vmax.f32 %v2269, %v2493
        %v2526 = vmax.f32 %v2270, %v2494
        %v2527 = vmax.f32 %v2271, %v2495
        %v2528 = vmax.f32 %v2272, %v2496
        %v2529 = vmax.f32 %v2501, %v2497
        %v2530 = vmax.f32 %v2502, %v2498
        %v2531 = vmax.f32 %v2503, %v2499
        %v2532 = vmax.f32 %v2504, %v2500
        %v2533 = vmax.f32 %v2505, %v2501
        %v2534 = vmax.f32 %v2506, %v2502
        %v2535 = vmax.f32 %v2507, %v2503
        %v2536 = vmax.f32 %v2508, %v2504
        %v2537 = vmax.f32 %v2509, %v2505
        %v2538 = vmax.f32 %v2510, %v2506
        %v2539 = vmax.f32 %v2511, %v2507
        %v2540 = vmax.f32 %v2512, %v2508
        %v2541 = vmax.f32 %v2513, %v2509
        %v2542 = vmax.f32 %v2514, %v2510
        %v2543 = vmax.f32 %v2515, %v2511
        %v2544 = vmax.f32 %v2516, %v2512
        %v2545 = vmax.f32 %v2517, %v2513
        %v2546 = vmax.f32 %v2518, %v2514
        %v2547 = vmax.f32 %v2519, %v2515
        %v2548 = vmax.f32 %v2520, %v2516
        %v2549 = vmax.f32 %v2521, %v2517
        %v2550 = vmax.f32 %v2522, %v2518
        %v2551 = vmax.f32 %v2523, %v2519
        %v2552 = vmax.f32 %v2524, %v2520
        %v2553 = vmax.f32 %v2525, %v2521
        %v2554 = vmax.f32 %v2526, %v2522
        %v2555 = vmax.f32 %v2527, %v2523
        %v2556 = vmax.f32 %v2528, %v2524
        %v2557 = vmax.f32 %v2497, %v2499
        %v2558 = vmax.f32 %v2498, %v2500
        %v2559 = vmax.f32 %v2499, %v2529
        %v2560 = vmax.f32 %v2500, %v2530
        %v2561 = vmax.f32 %v2501, %v2531
        %v2562 = vmax.f32 %v2502, %v2532
        %v2563 = vmax.f32 %v2503, %v2533
        %v2564 = vmax.f32 %v2504, %v2534
        %v2565 = vmax.f32 %v2505, %v2535
        %v2566 = vmax.f32 %v2506, %v2536
        %v2567 = vmax.f32 %v2507, %v2537
        %v2568 = vmax.f32 %v2508, %v2538
        %v2569 = vmax.f32 %v2509, %v2539
        %v2570 = vmax.f32 %v2510, %v2540
        %v2571 = vmax.f32 %v2511, %v2541
        %v2572 = vmax.f32 %v2512, %v2542
        %v2573 = vmax.f32 %v2513, %v2543
        %v2574 = vmax.f32 %v2514, %v2544
        %v2575 = vmax.f32 %v2515, %v2545
        %v2576 = vmax.f32 %v2516, %v2546
        %v2577 = vmax.f32 %v2517, %v2547
        %v2578 = vmax.f32 %v2518, %v2548
        %v2579 = vmax.f32 %v2519, %v2549
        %v2580 = vmax.f32 %v2520, %v2550
        %v2581 = vmax.f32 %v2521, %v2551
        %v2582 = vmax.f32 %v2522, %v2552
        %v2583 = vmax.f32 %v2523, %v2553
        %v2584 = vmax.f32 %v2524, %v2554
        %v2585 = vmax.f32 %v2525, %v2555
        %v2586 = vmax.f32 %v2526, %v2556
        %v2587 = vmax.f32 %v2527, %v2525
        %v2588 = vmax.f32 %v2528, %v2526
        %v2589 = vmax.f32 %v2505, %v2497
        %v2590 = vmax.f32 %v2506, %v2498
        %v2591 = vmax.f32 %v2507, %v2499
        %v2592 = vmax.f32 %v2508, %v2500
        %v2593 = vmax.f32 %v2509, %v2501
        %v2594 = vmax.f32 %v2510, %v2502
        %v2595 = vmax.f32 %v2511, %v2503
        %v2596 = vmax.f32 %v2512, %v2504
        %v2597 = vmax.f32 %v2513, %v2505
        %v2598 = vmax.f32 %v2514, %v2506
        %v2599 = vmax.f32 %v2515, %v2507
        %v2600 = vmax.f32 %v2516, %v2508
        %v2601 = vmax.f32 %v2517, %v2509
        %v2602 = vmax.f32 %v2518, %v2510
        %v2603 = vmax.f32 %v2519, %v2511
        %v2604 = vmax.f32 %v2520, %v2512
        %v2605 = vmax.f32 %v2521, %v2513
        %v2606 = vmax.f32 %v2522, %v2514
        %v2607 = vmax.f32 %v2523, %v2515
        %v2608 = vmax.f32 %v2524, %v2516
        %v2609 = vmax.f32 %v2525, %v2517
        %v2610 = vmax.f32 %v2526, %v2518
        %v2611 = vmax.f32 %v2527, %v2519
        %v2612 = vmax.f32 %v2528, %v2520
        %v2613 = vmax.f32 %v2557, %v2501
        %v2614 = vmax.f32 %v2558, %v2502
        %v2615 = vmax.f32 %v2559, %v2503
        %v2616 = vmax.f32 %v2560, %v2504
        %v2617 = vmax.f32 %v2561, %v2589
        %v2618 = vmax.f32 %v2562, %v2590
        %v2619 = vmax.f32 %v2563, %v2591
        %v2620 = vmax.f32 %v2564, %v2592
        %v2621 = vmax.f32 %v2565, %v2593
        %v2622 = vmax.f32 %v2566, %v2594
        %v2623 = vmax.f32 %v2567, %v2595
        %v2624 = vmax.f32 %v2568, %v2596
        %v2625 = vmax.f32 %v2569, %v2597
        %v2626 = vmax.f32 %v2570, %v2598
        %v2627 = vmax.f32 %v2571, %v2599
        %v2628 = vmax.f32 %v2572, %v2600
        %v2629 = vmax.f32 %v2573, %v2601
        %v2630 = vmax.f32 %v2574, %v2602
        %v2631 = vmax.f32 %v2575, %v2603
        %v2632 = vmax.f32 %v2576, %v2604
        %v2633 = vmax.f32 %v2577, %v2605
        %v2634 = vmax.f32 %v2578, %v2606
        %v2635 = vmax.f32 %v2579, %v2607
        %v2636 = vmax.f32 %v2580, %v2608
        %v2637 = vmax.f32 %v2581, %v2609
        %v2638 = vmax.f32 %v2582, %v2610
        %v2639 = vmax.f32 %v2583, %v2611
        %v2640 = vmax.f32 %v2584, %v2612
        %v2641 = vmax.f32 %v2585, %v2521
        %v2642 = vmax.f32 %v2586, %v2522
        %v2643 = vmax.f32 %v2587, %v2523
        %v2644 = vmax.f32 %v2588, %v2524
        %v2645 = vld [vmem:[#allocation7] sm:$0xff]
        %v2646 = vld [vmem:[#allocation7 + $0x8] sm:$0xff]
        %v2647 = vld [vmem:[#allocation7 + $0x10] sm:$0xff]
        %v2648 = vld [vmem:[#allocation7 + $0x18] sm:$0xff]
        %v2649 = vld [vmem:[#allocation7 + $0x20] sm:$0xff]
        %v2650 = vld [vmem:[#allocation7 + $0x28] sm:$0xff]
        %v2651 = vld [vmem:[#allocation7 + $0x30] sm:$0xff]
        %v2652 = vld [vmem:[#allocation7 + $0x38] sm:$0xff]
        %v2653 = vld [vmem:[#allocation7 + $0x40] sm:$0xff]
        %v2654 = vld [vmem:[#allocation7 + $0x48] sm:$0xff]
        %v2655 = vld [vmem:[#allocation7 + $0x50] sm:$0xff]
        %v2656 = vld [vmem:[#allocation7 + $0x58] sm:$0xff]
        %v2657 = vld [vmem:[#allocation7 + $0x60] sm:$0xff]
        %v2658 = vld [vmem:[#allocation7 + $0x68] sm:$0xff]
        %v2659 = vld [vmem:[#allocation7 + $0x70] sm:$0xff]
        %v2660 = vld [vmem:[#allocation7 + $0x78] sm:$0xff]
        %v2661 = vld [vmem:[#allocation7 + $0x80] sm:$0xff]
        %v2662 = vld [vmem:[#allocation7 + $0x88] sm:$0xff]
        %v2663 = vld [vmem:[#allocation7 + $0x90] sm:$0xff]
        %v2664 = vld [vmem:[#allocation7 + $0x98] sm:$0xff]
        %v2665 = vld [vmem:[#allocation7 + $0xa0] sm:$0xff]
        %v2666 = vld [vmem:[#allocation7 + $0xa8] sm:$0xff]
        %v2667 = vld [vmem:[#allocation7 + $0xb0] sm:$0xff]
        %v2668 = vld [vmem:[#allocation7 + $0xb8] sm:$0xff]
        %v2669 = vld [vmem:[#allocation7 + $0xc0] sm:$0xff]
        %v2670 = vld [vmem:[#allocation7 + $0xc8] sm:$0xff]
        %v2671 = vld [vmem:[#allocation7 + $0xd0] sm:$0xff]
        %v2672 = vld [vmem:[#allocation7 + $0xd8] sm:$0xff]
        %v2673 = vld [vmem:[#allocation7 + $0xe0] sm:$0xff]
        %v2674 = vld [vmem:[#allocation7 + $0xe8] sm:$0xff]
        %v2675 = vld [vmem:[#allocation7 + $0xf0] sm:$0xff]
        %v2676 = vld [vmem:[#allocation7 + $0xf8] sm:$0xff]
        %v2677 = vld [vmem:[#allocation7 + $0x100] sm:$0xff]
        %v2678 = vld [vmem:[#allocation7 + $0x108] sm:$0xff]
        %v2679 = vld [vmem:[#allocation7 + $0x110] sm:$0xff]
        %v2680 = vld [vmem:[#allocation7 + $0x118] sm:$0xff]
        %v2681 = vld [vmem:[#allocation7 + $0x120] sm:$0xff]
        %v2682 = vld [vmem:[#allocation7 + $0x128] sm:$0xff]
        %v2683 = vld [vmem:[#allocation7 + $0x130] sm:$0xff]
        %v2684 = vld [vmem:[#allocation7 + $0x138] sm:$0xff]
        %v2685 = vld [vmem:[#allocation7 + $0x140] sm:$0xff]
        %v2686 = vld [vmem:[#allocation7 + $0x148] sm:$0xff]
        %v2687 = vld [vmem:[#allocation7 + $0x150] sm:$0xff]
        %v2688 = vld [vmem:[#allocation7 + $0x158] sm:$0xff]
        %v2689 = vld [vmem:[#allocation7 + $0x160] sm:$0xff]
        %v2690 = vld [vmem:[#allocation7 + $0x168] sm:$0xff]
        %v2691 = vld [vmem:[#allocation7 + $0x170] sm:$0xff]
        %v2692 = vld [vmem:[#allocation7 + $0x178] sm:$0xff]
        %v2693 = vld [vmem:[#allocation7 + $0x180] sm:$0xff]
        %v2694 = vld [vmem:[#allocation7 + $0x188] sm:$0xff]
        %v2695 = vld [vmem:[#allocation7 + $0x190] sm:$0xff]
        %v2696 = vld [vmem:[#allocation7 + $0x198] sm:$0xff]
        %v2697 = vld [vmem:[#allocation7 + $0x1a0] sm:$0xff]
        %v2698 = vld [vmem:[#allocation7 + $0x1a8] sm:$0xff]
        %v2699 = vld [vmem:[#allocation7 + $0x1b0] sm:$0xff]
        %v2700 = vld [vmem:[#allocation7 + $0x1b8] sm:$0xff]
        %v2701 = vld [vmem:[#allocation7 + $0x1c0] sm:$0xff]
        %v2702 = vld [vmem:[#allocation7 + $0x1c8] sm:$0xff]
        %v2703 = vld [vmem:[#allocation7 + $0x1d0] sm:$0xff]
        %v2704 = vld [vmem:[#allocation7 + $0x1d8] sm:$0xff]
        %v2705 = vld [vmem:[#allocation7 + $0x1e0] sm:$0xff]
        %v2706 = vld [vmem:[#allocation7 + $0x1e8] sm:$0xff]
        %v2707 = vld [vmem:[#allocation7 + $0x1f0] sm:$0xff]
        %v2708 = vld [vmem:[#allocation7 + $0x1f8] sm:$0xff]
        %2709 = vmatpush.msra.mxu0 %v2660
        %2710 = vmatpush.msra.mxu0 %v2659
        %2711 = vmatpush.msra.mxu0 %v2658
        %2712 = vmatpush.msra.mxu0 %v2657
        %2713 = vmatpush.msra.mxu0 %v2656
        %2714 = vmatpush.msra.mxu0 %v2655
        %2715 = vmatpush.msra.mxu0 %v2654
        %2716 = vmatpush.msra.mxu0 %v2653
        %2717 = vmatpush.msra.mxu0 %v2652
        %2718 = vmatpush.msra.mxu0 %v2651
        %2719 = vmatpush.msra.mxu0 %v2650
        %2720 = vmatpush.msra.mxu0 %v2649
        %2721 = vmatpush.msra.mxu0 %v2648
        %2722 = vmatpush.msra.mxu0 %v2647
        %2723 = vmatpush.msra.mxu0 %v2646
        %2724 = vmatpush.msra.mxu0 %v2645
        %2725 = vmatmul.f32.gmra.mxu0 %v629
        %v2726 = vpop.f32.mrf.mxu0
        %v2727 = vadd.f32 0.0, %v2726
        %2728 = vmatmul.f32.gmra.mxu0 %v630
        %v2729 = vpop.f32.mrf.mxu0
        %v2730 = vadd.f32 0.0, %v2729
        %2731 = vmatmul.f32.gmra.mxu0 %v631
        %v2732 = vpop.f32.mrf.mxu0
        %v2733 = vadd.f32 0.0, %v2732
        %2734 = vmatmul.f32.gmra.mxu0 %v632
        %v2735 = vpop.f32.mrf.mxu0
        %v2736 = vadd.f32 0.0, %v2735
        %2737 = vmatmul.f32.gmra.mxu0 %v633
        %v2738 = vpop.f32.mrf.mxu0
        %v2739 = vadd.f32 0.0, %v2738
        %2740 = vmatmul.f32.gmra.mxu0 %v634
        %v2741 = vpop.f32.mrf.mxu0
        %v2742 = vadd.f32 0.0, %v2741
        %2743 = vmatmul.f32.gmra.mxu0 %v635
        %v2744 = vpop.f32.mrf.mxu0
        %v2745 = vadd.f32 0.0, %v2744
        %2746 = vmatmul.f32.gmra.mxu0 %v636
        %v2747 = vpop.f32.mrf.mxu0
        %v2748 = vadd.f32 0.0, %v2747
        %2749 = vmatmul.f32.gmra.mxu0 %v637
        %v2750 = vpop.f32.mrf.mxu0
        %v2751 = vadd.f32 0.0, %v2750
        %2752 = vmatmul.f32.gmra.mxu0 %v638
        %v2753 = vpop.f32.mrf.mxu0
        %v2754 = vadd.f32 0.0, %v2753
        %2755 = vmatmul.f32.gmra.mxu0 %v639
        %v2756 = vpop.f32.mrf.mxu0
        %v2757 = vadd.f32 0.0, %v2756
        %2758 = vmatmul.f32.gmra.mxu0 %v640
        %v2759 = vpop.f32.mrf.mxu0
        %v2760 = vadd.f32 0.0, %v2759
        %2761 = vmatmul.f32.gmra.mxu0 %v641
        %v2762 = vpop.f32.mrf.mxu0
        %v2763 = vadd.f32 0.0, %v2762
        %2764 = vmatmul.f32.gmra.mxu0 %v642
        %v2765 = vpop.f32.mrf.mxu0
        %v2766 = vadd.f32 0.0, %v2765
        %2767 = vmatmul.f32.gmra.mxu0 %v643
        %v2768 = vpop.f32.mrf.mxu0
        %v2769 = vadd.f32 0.0, %v2768
        %2770 = vmatmul.f32.gmra.mxu0 %v644
        %v2771 = vpop.f32.mrf.mxu0
        %v2772 = vadd.f32 0.0, %v2771
        %2773 = vmatmul.f32.gmra.mxu0 %v645
        %v2774 = vpop.f32.mrf.mxu0
        %v2775 = vadd.f32 0.0, %v2774
        %2776 = vmatmul.f32.gmra.mxu0 %v646
        %v2777 = vpop.f32.mrf.mxu0
        %v2778 = vadd.f32 0.0, %v2777
        %2779 = vmatmul.f32.gmra.mxu0 %v647
        %v2780 = vpop.f32.mrf.mxu0
        %v2781 = vadd.f32 0.0, %v2780
        %2782 = vmatmul.f32.gmra.mxu0 %v648
        %v2783 = vpop.f32.mrf.mxu0
        %v2784 = vadd.f32 0.0, %v2783
        %2785 = vmatmul.f32.gmra.mxu0 %v649
        %v2786 = vpop.f32.mrf.mxu0
        %v2787 = vadd.f32 0.0, %v2786
        %2788 = vmatmul.f32.gmra.mxu0 %v650
        %v2789 = vpop.f32.mrf.mxu0
        %v2790 = vadd.f32 0.0, %v2789
        %2791 = vmatmul.f32.gmra.mxu0 %v651
        %v2792 = vpop.f32.mrf.mxu0
        %v2793 = vadd.f32 0.0, %v2792
        %2794 = vmatmul.f32.gmra.mxu0 %v652
        %v2795 = vpop.f32.mrf.mxu0
        %v2796 = vadd.f32 0.0, %v2795
        %2797 = vmatmul.f32.gmra.mxu0 %v653
        %v2798 = vpop.f32.mrf.mxu0
        %v2799 = vadd.f32 0.0, %v2798
        %2800 = vmatmul.f32.gmra.mxu0 %v654
        %v2801 = vpop.f32.mrf.mxu0
        %v2802 = vadd.f32 0.0, %v2801
        %2803 = vmatmul.f32.gmra.mxu0 %v655
        %v2804 = vpop.f32.mrf.mxu0
        %v2805 = vadd.f32 0.0, %v2804
        %2806 = vmatmul.f32.gmra.mxu0 %v656
        %v2807 = vpop.f32.mrf.mxu0
        %v2808 = vadd.f32 0.0, %v2807
        %2809 = vmatmul.f32.gmra.mxu0 %v657
        %v2810 = vpop.f32.mrf.mxu0
        %v2811 = vadd.f32 0.0, %v2810
        %2812 = vmatmul.f32.gmra.mxu0 %v658
        %v2813 = vpop.f32.mrf.mxu0
        %v2814 = vadd.f32 0.0, %v2813
        %2815 = vmatmul.f32.gmra.mxu0 %v659
        %v2816 = vpop.f32.mrf.mxu0
        %v2817 = vadd.f32 0.0, %v2816
        %2818 = vmatmul.f32.gmra.mxu0 %v660
        %v2819 = vpop.f32.mrf.mxu0
        %v2820 = vadd.f32 0.0, %v2819
        %2821 = vdwg.mxu0
        %2822 = vmatpush.msra.mxu0 %v2676
        %2823 = vmatpush.msra.mxu0 %v2675
        %2824 = vmatpush.msra.mxu0 %v2674
        %2825 = vmatpush.msra.mxu0 %v2673
        %2826 = vmatpush.msra.mxu0 %v2672
        %2827 = vmatpush.msra.mxu0 %v2671
        %2828 = vmatpush.msra.mxu0 %v2670
        %2829 = vmatpush.msra.mxu0 %v2669
        %2830 = vmatpush.msra.mxu0 %v2668
        %2831 = vmatpush.msra.mxu0 %v2667
        %2832 = vmatpush.msra.mxu0 %v2666
        %2833 = vmatpush.msra.mxu0 %v2665
        %2834 = vmatpush.msra.mxu0 %v2664
        %2835 = vmatpush.msra.mxu0 %v2663
        %2836 = vmatpush.msra.mxu0 %v2662
        %2837 = vmatpush.msra.mxu0 %v2661
        %2838 = vmatmul.f32.gmra.mxu0 %v1293
        %v2839 = vpop.f32.mrf.mxu0
        %v2840 = vadd.f32 %v2727, %v2839
        %2841 = vmatmul.f32.gmra.mxu0 %v1294
        %v2842 = vpop.f32.mrf.mxu0
        %v2843 = vadd.f32 %v2730, %v2842
        %2844 = vmatmul.f32.gmra.mxu0 %v1295
        %v2845 = vpop.f32.mrf.mxu0
        %v2846 = vadd.f32 %v2733, %v2845
        %2847 = vmatmul.f32.gmra.mxu0 %v1296
        %v2848 = vpop.f32.mrf.mxu0
        %v2849 = vadd.f32 %v2736, %v2848
        %2850 = vmatmul.f32.gmra.mxu0 %v1297
        %v2851 = vpop.f32.mrf.mxu0
        %v2852 = vadd.f32 %v2739, %v2851
        %2853 = vmatmul.f32.gmra.mxu0 %v1298
        %v2854 = vpop.f32.mrf.mxu0
        %v2855 = vadd.f32 %v2742, %v2854
        %2856 = vmatmul.f32.gmra.mxu0 %v1299
        %v2857 = vpop.f32.mrf.mxu0
        %v2858 = vadd.f32 %v2745, %v2857
        %2859 = vmatmul.f32.gmra.mxu0 %v1300
        %v2860 = vpop.f32.mrf.mxu0
        %v2861 = vadd.f32 %v2748, %v2860
        %2862 = vmatmul.f32.gmra.mxu0 %v1301
        %v2863 = vpop.f32.mrf.mxu0
        %v2864 = vadd.f32 %v2751, %v2863
        %2865 = vmatmul.f32.gmra.mxu0 %v1302
        %v2866 = vpop.f32.mrf.mxu0
        %v2867 = vadd.f32 %v2754, %v2866
        %2868 = vmatmul.f32.gmra.mxu0 %v1303
        %v2869 = vpop.f32.mrf.mxu0
        %v2870 = vadd.f32 %v2757, %v2869
        %2871 = vmatmul.f32.gmra.mxu0 %v1304
        %v2872 = vpop.f32.mrf.mxu0
        %v2873 = vadd.f32 %v2760, %v2872
        %2874 = vmatmul.f32.gmra.mxu0 %v1305
        %v2875 = vpop.f32.mrf.mxu0
        %v2876 = vadd.f32 %v2763, %v2875
        %2877 = vmatmul.f32.gmra.mxu0 %v1306
        %v2878 = vpop.f32.mrf.mxu0
        %v2879 = vadd.f32 %v2766, %v2878
        %2880 = vmatmul.f32.gmra.mxu0 %v1307
        %v2881 = vpop.f32.mrf.mxu0
        %v2882 = vadd.f32 %v2769, %v2881
        %2883 = vmatmul.f32.gmra.mxu0 %v1308
        %v2884 = vpop.f32.mrf.mxu0
        %v2885 = vadd.f32 %v2772, %v2884
        %2886 = vmatmul.f32.gmra.mxu0 %v1309
        %v2887 = vpop.f32.mrf.mxu0
        %v2888 = vadd.f32 %v2775, %v2887
        %2889 = vmatmul.f32.gmra.mxu0 %v1310
        %v2890 = vpop.f32.mrf.mxu0
        %v2891 = vadd.f32 %v2778, %v2890
        %2892 = vmatmul.f32.gmra.mxu0 %v1311
        %v2893 = vpop.f32.mrf.mxu0
        %v2894 = vadd.f32 %v2781, %v2893
        %2895 = vmatmul.f32.gmra.mxu0 %v1312
        %v2896 = vpop.f32.mrf.mxu0
        %v2897 = vadd.f32 %v2784, %v2896
        %2898 = vmatmul.f32.gmra.mxu0 %v1313
        %v2899 = vpop.f32.mrf.mxu0
        %v2900 = vadd.f32 %v2787, %v2899
        %2901 = vmatmul.f32.gmra.mxu0 %v1314
        %v2902 = vpop.f32.mrf.mxu0
        %v2903 = vadd.f32 %v2790, %v2902
        %2904 = vmatmul.f32.gmra.mxu0 %v1315
        %v2905 = vpop.f32.mrf.mxu0
        %v2906 = vadd.f32 %v2793, %v2905
        %2907 = vmatmul.f32.gmra.mxu0 %v1316
        %v2908 = vpop.f32.mrf.mxu0
        %v2909 = vadd.f32 %v2796, %v2908
        %2910 = vmatmul.f32.gmra.mxu0 %v1317
        %v2911 = vpop.f32.mrf.mxu0
        %v2912 = vadd.f32 %v2799, %v2911
        %2913 = vmatmul.f32.gmra.mxu0 %v1318
        %v2914 = vpop.f32.mrf.mxu0
        %v2915 = vadd.f32 %v2802, %v2914
        %2916 = vmatmul.f32.gmra.mxu0 %v1319
        %v2917 = vpop.f32.mrf.mxu0
        %v2918 = vadd.f32 %v2805, %v2917
        %2919 = vmatmul.f32.gmra.mxu0 %v1320
        %v2920 = vpop.f32.mrf.mxu0
        %v2921 = vadd.f32 %v2808, %v2920
        %2922 = vmatmul.f32.gmra.mxu0 %v1321
        %v2923 = vpop.f32.mrf.mxu0
        %v2924 = vadd.f32 %v2811, %v2923
        %2925 = vmatmul.f32.gmra.mxu0 %v1322
        %v2926 = vpop.f32.mrf.mxu0
        %v2927 = vadd.f32 %v2814, %v2926
        %2928 = vmatmul.f32.gmra.mxu0 %v1323
        %v2929 = vpop.f32.mrf.mxu0
        %v2930 = vadd.f32 %v2817, %v2929
        %2931 = vmatmul.f32.gmra.mxu0 %v1324
        %v2932 = vpop.f32.mrf.mxu0
        %v2933 = vadd.f32 %v2820, %v2932
        %2934 = vdwg.mxu0
        %2935 = vmatpush.msra.mxu0 %v2692
        %2936 = vmatpush.msra.mxu0 %v2691
        %2937 = vmatpush.msra.mxu0 %v2690
        %2938 = vmatpush.msra.mxu0 %v2689
        %2939 = vmatpush.msra.mxu0 %v2688
        %2940 = vmatpush.msra.mxu0 %v2687
        %2941 = vmatpush.msra.mxu0 %v2686
        %2942 = vmatpush.msra.mxu0 %v2685
        %2943 = vmatpush.msra.mxu0 %v2684
        %2944 = vmatpush.msra.mxu0 %v2683
        %2945 = vmatpush.msra.mxu0 %v2682
        %2946 = vmatpush.msra.mxu0 %v2681
        %2947 = vmatpush.msra.mxu0 %v2680
        %2948 = vmatpush.msra.mxu0 %v2679
        %2949 = vmatpush.msra.mxu0 %v2678
        %2950 = vmatpush.msra.mxu0 %v2677
        %2951 = vmatmul.f32.gmra.mxu0 %v1953
        %v2952 = vpop.f32.mrf.mxu0
        %v2953 = vadd.f32 %v2840, %v2952
        %2954 = vmatmul.f32.gmra.mxu0 %v1954
        %v2955 = vpop.f32.mrf.mxu0
        %v2956 = vadd.f32 %v2843, %v2955
        %2957 = vmatmul.f32.gmra.mxu0 %v1955
        %v2958 = vpop.f32.mrf.mxu0
        %v2959 = vadd.f32 %v2846, %v2958
        %2960 = vmatmul.f32.gmra.mxu0 %v1956
        %v2961 = vpop.f32.mrf.mxu0
        %v2962 = vadd.f32 %v2849, %v2961
        %2963 = vmatmul.f32.gmra.mxu0 %v1957
        %v2964 = vpop.f32.mrf.mxu0
        %v2965 = vadd.f32 %v2852, %v2964
        %2966 = vmatmul.f32.gmra.mxu0 %v1958
        %v2967 = vpop.f32.mrf.mxu0
        %v2968 = vadd.f32 %v2855, %v2967
        %2969 = vmatmul.f32.gmra.mxu0 %v1959
        %v2970 = vpop.f32.mrf.mxu0
        %v2971 = vadd.f32 %v2858, %v2970
        %2972 = vmatmul.f32.gmra.mxu0 %v1960
        %v2973 = vpop.f32.mrf.mxu0
        %v2974 = vadd.f32 %v2861, %v2973
        %2975 = vmatmul.f32.gmra.mxu0 %v1961
        %v2976 = vpop.f32.mrf.mxu0
        %v2977 = vadd.f32 %v2864, %v2976
        %2978 = vmatmul.f32.gmra.mxu0 %v1962
        %v2979 = vpop.f32.mrf.mxu0
        %v2980 = vadd.f32 %v2867, %v2979
        %2981 = vmatmul.f32.gmra.mxu0 %v1963
        %v2982 = vpop.f32.mrf.mxu0
        %v2983 = vadd.f32 %v2870, %v2982
        %2984 = vmatmul.f32.gmra.mxu0 %v1964
        %v2985 = vpop.f32.mrf.mxu0
        %v2986 = vadd.f32 %v2873, %v2985
        %2987 = vmatmul.f32.gmra.mxu0 %v1965
        %v2988 = vpop.f32.mrf.mxu0
        %v2989 = vadd.f32 %v2876, %v2988
        %2990 = vmatmul.f32.gmra.mxu0 %v1966
        %v2991 = vpop.f32.mrf.mxu0
        %v2992 = vadd.f32 %v2879, %v2991
        %2993 = vmatmul.f32.gmra.mxu0 %v1967
        %v2994 = vpop.f32.mrf.mxu0
        %v2995 = vadd.f32 %v2882, %v2994
        %2996 = vmatmul.f32.gmra.mxu0 %v1968
        %v2997 = vpop.f32.mrf.mxu0
        %v2998 = vadd.f32 %v2885, %v2997
        %2999 = vmatmul.f32.gmra.mxu0 %v1969
        %v3000 = vpop.f32.mrf.mxu0
        %v3001 = vadd.f32 %v2888, %v3000
        %3002 = vmatmul.f32.gmra.mxu0 %v1970
        %v3003 = vpop.f32.mrf.mxu0
        %v3004 = vadd.f32 %v2891, %v3003
        %3005 = vmatmul.f32.gmra.mxu0 %v1971
        %v3006 = vpop.f32.mrf.mxu0
        %v3007 = vadd.f32 %v2894, %v3006
        %3008 = vmatmul.f32.gmra.mxu0 %v1972
        %v3009 = vpop.f32.mrf.mxu0
        %v3010 = vadd.f32 %v2897, %v3009
        %3011 = vmatmul.f32.gmra.mxu0 %v1973
        %v3012 = vpop.f32.mrf.mxu0
        %v3013 = vadd.f32 %v2900, %v3012
        %3014 = vmatmul.f32.gmra.mxu0 %v1974
        %v3015 = vpop.f32.mrf.mxu0
        %v3016 = vadd.f32 %v2903, %v3015
        %3017 = vmatmul.f32.gmra.mxu0 %v1975
        %v3018 = vpop.f32.mrf.mxu0
        %v3019 = vadd.f32 %v2906, %v3018
        %3020 = vmatmul.f32.gmra.mxu0 %v1976
        %v3021 = vpop.f32.mrf.mxu0
        %v3022 = vadd.f32 %v2909, %v3021
        %3023 = vmatmul.f32.gmra.mxu0 %v1977
        %v3024 = vpop.f32.mrf.mxu0
        %v3025 = vadd.f32 %v2912, %v3024
        %3026 = vmatmul.f32.gmra.mxu0 %v1978
        %v3027 = vpop.f32.mrf.mxu0
        %v3028 = vadd.f32 %v2915, %v3027
        %3029 = vmatmul.f32.gmra.mxu0 %v1979
        %v3030 = vpop.f32.mrf.mxu0
        %v3031 = vadd.f32 %v2918, %v3030
        %3032 = vmatmul.f32.gmra.mxu0 %v1980
        %v3033 = vpop.f32.mrf.mxu0
        %v3034 = vadd.f32 %v2921, %v3033
        %3035 = vmatmul.f32.gmra.mxu0 %v1981
        %v3036 = vpop.f32.mrf.mxu0
        %v3037 = vadd.f32 %v2924, %v3036
        %3038 = vmatmul.f32.gmra.mxu0 %v1982
        %v3039 = vpop.f32.mrf.mxu0
        %v3040 = vadd.f32 %v2927, %v3039
        %3041 = vmatmul.f32.gmra.mxu0 %v1983
        %v3042 = vpop.f32.mrf.mxu0
        %v3043 = vadd.f32 %v2930, %v3042
        %3044 = vmatmul.f32.gmra.mxu0 %v1984
        %v3045 = vpop.f32.mrf.mxu0
        %v3046 = vadd.f32 %v2933, %v3045
        %3047 = vdwg.mxu0
        %3048 = vmatpush.msra.mxu0 %v2708
        %3049 = vmatpush.msra.mxu0 %v2707
        %3050 = vmatpush.msra.mxu0 %v2706
        %3051 = vmatpush.msra.mxu0 %v2705
        %3052 = vmatpush.msra.mxu0 %v2704
        %3053 = vmatpush.msra.mxu0 %v2703
        %3054 = vmatpush.msra.mxu0 %v2702
        %3055 = vmatpush.msra.mxu0 %v2701
        %3056 = vmatpush.msra.mxu0 %v2700
        %3057 = vmatpush.msra.mxu0 %v2699
        %3058 = vmatpush.msra.mxu0 %v2698
        %3059 = vmatpush.msra.mxu0 %v2697
        %3060 = vmatpush.msra.mxu0 %v2696
        %3061 = vmatpush.msra.mxu0 %v2695
        %3062 = vmatpush.msra.mxu0 %v2694
        %3063 = vmatpush.msra.mxu0 %v2693
        %3064 = vmatmul.f32.gmra.mxu0 %v2613
        %v3065 = vpop.f32.mrf.mxu0
        %v3066 = vadd.f32 %v2953, %v3065
        %3067 = vmatmul.f32.gmra.mxu0 %v2614
        %v3068 = vpop.f32.mrf.mxu0
        %v3069 = vadd.f32 %v2956, %v3068
        %3070 = vmatmul.f32.gmra.mxu0 %v2615
        %v3071 = vpop.f32.mrf.mxu0
        %v3072 = vadd.f32 %v2959, %v3071
        %3073 = vmatmul.f32.gmra.mxu0 %v2616
        %v3074 = vpop.f32.mrf.mxu0
        %v3075 = vadd.f32 %v2962, %v3074
        %3076 = vmatmul.f32.gmra.mxu0 %v2617
        %v3077 = vpop.f32.mrf.mxu0
        %v3078 = vadd.f32 %v2965, %v3077
        %3079 = vmatmul.f32.gmra.mxu0 %v2618
        %v3080 = vpop.f32.mrf.mxu0
        %v3081 = vadd.f32 %v2968, %v3080
        %3082 = vmatmul.f32.gmra.mxu0 %v2619
        %v3083 = vpop.f32.mrf.mxu0
        %v3084 = vadd.f32 %v2971, %v3083
        %3085 = vmatmul.f32.gmra.mxu0 %v2620
        %v3086 = vpop.f32.mrf.mxu0
        %v3087 = vadd.f32 %v2974, %v3086
        %3088 = vmatmul.f32.gmra.mxu0 %v2621
        %v3089 = vpop.f32.mrf.mxu0
        %v3090 = vadd.f32 %v2977, %v3089
        %3091 = vmatmul.f32.gmra.mxu0 %v2622
        %v3092 = vpop.f32.mrf.mxu0
        %v3093 = vadd.f32 %v2980, %v3092
        %3094 = vmatmul.f32.gmra.mxu0 %v2623
        %v3095 = vpop.f32.mrf.mxu0
        %v3096 = vadd.f32 %v2983, %v3095
        %3097 = vmatmul.f32.gmra.mxu0 %v2624
        %v3098 = vpop.f32.mrf.mxu0
        %v3099 = vadd.f32 %v2986, %v3098
        %3100 = vmatmul.f32.gmra.mxu0 %v2625
        %v3101 = vpop.f32.mrf.mxu0
        %v3102 = vadd.f32 %v2989, %v3101
        %3103 = vmatmul.f32.gmra.mxu0 %v2626
        %v3104 = vpop.f32.mrf.mxu0
        %v3105 = vadd.f32 %v2992, %v3104
        %3106 = vmatmul.f32.gmra.mxu0 %v2627
        %v3107 = vpop.f32.mrf.mxu0
        %v3108 = vadd.f32 %v2995, %v3107
        %3109 = vmatmul.f32.gmra.mxu0 %v2628
        %v3110 = vpop.f32.mrf.mxu0
        %v3111 = vadd.f32 %v2998, %v3110
        %3112 = vmatmul.f32.gmra.mxu0 %v2629
        %v3113 = vpop.f32.mrf.mxu0
        %v3114 = vadd.f32 %v3001, %v3113
        %3115 = vmatmul.f32.gmra.mxu0 %v2630
        %v3116 = vpop.f32.mrf.mxu0
        %v3117 = vadd.f32 %v3004, %v3116
        %3118 = vmatmul.f32.gmra.mxu0 %v2631
        %v3119 = vpop.f32.mrf.mxu0
        %v3120 = vadd.f32 %v3007, %v3119
        %3121 = vmatmul.f32.gmra.mxu0 %v2632
        %v3122 = vpop.f32.mrf.mxu0
        %v3123 = vadd.f32 %v3010, %v3122
        %3124 = vmatmul.f32.gmra.mxu0 %v2633
        %v3125 = vpop.f32.mrf.mxu0
        %v3126 = vadd.f32 %v3013, %v3125
        %3127 = vmatmul.f32.gmra.mxu0 %v2634
        %v3128 = vpop.f32.mrf.mxu0
        %v3129 = vadd.f32 %v3016, %v3128
        %3130 = vmatmul.f32.gmra.mxu0 %v2635
        %v3131 = vpop.f32.mrf.mxu0
        %v3132 = vadd.f32 %v3019, %v3131
        %3133 = vmatmul.f32.gmra.mxu0 %v2636
        %v3134 = vpop.f32.mrf.mxu0
        %v3135 = vadd.f32 %v3022, %v3134
        %3136 = vmatmul.f32.gmra.mxu0 %v2637
        %v3137 = vpop.f32.mrf.mxu0
        %v3138 = vadd.f32 %v3025, %v3137
        %3139 = vmatmul.f32.gmra.mxu0 %v2638
        %v3140 = vpop.f32.mrf.mxu0
        %v3141 = vadd.f32 %v3028, %v3140
        %3142 = vmatmul.f32.gmra.mxu0 %v2639
        %v3143 = vpop.f32.mrf.mxu0
        %v3144 = vadd.f32 %v3031, %v3143
        %3145 = vmatmul.f32.gmra.mxu0 %v2640
        %v3146 = vpop.f32.mrf.mxu0
        %v3147 = vadd.f32 %v3034, %v3146
        %3148 = vmatmul.f32.gmra.mxu0 %v2641
        %v3149 = vpop.f32.mrf.mxu0
        %v3150 = vadd.f32 %v3037, %v3149
        %3151 = vmatmul.f32.gmra.mxu0 %v2642
        %v3152 = vpop.f32.mrf.mxu0
        %v3153 = vadd.f32 %v3040, %v3152
        %3154 = vmatmul.f32.gmra.mxu0 %v2643
        %v3155 = vpop.f32.mrf.mxu0
        %v3156 = vadd.f32 %v3043, %v3155
        %3157 = vmatmul.f32.gmra.mxu0 %v2644
        %v3158 = vpop.f32.mrf.mxu0
        %v3159 = vadd.f32 %v3046, %v3158
        %3160 = vdwg.mxu0
        %v3161 = vld [vmem:[%s5] sm:$0x1]
        %v3163 = vperm.slane %v3161, 0
        %v3165 = vmul.f32 %v3066, %v3163
        %v3166 = vmul.f32 %v3069, %v3163
        %v3167 = vmul.f32 %v3072, %v3163
        %v3168 = vmul.f32 %v3075, %v3163
        %v3169 = vmul.f32 %v3078, %v3163
        %v3170 = vmul.f32 %v3081, %v3163
        %v3171 = vmul.f32 %v3084, %v3163
        %v3172 = vmul.f32 %v3087, %v3163
        %v3173 = vmul.f32 %v3090, %v3163
        %v3174 = vmul.f32 %v3093, %v3163
        %v3175 = vmul.f32 %v3096, %v3163
        %v3176 = vmul.f32 %v3099, %v3163
        %v3177 = vmul.f32 %v3102, %v3163
        %v3178 = vmul.f32 %v3105, %v3163
        %v3179 = vmul.f32 %v3108, %v3163
        %v3180 = vmul.f32 %v3111, %v3163
        %v3181 = vmul.f32 %v3114, %v3163
        %v3182 = vmul.f32 %v3117, %v3163
        %v3183 = vmul.f32 %v3120, %v3163
        %v3184 = vmul.f32 %v3123, %v3163
        %v3185 = vmul.f32 %v3126, %v3163
        %v3186 = vmul.f32 %v3129, %v3163
        %v3187 = vmul.f32 %v3132, %v3163
        %v3188 = vmul.f32 %v3135, %v3163
        %v3189 = vmul.f32 %v3138, %v3163
        %v3190 = vmul.f32 %v3141, %v3163
        %v3191 = vmul.f32 %v3144, %v3163
        %v3192 = vmul.f32 %v3147, %v3163
        %v3193 = vmul.f32 %v3150, %v3163
        %v3194 = vmul.f32 %v3153, %v3163
        %v3195 = vmul.f32 %v3156, %v3163
        %v3196 = vmul.f32 %v3159, %v3163
        %v3197 = vld [vmem:[%s6] sm:$0x1]
        %v3199 = vperm.slane %v3197, 0
        %v3201 = vadd.f32 %v3165, %v3199
        %v3202 = vadd.f32 %v3166, %v3199
        %v3203 = vadd.f32 %v3167, %v3199
        %v3204 = vadd.f32 %v3168, %v3199
        %v3205 = vadd.f32 %v3169, %v3199
        %v3206 = vadd.f32 %v3170, %v3199
        %v3207 = vadd.f32 %v3171, %v3199
        %v3208 = vadd.f32 %v3172, %v3199
        %v3209 = vadd.f32 %v3173, %v3199
        %v3210 = vadd.f32 %v3174, %v3199
        %v3211 = vadd.f32 %v3175, %v3199
        %v3212 = vadd.f32 %v3176, %v3199
        %v3213 = vadd.f32 %v3177, %v3199
        %v3214 = vadd.f32 %v3178, %v3199
        %v3215 = vadd.f32 %v3179, %v3199
        %v3216 = vadd.f32 %v3180, %v3199
        %v3217 = vadd.f32 %v3181, %v3199
        %v3218 = vadd.f32 %v3182, %v3199
        %v3219 = vadd.f32 %v3183, %v3199
        %v3220 = vadd.f32 %v3184, %v3199
        %v3221 = vadd.f32 %v3185, %v3199
        %v3222 = vadd.f32 %v3186, %v3199
        %v3223 = vadd.f32 %v3187, %v3199
        %v3224 = vadd.f32 %v3188, %v3199
        %v3225 = vadd.f32 %v3189, %v3199
        %v3226 = vadd.f32 %v3190, %v3199
        %v3227 = vadd.f32 %v3191, %v3199
        %v3228 = vadd.f32 %v3192, %v3199
        %v3229 = vadd.f32 %v3193, %v3199
        %v3230 = vadd.f32 %v3194, %v3199
        %v3231 = vadd.f32 %v3195, %v3199
        %v3232 = vadd.f32 %v3196, %v3199
        %vm3233 = vcmp.gt.f32.partialorder %v3201, 0.0
        %vm3234 = vcmp.gt.f32.partialorder %v3202, 0.0
        %vm3235 = vcmp.gt.f32.partialorder %v3203, 0.0
        %vm3236 = vcmp.gt.f32.partialorder %v3204, 0.0
        %vm3237 = vcmp.gt.f32.partialorder %v3205, 0.0
        %vm3238 = vcmp.gt.f32.partialorder %v3206, 0.0
        %vm3239 = vcmp.gt.f32.partialorder %v3207, 0.0
        %vm3240 = vcmp.gt.f32.partialorder %v3208, 0.0
        %vm3241 = vcmp.gt.f32.partialorder %v3209, 0.0
        %vm3242 = vcmp.gt.f32.partialorder %v3210, 0.0
        %vm3243 = vcmp.gt.f32.partialorder %v3211, 0.0
        %vm3244 = vcmp.gt.f32.partialorder %v3212, 0.0
        %vm3245 = vcmp.gt.f32.partialorder %v3213, 0.0
        %vm3246 = vcmp.gt.f32.partialorder %v3214, 0.0
        %vm3247 = vcmp.gt.f32.partialorder %v3215, 0.0
        %vm3248 = vcmp.gt.f32.partialorder %v3216, 0.0
        %vm3249 = vcmp.gt.f32.partialorder %v3217, 0.0
        %vm3250 = vcmp.gt.f32.partialorder %v3218, 0.0
        %vm3251 = vcmp.gt.f32.partialorder %v3219, 0.0
        %vm3252 = vcmp.gt.f32.partialorder %v3220, 0.0
        %vm3253 = vcmp.gt.f32.partialorder %v3221, 0.0
        %vm3254 = vcmp.gt.f32.partialorder %v3222, 0.0
        %vm3255 = vcmp.gt.f32.partialorder %v3223, 0.0
        %vm3256 = vcmp.gt.f32.partialorder %v3224, 0.0
        %vm3257 = vcmp.gt.f32.partialorder %v3225, 0.0
        %vm3258 = vcmp.gt.f32.partialorder %v3226, 0.0
        %vm3259 = vcmp.gt.f32.partialorder %v3227, 0.0
        %vm3260 = vcmp.gt.f32.partialorder %v3228, 0.0
        %vm3261 = vcmp.gt.f32.partialorder %v3229, 0.0
        %vm3262 = vcmp.gt.f32.partialorder %v3230, 0.0
        %vm3263 = vcmp.gt.f32.partialorder %v3231, 0.0
        %vm3264 = vcmp.gt.f32.partialorder %v3232, 0.0
        %v3265 = vmul.f32 %v3201, 0.1
        %v3266 = vmul.f32 %v3202, 0.1
        %v3267 = vmul.f32 %v3203, 0.1
        %v3268 = vmul.f32 %v3204, 0.1
        %v3269 = vmul.f32 %v3205, 0.1
        %v3270 = vmul.f32 %v3206, 0.1
        %v3271 = vmul.f32 %v3207, 0.1
        %v3272 = vmul.f32 %v3208, 0.1
        %v3273 = vmul.f32 %v3209, 0.1
        %v3274 = vmul.f32 %v3210, 0.1
        %v3275 = vmul.f32 %v3211, 0.1
        %v3276 = vmul.f32 %v3212, 0.1
        %v3277 = vmul.f32 %v3213, 0.1
        %v3278 = vmul.f32 %v3214, 0.1
        %v3279 = vmul.f32 %v3215, 0.1
        %v3280 = vmul.f32 %v3216, 0.1
        %v3281 = vmul.f32 %v3217, 0.1
        %v3282 = vmul.f32 %v3218, 0.1
        %v3283 = vmul.f32 %v3219, 0.1
        %v3284 = vmul.f32 %v3220, 0.1
        %v3285 = vmul.f32 %v3221, 0.1
        %v3286 = vmul.f32 %v3222, 0.1
        %v3287 = vmul.f32 %v3223, 0.1
        %v3288 = vmul.f32 %v3224, 0.1
        %v3289 = vmul.f32 %v3225, 0.1
        %v3290 = vmul.f32 %v3226, 0.1
        %v3291 = vmul.f32 %v3227, 0.1
        %v3292 = vmul.f32 %v3228, 0.1
        %v3293 = vmul.f32 %v3229, 0.1
        %v3294 = vmul.f32 %v3230, 0.1
        %v3295 = vmul.f32 %v3231, 0.1
        %v3296 = vmul.f32 %v3232, 0.1
        %v3297 = vsel %vm3233, %v3201, %v3265
        %v3298 = vsel %vm3234, %v3202, %v3266
        %v3299 = vsel %vm3235, %v3203, %v3267
        %v3300 = vsel %vm3236, %v3204, %v3268
        %v3301 = vsel %vm3237, %v3205, %v3269
        %v3302 = vsel %vm3238, %v3206, %v3270
        %v3303 = vsel %vm3239, %v3207, %v3271
        %v3304 = vsel %vm3240, %v3208, %v3272
        %v3305 = vsel %vm3241, %v3209, %v3273
        %v3306 = vsel %vm3242, %v3210, %v3274
        %v3307 = vsel %vm3243, %v3211, %v3275
        %v3308 = vsel %vm3244, %v3212, %v3276
        %v3309 = vsel %vm3245, %v3213, %v3277
        %v3310 = vsel %vm3246, %v3214, %v3278
        %v3311 = vsel %vm3247, %v3215, %v3279
        %v3312 = vsel %vm3248, %v3216, %v3280
        %v3313 = vsel %vm3249, %v3217, %v3281
        %v3314 = vsel %vm3250, %v3218, %v3282
        %v3315 = vsel %vm3251, %v3219, %v3283
        %v3316 = vsel %vm3252, %v3220, %v3284
        %v3317 = vsel %vm3253, %v3221, %v3285
        %v3318 = vsel %vm3254, %v3222, %v3286
        %v3319 = vsel %vm3255, %v3223, %v3287
        %v3320 = vsel %vm3256, %v3224, %v3288
        %v3321 = vsel %vm3257, %v3225, %v3289
        %v3322 = vsel %vm3258, %v3226, %v3290
        %v3323 = vsel %vm3259, %v3227, %v3291
        %v3324 = vsel %vm3260, %v3228, %v3292
        %v3325 = vsel %vm3261, %v3229, %v3293
        %v3326 = vsel %vm3262, %v3230, %v3294
        %v3327 = vsel %vm3263, %v3231, %v3295
        %v3328 = vsel %vm3264, %v3232, %v3296
        %3329 = vst [vmem:[%s331] sm:$0xff] %v3297
        %3330 = vst [vmem:[%s331 + $0x8] sm:$0xff] %v3298
        %3331 = vst [vmem:[%s331 + $0x10] sm:$0xff] %v3299
        %3332 = vst [vmem:[%s331 + $0x18] sm:$0xff] %v3300
        %3333 = vst [vmem:[%s331 + $0x20] sm:$0xff] %v3301
        %3334 = vst [vmem:[%s331 + $0x28] sm:$0xff] %v3302
        %3335 = vst [vmem:[%s331 + $0x30] sm:$0xff] %v3303
        %3336 = vst [vmem:[%s331 + $0x38] sm:$0xff] %v3304
        %3337 = vst [vmem:[%s331 + $0x40] sm:$0xff] %v3305
        %3338 = vst [vmem:[%s331 + $0x48] sm:$0xff] %v3306
        %3339 = vst [vmem:[%s331 + $0x50] sm:$0xff] %v3307
        %3340 = vst [vmem:[%s331 + $0x58] sm:$0xff] %v3308
        %3341 = vst [vmem:[%s331 + $0x60] sm:$0xff] %v3309
        %3342 = vst [vmem:[%s331 + $0x68] sm:$0xff] %v3310
        %3343 = vst [vmem:[%s331 + $0x70] sm:$0xff] %v3311
        %3344 = vst [vmem:[%s331 + $0x78] sm:$0xff] %v3312
        %3345 = vst [vmem:[%s331 + $0x80] sm:$0xff] %v3313
        %3346 = vst [vmem:[%s331 + $0x88] sm:$0xff] %v3314
        %3347 = vst [vmem:[%s331 + $0x90] sm:$0xff] %v3315
        %3348 = vst [vmem:[%s331 + $0x98] sm:$0xff] %v3316
        %3349 = vst [vmem:[%s331 + $0xa0] sm:$0xff] %v3317
        %3350 = vst [vmem:[%s331 + $0xa8] sm:$0xff] %v3318
        %3351 = vst [vmem:[%s331 + $0xb0] sm:$0xff] %v3319
        %3352 = vst [vmem:[%s331 + $0xb8] sm:$0xff] %v3320
        %3353 = vst [vmem:[%s331 + $0xc0] sm:$0xff] %v3321
        %3354 = vst [vmem:[%s331 + $0xc8] sm:$0xff] %v3322
        %3355 = vst [vmem:[%s331 + $0xd0] sm:$0xff] %v3323
        %3356 = vst [vmem:[%s331 + $0xd8] sm:$0xff] %v3324
        %3357 = vst [vmem:[%s331 + $0xe0] sm:$0xff] %v3325
        %3358 = vst [vmem:[%s331 + $0xe8] sm:$0xff] %v3326
        %3359 = vst [vmem:[%s331 + $0xf0] sm:$0xff] %v3327
        %3360 = vst [vmem:[%s331 + $0xf8] sm:$0xff] %v3328
        %s3361 = sand.u32 %s185, 1
        %s3362 = scalar_lea.sflag [#allocation4], %s3361
        %s3363 = sand.u32 %s185, 1
        %s3364 = smul.addr %s3363, 256
        %s3365 = scalar_lea.vmem [#allocation8], %s3364
        // Predicated region
        $region61: #{tpu_custom_call.1} parent=47 // pred_check
          %p3366 = pneg %p195
        $region62: #{tpu_custom_call.1} parent=47 // pred_check_branch
          %3368 = sbr.rel (%p3366) target = $region64
        $region63: #{tpu_custom_call.1} parent=47 // pred_region
          %3370 = vsyncadd %s3362, 0
          %s3371 = smul.addr %s25, 32
          %s3372 = smul.addr %s3371, 8
          %s3373 = scalar_lea.hbm %s7, %s3372
          %s3374 = sshll.u32 %s3365, 4
          %s3375 = int_to_ptr.vmem [resolvable:$true] %s3374
          %s3376 = sshll.u32 %s3373, 4
          %s3377 = int_to_ptr.hbm [resolvable:$true] %s3376
          %3382 = dma.vmem_to_hbm [thread:$0]  %s3375, 4096, %s3377, %s3362, 128, 128, 8
        $region64: #{tpu_custom_call.1} parent=47 // pred_fallthru
          _
      $region48: #{tpu_custom_call.1} parent=5 // pred_fallthru
        _
      %p3383 = scmp.le.s32.totalorder 2, %s20
      // Predicated region
      $region65: #{tpu_custom_call.1} parent=5 // pred_check
        %p3384 = pneg %p3383
      $region66: #{tpu_custom_call.1} parent=5 // pred_check_branch
        %3386 = sbr.rel (%p3384) target = $region68
      $region67: #{tpu_custom_call.1} parent=5 // pred_region
        %s3387 = ssub.s32 %s20, 2
        // Predicated region
        $region69: #{tpu_custom_call.1} parent=67 // pred_check
          %p3388 = pneg %p201
        $region70: #{tpu_custom_call.1} parent=67 // pred_check_branch
          %3390 = sbr.rel (%p3388) target = $region72
        $region71: #{tpu_custom_call.1} parent=67 // pred_region
          %s3391 = sand.u32 %s186, 1
          %s3392 = scalar_lea.sflag [#allocation4], %s3391
          %s3393 = sand.u32 %s186, 1
          %s3394 = smul.addr %s3393, 256
          %s3395 = scalar_lea.vmem [#allocation8], %s3394
          %3397 = dma.done %s3392, 4096
        $region72: #{tpu_custom_call.1} parent=67 // pred_fallthru
          _
      $region68: #{tpu_custom_call.1} parent=5 // pred_fallthru
        _
    $region6: #{tpu_custom_call.1} parent=1 // loop_footer
      %s24 = sadd.s32 1, %s20
    $region7: #{tpu_custom_call.1} parent=1 // loop_footer_branch
      %19 = sbr.rel target = $region3
    $region8: #{tpu_custom_call.1} parent=1 // loop_exit
      _
    %3398 = vsyncpa [#allocation3], 1
    %s3399 = scalar_lea.sflag [#allocation3], 1
    %3400 = vsyncpa %s3399, 1
    %3401 = vsyncpa [#allocation6], 1
    %3402 = vsyncpa [#allocation4], 1
    %s3403 = scalar_lea.sflag [#allocation4], 1
    %3404 = vsyncpa %s3403, 1

</llo_original>
